<compile_context>
chip_gen: v6e
topology: v6e:2x2x1
jax: 0.10.0
libtpu: 0.0.40
codegen_flags: <defaults>
</compile_context>

<pallas_src>
import functools
import math

import jax
import jax.numpy as jnp
from jax.experimental import pallas as pl
from jax.experimental.pallas import tpu as pltpu

# ----------------------------- config ---------------------------------------
BATCH = 2
CHANNELS = 3
IMAGE = 32
PATCH = 16
HIDDEN = 64
NUM_HEADS = 4
HEAD_DIM = HIDDEN // NUM_HEADS
MLP_DIM = 128
NUM_LAYERS = 2
NUM_CLASSES = 10
LN_EPS = 1e-6
NPAD = 128  # lane-dense padded class dim for the output store

_VMEM_SPEC = pl.BlockSpec(memory_space=pltpu.MemorySpace.VMEM)


# ----------------------------- fused kernel ----------------------------------
def _vit_fused_kernel(
    x_in_ref,                 # [M, C*P*P] bf16 (rows 0..B-1 are zeros -> cls slots)
    w_patch_ref,              # [C*P*P, D] bf16
    add0_ref,                 # [M, D]     f32  (cls_token+pos rows, then conv_b+pos rows)
    ln1_g_ref, ln1_b_ref,     # [L, D] f32
    wq_ref, wk_ref, wv_ref,   # [L, H, D, Dh] bf16
    bq_ref, bk_ref, bv_ref,   # [L, H, 1, Dh] f32
    w_out_ref,                # [L, H, Dh, D] bf16
    b_out_ref,                # [L, D] f32
    ln2_g_ref, ln2_b_ref,     # [L, D] f32
    w_mlp1_ref, b_mlp1_ref,   # [L, D, MLP] bf16, [L, MLP] f32
    w_mlp2_ref, b_mlp2_ref,   # [L, MLP, D] bf16, [L, D]   f32
    ln_f_g_ref, ln_f_b_ref,   # [1, D] f32
    head_w_ref, head_b_ref,   # [D, NPAD] bf16, [1, NPAD] f32
    out_ref,                  # [OUT_ROWS, NPAD] f32 (lane-dense)
    *, batch, seq,
):
    f32 = jnp.float32
    bf16 = jnp.bfloat16

    M = x_in_ref.shape[0]
    num_layers = ln1_g_ref.shape[0]
    num_heads = wq_ref.shape[1]
    head_dim = wq_ref.shape[3]
    scale = 1.0 / math.sqrt(head_dim)

    def layernorm(x, g, b):
        # f32 elementwise (biased variance, matches torch LayerNorm)
        mean = jnp.mean(x, axis=-1, keepdims=True)
        xc = x - mean
        var = jnp.mean(xc * xc, axis=-1, keepdims=True)
        return xc * jax.lax.rsqrt(var + LN_EPS) * g + b

    def gelu(x):
        # exact erf GELU (matches torch.nn.GELU default)
        return 0.5 * x * (1.0 + jax.lax.erf(x * (1.0 / math.sqrt(2.0))))

    def mm(x, w):
        # bf16 MXU operands, f32 accumulation
        return jnp.dot(x.astype(bf16), w.astype(bf16), preferred_element_type=f32)

    # ---- block-diagonal attention bias, built in-kernel (no HBM operand) ----
    # Row layout: rows 0..B-1 are class tokens of images 0..B-1, then the
    # patch rows of image 0, image 1, ...  image_id avoids vector int-div.
    def image_id(idx):
        patch_img = jnp.zeros_like(idx)
        for b in range(1, batch):
            patch_img = patch_img + (idx >= batch + b * (seq - 1)).astype(jnp.int32)
        return jnp.where(idx < batch, idx, patch_img)

    row_ids = image_id(jax.lax.broadcasted_iota(jnp.int32, (M, 1), 0))
    col_ids = image_id(jax.lax.broadcasted_iota(jnp.int32, (1, M), 1))
    attn_bias = jnp.where(row_ids == col_ids,
                          jnp.float32(0.0), jnp.float32(-1e30))        # [M, M]

    # Patch-embedding conv as one matmul; cls token, conv bias and positional
    # embedding folded into the precomputed additive slab.
    tok = mm(x_in_ref[...], w_patch_ref[...]) + add0_ref[...]          # [M, D] f32

    # Small f32 params read once.
    ln1_g = ln1_g_ref[...]
    ln1_b = ln1_b_ref[...]
    b_out = b_out_ref[...]
    ln2_g = ln2_g_ref[...]
    ln2_b = ln2_b_ref[...]
    b_mlp1 = b_mlp1_ref[...]
    b_mlp2 = b_mlp2_ref[...]

    for l in range(num_layers):
        # ---------- multi-head self-attention block (pre-LN) ----------
        y = layernorm(tok, ln1_g[l:l + 1, :], ln1_b[l:l + 1, :])

        partials = []
        for h in range(num_heads):
            # Per-head Q/K/V matmuls on pre-split weights: no activation lane
            # slicing at sub-128 offsets.
            q = mm(y, wq_ref[l, h]) + bq_ref[l, h]                     # [M, Dh]
            k = mm(y, wk_ref[l, h]) + bk_ref[l, h]                     # [M, Dh]
            v = mm(y, wv_ref[l, h]) + bv_ref[l, h]                     # [M, Dh]

            # Scores over all tokens of both images; block-diagonal bias keeps
            # attention within each image (masked weights underflow to 0).
            s = jax.lax.dot_general(
                q.astype(bf16), k.astype(bf16),
                dimension_numbers=(((1,), (1,)), ((), ())),
                preferred_element_type=f32) * scale + attn_bias        # [M, M]
            m = jnp.max(s, axis=-1, keepdims=True)
            p = jnp.exp(s - m)
            denom = jnp.sum(p, axis=-1, keepdims=True)
            p = p * pl.reciprocal(denom, approx=True)

            o_h = mm(p, v)                                             # [M, Dh]
            # head-merge + output projection folded per head:
            #   o @ W_out == sum_h o_h @ W_out[h*Dh:(h+1)*Dh, :]
            partials.append(mm(o_h, w_out_ref[l, h]))                  # [M, D]

        # Unserialized tree-add of the per-head out-projection partials.
        while len(partials) > 1:
            nxt = [partials[i] + partials[i + 1]
                   for i in range(0, len(partials) - 1, 2)]
            if len(partials) % 2:
                nxt.append(partials[-1])
            partials = nxt
        tok = tok + partials[0] + b_out[l:l + 1, :]

        # ---------- MLP block (pre-LN), fused GELU ----------
        z = layernorm(tok, ln2_g[l:l + 1, :], ln2_b[l:l + 1, :])
        z = gelu(mm(z, w_mlp1_ref[l]) + b_mlp1[l:l + 1, :])
        z = mm(z, w_mlp2_ref[l]) + b_mlp2[l:l + 1, :]
        tok = tok + z

    # ---------- final LN + head: only the (sublane-aligned) leading rows ----
    # Class tokens live in rows 0..B-1; compute on the first OUT_ROWS rows.
    n_out = out_ref.shape[0]
    cls = tok[0:n_out, :]
    cls = layernorm(cls, ln_f_g_ref[...], ln_f_b_ref[...])
    out_ref[...] = mm(cls, head_w_ref[...]) + head_b_ref[...]


# ----------------------------- params ---------------------------------------
def init_params(key):
    std = 0.02
    n_patches = (IMAGE // PATCH) ** 2
    seq = n_patches + 1
    keys = iter(jax.random.split(key, 64))

    def nrm(shape):
        return std * jax.random.normal(next(keys), shape, dtype=jnp.float32)

    params = {
        "conv_w": nrm((HIDDEN, CHANNELS, PATCH, PATCH)),   # like nn.Conv2d weight
        "conv_b": nrm((HIDDEN,)),
        "class_token": nrm((1, 1, HIDDEN)),
        "pos_embedding": nrm((1, seq, HIDDEN)),
        "ln_f_g": jnp.ones((HIDDEN,), jnp.float32),
        "ln_f_b": jnp.zeros((HIDDEN,), jnp.float32),
        "head_w": nrm((HIDDEN, NUM_CLASSES)),
        "head_b": jnp.zeros((NUM_CLASSES,), jnp.float32),
        "layers": [],
    }
    for _ in range(NUM_LAYERS):
        params["layers"].append({
            "ln1_g": jnp.ones((HIDDEN,), jnp.float32),
            "ln1_b": jnp.zeros((HIDDEN,), jnp.float32),
            "w_qkv": nrm((HIDDEN, 3 * HIDDEN)),
            "b_qkv": nrm((3 * HIDDEN,)),
            "w_out": nrm((HIDDEN, HIDDEN)),
            "b_out": nrm((HIDDEN,)),
            "ln2_g": jnp.ones((HIDDEN,), jnp.float32),
            "ln2_b": jnp.zeros((HIDDEN,), jnp.float32),
            "w_mlp1": nrm((HIDDEN, MLP_DIM)),
            "b_mlp1": nrm((MLP_DIM,)),
            "w_mlp2": nrm((MLP_DIM, HIDDEN)),
            "b_mlp2": nrm((HIDDEN,)),
        })
    return params


# ----------------------------- one-time packing -------------------------------
def pack_params(params, batch=BATCH):
    """One-time packing of parameters into kernel operands (hoisted out of the
    per-call path). Returns a tuple in kernel-operand order (after x_in)."""
    L = len(params["layers"])
    D = HIDDEN
    H = NUM_HEADS
    Dh = HEAD_DIM
    n_patches = (IMAGE // PATCH) ** 2
    cpp = CHANNELS * PATCH * PATCH

    def stk(name, dtype):
        return jnp.stack([lyr[name] for lyr in params["layers"]]).astype(dtype)

    w_qkv = stk("w_qkv", jnp.float32)            # [L, D, 3D]
    b_qkv = stk("b_qkv", jnp.float32)            # [L, 3D]

    def split_w(w):                               # [L, D, D] -> [L, H, D, Dh]
        return w.reshape(L, D, H, Dh).transpose(0, 2, 1, 3).astype(jnp.bfloat16)

    def split_b(b):                               # [L, D] -> [L, H, 1, Dh]
        return b.reshape(L, H, 1, Dh).astype(jnp.float32)

    wq = split_w(w_qkv[:, :, 0 * D:1 * D])
    wk = split_w(w_qkv[:, :, 1 * D:2 * D])
    wv = split_w(w_qkv[:, :, 2 * D:3 * D])
    bq = split_b(b_qkv[:, 0 * D:1 * D])
    bk = split_b(b_qkv[:, 1 * D:2 * D])
    bv = split_b(b_qkv[:, 2 * D:3 * D])

    # Out-projection pre-split per head along its K rows: [L, H, Dh, D].
    w_out = stk("w_out", jnp.bfloat16).reshape(L, H, Dh, D)

    # Additive slab matching the reordered token layout:
    #   rows 0..B-1            -> class_token + pos[0]
    #   rows B + b*(S-1) + i   -> conv_bias   + pos[1+i]
    pos = params["pos_embedding"][0]                                   # [S, D]
    row_cls = (params["class_token"][0, 0] + pos[0])[None, :]          # [1, D]
    rows_patch = params["conv_b"][None, :] + pos[1:]                   # [S-1, D]
    add0 = jnp.concatenate(
        [jnp.tile(row_cls, (batch, 1)), jnp.tile(rows_patch, (batch, 1))],
        axis=0).astype(jnp.float32)                                    # [M, D]

    w_patch = params["conv_w"].reshape(D, cpp).T.astype(jnp.bfloat16)  # [Cpp, D]
    head_w = jnp.pad(params["head_w"],
                     ((0, 0), (0, NPAD - NUM_CLASSES))).astype(jnp.bfloat16)
    head_b = jnp.pad(params["head_b"],
                     (0, NPAD - NUM_CLASSES))[None, :].astype(jnp.float32)

    packed = (
        w_patch, add0,
        stk("ln1_g", jnp.float32), stk("ln1_b", jnp.float32),
        wq, wk, wv, bq, bk, bv,
        w_out, stk("b_out", jnp.float32),
        stk("ln2_g", jnp.float32), stk("ln2_b", jnp.float32),
        stk("w_mlp1", jnp.bfloat16), stk("b_mlp1", jnp.float32),
        stk("w_mlp2", jnp.bfloat16), stk("b_mlp2", jnp.float32),
        params["ln_f_g"][None, :].astype(jnp.float32),
        params["ln_f_b"][None, :].astype(jnp.float32),
        head_w, head_b,
    )
    # Materialize once so nothing is recomputed per forward call.
    return jax.tree_util.tree_map(jnp.asarray, packed)


# ----------------------------- forward ---------------------------------------
def vit_forward(packed, x):
    B, C, H, W = x.shape
    p = PATCH
    nh, nw = H // p, W // p
    n_patches = nh * nw
    S = n_patches + 1
    M = B * S
    cpp = C * p * p

    # Patch extraction (pure layout op on the tiny input); (C, ph, pw) order
    # matches the conv-weight flattening in pack_params. Class-token slots are
    # zero rows placed FIRST (all cls tokens, then image-0 patches, image-1 ...).
    patches = (x.reshape(B, C, nh, p, nw, p)
                 .transpose(0, 2, 4, 1, 3, 5)
                 .reshape(B * n_patches, cpp))
    x_in = jnp.concatenate(
        [jnp.zeros((B, cpp), patches.dtype), patches], axis=0
    ).astype(jnp.bfloat16)                                             # [M, Cpp]

    # Sublane-aligned output row count covering all B class-token rows.
    out_rows = min(M, ((B + 7) // 8) * 8)

    kernel = functools.partial(_vit_fused_kernel, batch=B, seq=S)
    out = pl.pallas_call(
        kernel,
        out_shape=jax.ShapeDtypeStruct((out_rows, NPAD), jnp.float32),
        in_specs=[_VMEM_SPEC] * (1 + len(packed)),
        out_specs=_VMEM_SPEC,
    )(x_in, *packed)

    # Class-token logits (rows 0..B-1), dropping the lane padding.
    return out[:B, :NUM_CLASSES]                                       # [B, num_classes]


# ----------------------------- main ---------------------------------------
if __name__ == "__main__":
    key = jax.random.PRNGKey(0)
    pkey, xkey = jax.random.split(key)
    params = init_params(pkey)
    packed = pack_params(params, batch=BATCH)      # one-time, outside the hot path
    x = jax.random.normal(xkey, (BATCH, CHANNELS, IMAGE, IMAGE), dtype=jnp.float32)

    fwd = jax.jit(vit_forward)
    logits = fwd(packed, x)
    jax.block_until_ready(logits)

    assert logits.shape == (BATCH, NUM_CLASSES)
    assert bool(jnp.all(jnp.isfinite(logits)))
    print("KERNEL_OK")
</pallas_src>

<mosaic_0001>
module attributes {stable_mosaic.version = 11 : i64} {
  func.func @_vit_fused_kernel(%arg0: memref<10x768xbf16, #tpu.memory_space<vmem>>, %arg1: memref<768x64xbf16, #tpu.memory_space<vmem>>, %arg2: memref<10x64xf32, #tpu.memory_space<vmem>>, %arg3: memref<2x64xf32, #tpu.memory_space<vmem>>, %arg4: memref<2x64xf32, #tpu.memory_space<vmem>>, %arg5: memref<2x4x64x16xbf16, #tpu.memory_space<vmem>>, %arg6: memref<2x4x64x16xbf16, #tpu.memory_space<vmem>>, %arg7: memref<2x4x64x16xbf16, #tpu.memory_space<vmem>>, %arg8: memref<2x4x1x16xf32, #tpu.memory_space<vmem>>, %arg9: memref<2x4x1x16xf32, #tpu.memory_space<vmem>>, %arg10: memref<2x4x1x16xf32, #tpu.memory_space<vmem>>, %arg11: memref<2x4x16x64xbf16, #tpu.memory_space<vmem>>, %arg12: memref<2x64xf32, #tpu.memory_space<vmem>>, %arg13: memref<2x64xf32, #tpu.memory_space<vmem>>, %arg14: memref<2x64xf32, #tpu.memory_space<vmem>>, %arg15: memref<2x64x128xbf16, #tpu.memory_space<vmem>>, %arg16: memref<2x128xf32, #tpu.memory_space<vmem>>, %arg17: memref<2x128x64xbf16, #tpu.memory_space<vmem>>, %arg18: memref<2x64xf32, #tpu.memory_space<vmem>>, %arg19: memref<1x64xf32, #tpu.memory_space<vmem>>, %arg20: memref<1x64xf32, #tpu.memory_space<vmem>>, %arg21: memref<64x128xbf16, #tpu.memory_space<vmem>>, %arg22: memref<1x128xf32, #tpu.memory_space<vmem>>, %arg23: memref<8x128xf32, #tpu.memory_space<vmem>>) attributes {dimension_semantics = [], scalar_prefetch = 0 : i64, scratch_operands = 0 : i64, tpu.core_type = #tpu.core_type<tc>} {
    %0 = tpu.iota {dimensions = array<i32: 0>} : vector<10x1xi32>
    %c0_i32 = arith.constant 0 : i32
    %1 = vector.broadcast %c0_i32 : i32 to vector<10x1xi32>
    %c6_i32 = arith.constant 6 : i32
    %2 = vector.broadcast %c6_i32 : i32 to vector<10x1xi32>
    %3 = arith.cmpi sge, %0, %2 : vector<10x1xi32>
    %4 = arith.extui %3 : vector<10x1xi1> to vector<10x1xi32>
    %5 = arith.addi %1, %4 : vector<10x1xi32>
    %c2_i32 = arith.constant 2 : i32
    %6 = vector.broadcast %c2_i32 : i32 to vector<10x1xi32>
    %7 = arith.cmpi slt, %0, %6 : vector<10x1xi32>
    %8 = arith.select %7, %0, %5 : vector<10x1xi1>, vector<10x1xi32>
    %9 = tpu.iota {dimensions = array<i32: 1>} : vector<1x10xi32>
    %c0_i32_0 = arith.constant 0 : i32
    %10 = vector.broadcast %c0_i32_0 : i32 to vector<1x10xi32>
    %c6_i32_1 = arith.constant 6 : i32
    %11 = vector.broadcast %c6_i32_1 : i32 to vector<1x10xi32>
    %12 = arith.cmpi sge, %9, %11 : vector<1x10xi32>
    %13 = arith.extui %12 : vector<1x10xi1> to vector<1x10xi32>
    %14 = arith.addi %10, %13 : vector<1x10xi32>
    %c2_i32_2 = arith.constant 2 : i32
    %15 = vector.broadcast %c2_i32_2 : i32 to vector<1x10xi32>
    %16 = arith.cmpi slt, %9, %15 : vector<1x10xi32>
    %17 = arith.select %16, %9, %14 : vector<1x10xi1>, vector<1x10xi32>
    %18 = vector.broadcast %8 : vector<10x1xi32> to vector<10x10xi32>
    %19 = vector.broadcast %17 : vector<1x10xi32> to vector<10x10xi32>
    %20 = arith.cmpi eq, %18, %19 : vector<10x10xi32>
    %cst = arith.constant 0.000000e+00 : f32
    %cst_3 = arith.constant -1.000000e+30 : f32
    %21 = vector.broadcast %cst : f32 to vector<10x10xf32>
    %22 = vector.broadcast %cst_3 : f32 to vector<10x10xf32>
    %23 = arith.select %20, %21, %22 : vector<10x10xi1>, vector<10x10xf32>
    %c0 = arith.constant 0 : index
    %c0_4 = arith.constant 0 : index
    %24 = vector.load %arg0[%c0, %c0_4] : memref<10x768xbf16, #tpu.memory_space<vmem>>, vector<10x768xbf16>
    %c0_5 = arith.constant 0 : index
    %c0_6 = arith.constant 0 : index
    %25 = vector.load %arg1[%c0_5, %c0_6] : memref<768x64xbf16, #tpu.memory_space<vmem>>, vector<768x64xbf16>
    %cst_7 = arith.constant dense<0.000000e+00> : vector<10x64xf32>
    %26 = tpu.matmul %24, %25, %cst_7 {dimension_numbers = #tpu.dot_dimension_numbers<[1], [0], [0], [1], [0, 0, 1, 1], [], []>} : vector<10x768xbf16>, vector<768x64xbf16>, vector<10x64xf32> -> vector<10x64xf32>
    %c0_8 = arith.constant 0 : index
    %c0_9 = arith.constant 0 : index
    %27 = vector.load %arg2[%c0_8, %c0_9] : memref<10x64xf32, #tpu.memory_space<vmem>>, vector<10x64xf32>
    %28 = arith.addf %26, %27 : vector<10x64xf32>
    %c0_10 = arith.constant 0 : index
    %c0_11 = arith.constant 0 : index
    %29 = vector.load %arg3[%c0_10, %c0_11] : memref<2x64xf32, #tpu.memory_space<vmem>>, vector<2x64xf32>
    %c0_12 = arith.constant 0 : index
    %c0_13 = arith.constant 0 : index
    %30 = vector.load %arg4[%c0_12, %c0_13] : memref<2x64xf32, #tpu.memory_space<vmem>>, vector<2x64xf32>
    %c0_14 = arith.constant 0 : index
    %c0_15 = arith.constant 0 : index
    %31 = vector.load %arg12[%c0_14, %c0_15] : memref<2x64xf32, #tpu.memory_space<vmem>>, vector<2x64xf32>
    %c0_16 = arith.constant 0 : index
    %c0_17 = arith.constant 0 : index
    %32 = vector.load %arg13[%c0_16, %c0_17] : memref<2x64xf32, #tpu.memory_space<vmem>>, vector<2x64xf32>
    %c0_18 = arith.constant 0 : index
    %c0_19 = arith.constant 0 : index
    %33 = vector.load %arg14[%c0_18, %c0_19] : memref<2x64xf32, #tpu.memory_space<vmem>>, vector<2x64xf32>
    %c0_20 = arith.constant 0 : index
    %c0_21 = arith.constant 0 : index
    %34 = vector.load %arg16[%c0_20, %c0_21] : memref<2x128xf32, #tpu.memory_space<vmem>>, vector<2x128xf32>
    %c0_22 = arith.constant 0 : index
    %c0_23 = arith.constant 0 : index
    %35 = vector.load %arg18[%c0_22, %c0_23] : memref<2x64xf32, #tpu.memory_space<vmem>>, vector<2x64xf32>
    %36 = vector.extract_strided_slice %29 {offsets = [0, 0], sizes = [1, 64], strides = [1, 1]} : vector<2x64xf32> to vector<1x64xf32>
    %37 = vector.extract_strided_slice %30 {offsets = [0, 0], sizes = [1, 64], strides = [1, 1]} : vector<2x64xf32> to vector<1x64xf32>
    %cst_24 = arith.constant dense<0.000000e+00> : vector<10xf32>
    %38 = vector.multi_reduction <add>, %28, %cst_24 [1] : vector<10x64xf32> to vector<10xf32>
    %39 = vector.shape_cast %38 : vector<10xf32> to vector<10x1xf32>
    %cst_25 = arith.constant 6.400000e+01 : f32
    %40 = vector.broadcast %cst_25 : f32 to vector<10x1xf32>
    %41 = arith.divf %39, %40 : vector<10x1xf32>
    %42 = vector.broadcast %41 : vector<10x1xf32> to vector<10x64xf32>
    %43 = arith.subf %28, %42 : vector<10x64xf32>
    %44 = arith.mulf %43, %43 : vector<10x64xf32>
    %cst_26 = arith.constant dense<0.000000e+00> : vector<10xf32>
    %45 = vector.multi_reduction <add>, %44, %cst_26 [1] : vector<10x64xf32> to vector<10xf32>
    %46 = vector.shape_cast %45 : vector<10xf32> to vector<10x1xf32>
    %cst_27 = arith.constant 6.400000e+01 : f32
    %47 = vector.broadcast %cst_27 : f32 to vector<10x1xf32>
    %48 = arith.divf %46, %47 : vector<10x1xf32>
    %cst_28 = arith.constant 9.99999997E-7 : f32
    %49 = vector.broadcast %cst_28 : f32 to vector<10x1xf32>
    %50 = arith.addf %48, %49 : vector<10x1xf32>
    %51 = math.rsqrt %50 : vector<10x1xf32>
    %52 = vector.broadcast %51 : vector<10x1xf32> to vector<10x64xf32>
    %53 = arith.mulf %43, %52 : vector<10x64xf32>
    %54 = vector.broadcast %36 : vector<1x64xf32> to vector<10x64xf32>
    %55 = arith.mulf %53, %54 : vector<10x64xf32>
    %56 = vector.broadcast %37 : vector<1x64xf32> to vector<10x64xf32>
    %57 = arith.addf %55, %56 : vector<10x64xf32>
    %c0_29 = arith.constant 0 : index
    %c0_30 = arith.constant 0 : index
    %c0_31 = arith.constant 0 : index
    %c0_32 = arith.constant 0 : index
    %58 = vector.load %arg5[%c0_29, %c0_30, %c0_31, %c0_32] : memref<2x4x64x16xbf16, #tpu.memory_space<vmem>>, vector<1x1x64x16xbf16>
    %59 = vector.shape_cast %58 : vector<1x1x64x16xbf16> to vector<64x16xbf16>
    %60 = arith.truncf %57 : vector<10x64xf32> to vector<10x64xbf16>
    %cst_33 = arith.constant dense<0.000000e+00> : vector<10x16xf32>
    %61 = tpu.matmul %60, %59, %cst_33 {dimension_numbers = #tpu.dot_dimension_numbers<[1], [0], [0], [1], [0, 0, 1, 1], [], []>} : vector<10x64xbf16>, vector<64x16xbf16>, vector<10x16xf32> -> vector<10x16xf32>
    %c0_34 = arith.constant 0 : index
    %c0_35 = arith.constant 0 : index
    %c0_36 = arith.constant 0 : index
    %c0_37 = arith.constant 0 : index
    %62 = vector.load %arg8[%c0_34, %c0_35, %c0_36, %c0_37] : memref<2x4x1x16xf32, #tpu.memory_space<vmem>>, vector<1x1x1x16xf32>
    %63 = vector.shape_cast %62 : vector<1x1x1x16xf32> to vector<1x16xf32>
    %64 = vector.broadcast %63 : vector<1x16xf32> to vector<10x16xf32>
    %65 = arith.addf %61, %64 : vector<10x16xf32>
    %c0_38 = arith.constant 0 : index
    %c0_39 = arith.constant 0 : index
    %c0_40 = arith.constant 0 : index
    %c0_41 = arith.constant 0 : index
    %66 = vector.load %arg6[%c0_38, %c0_39, %c0_40, %c0_41] : memref<2x4x64x16xbf16, #tpu.memory_space<vmem>>, vector<1x1x64x16xbf16>
    %67 = vector.shape_cast %66 : vector<1x1x64x16xbf16> to vector<64x16xbf16>
    %68 = arith.truncf %57 : vector<10x64xf32> to vector<10x64xbf16>
    %cst_42 = arith.constant dense<0.000000e+00> : vector<10x16xf32>
    %69 = tpu.matmul %68, %67, %cst_42 {dimension_numbers = #tpu.dot_dimension_numbers<[1], [0], [0], [1], [0, 0, 1, 1], [], []>} : vector<10x64xbf16>, vector<64x16xbf16>, vector<10x16xf32> -> vector<10x16xf32>
    %c0_43 = arith.constant 0 : index
    %c0_44 = arith.constant 0 : index
    %c0_45 = arith.constant 0 : index
    %c0_46 = arith.constant 0 : index
    %70 = vector.load %arg9[%c0_43, %c0_44, %c0_45, %c0_46] : memref<2x4x1x16xf32, #tpu.memory_space<vmem>>, vector<1x1x1x16xf32>
    %71 = vector.shape_cast %70 : vector<1x1x1x16xf32> to vector<1x16xf32>
    %72 = vector.broadcast %71 : vector<1x16xf32> to vector<10x16xf32>
    %73 = arith.addf %69, %72 : vector<10x16xf32>
    %c0_47 = arith.constant 0 : index
    %c0_48 = arith.constant 0 : index
    %c0_49 = arith.constant 0 : index
    %c0_50 = arith.constant 0 : index
    %74 = vector.load %arg7[%c0_47, %c0_48, %c0_49, %c0_50] : memref<2x4x64x16xbf16, #tpu.memory_space<vmem>>, vector<1x1x64x16xbf16>
    %75 = vector.shape_cast %74 : vector<1x1x64x16xbf16> to vector<64x16xbf16>
    %76 = arith.truncf %57 : vector<10x64xf32> to vector<10x64xbf16>
    %cst_51 = arith.constant dense<0.000000e+00> : vector<10x16xf32>
    %77 = tpu.matmul %76, %75, %cst_51 {dimension_numbers = #tpu.dot_dimension_numbers<[1], [0], [0], [1], [0, 0, 1, 1], [], []>} : vector<10x64xbf16>, vector<64x16xbf16>, vector<10x16xf32> -> vector<10x16xf32>
    %c0_52 = arith.constant 0 : index
    %c0_53 = arith.constant 0 : index
    %c0_54 = arith.constant 0 : index
    %c0_55 = arith.constant 0 : index
    %78 = vector.load %arg10[%c0_52, %c0_53, %c0_54, %c0_55] : memref<2x4x1x16xf32, #tpu.memory_space<vmem>>, vector<1x1x1x16xf32>
    %79 = vector.shape_cast %78 : vector<1x1x1x16xf32> to vector<1x16xf32>
    %80 = vector.broadcast %79 : vector<1x16xf32> to vector<10x16xf32>
    %81 = arith.addf %77, %80 : vector<10x16xf32>
    %82 = arith.truncf %65 : vector<10x16xf32> to vector<10x16xbf16>
    %83 = arith.truncf %73 : vector<10x16xf32> to vector<10x16xbf16>
    %cst_56 = arith.constant dense<0.000000e+00> : vector<10x10xf32>
    %84 = tpu.matmul %82, %83, %cst_56 {dimension_numbers = #tpu.dot_dimension_numbers<[1], [1], [0], [0], [0, 0, 1, 0], [], []>} : vector<10x16xbf16>, vector<10x16xbf16>, vector<10x10xf32> -> vector<10x10xf32>
    %cst_57 = arith.constant 2.500000e-01 : f32
    %85 = vector.broadcast %cst_57 : f32 to vector<10x10xf32>
    %86 = arith.mulf %84, %85 : vector<10x10xf32>
    %87 = arith.addf %86, %23 : vector<10x10xf32>
    %cst_58 = arith.constant dense<0xFF800000> : vector<10xf32>
    %88 = vector.multi_reduction <maximumf>, %87, %cst_58 [1] : vector<10x10xf32> to vector<10xf32>
    %89 = vector.shape_cast %88 : vector<10xf32> to vector<10x1xf32>
    %90 = vector.broadcast %89 : vector<10x1xf32> to vector<10x10xf32>
    %91 = arith.subf %87, %90 : vector<10x10xf32>
    %92 = math.exp %91 : vector<10x10xf32>
    %cst_59 = arith.constant dense<0.000000e+00> : vector<10xf32>
    %93 = vector.multi_reduction <add>, %92, %cst_59 [1] : vector<10x10xf32> to vector<10xf32>
    %94 = vector.shape_cast %93 : vector<10xf32> to vector<10x1xf32>
    %95 = tpu.reciprocal %94 {approx = true} : vector<10x1xf32> -> vector<10x1xf32>
    %96 = vector.broadcast %95 : vector<10x1xf32> to vector<10x10xf32>
    %97 = arith.mulf %92, %96 : vector<10x10xf32>
    %98 = arith.truncf %97 : vector<10x10xf32> to vector<10x10xbf16>
    %99 = arith.truncf %81 : vector<10x16xf32> to vector<10x16xbf16>
    %cst_60 = arith.constant dense<0.000000e+00> : vector<10x16xf32>
    %100 = tpu.matmul %98, %99, %cst_60 {dimension_numbers = #tpu.dot_dimension_numbers<[1], [0], [0], [1], [0, 0, 1, 1], [], []>} : vector<10x10xbf16>, vector<10x16xbf16>, vector<10x16xf32> -> vector<10x16xf32>
    %c0_61 = arith.constant 0 : index
    %c0_62 = arith.constant 0 : index
    %c0_63 = arith.constant 0 : index
    %c0_64 = arith.constant 0 : index
    %101 = vector.load %arg11[%c0_61, %c0_62, %c0_63, %c0_64] : memref<2x4x16x64xbf16, #tpu.memory_space<vmem>>, vector<1x1x16x64xbf16>
    %102 = vector.shape_cast %101 : vector<1x1x16x64xbf16> to vector<16x64xbf16>
    %103 = arith.truncf %100 : vector<10x16xf32> to vector<10x16xbf16>
    %cst_65 = arith.constant dense<0.000000e+00> : vector<10x64xf32>
    %104 = tpu.matmul %103, %102, %cst_65 {dimension_numbers = #tpu.dot_dimension_numbers<[1], [0], [0], [1], [0, 0, 1, 1], [], []>} : vector<10x16xbf16>, vector<16x64xbf16>, vector<10x64xf32> -> vector<10x64xf32>
    %c0_66 = arith.constant 0 : index
    %c1 = arith.constant 1 : index
    %c0_67 = arith.constant 0 : index
    %c0_68 = arith.constant 0 : index
    %105 = vector.load %arg5[%c0_66, %c1, %c0_67, %c0_68] : memref<2x4x64x16xbf16, #tpu.memory_space<vmem>>, vector<1x1x64x16xbf16>
    %106 = vector.shape_cast %105 : vector<1x1x64x16xbf16> to vector<64x16xbf16>
    %107 = arith.truncf %57 : vector<10x64xf32> to vector<10x64xbf16>
    %cst_69 = arith.constant dense<0.000000e+00> : vector<10x16xf32>
    %108 = tpu.matmul %107, %106, %cst_69 {dimension_numbers = #tpu.dot_dimension_numbers<[1], [0], [0], [1], [0, 0, 1, 1], [], []>} : vector<10x64xbf16>, vector<64x16xbf16>, vector<10x16xf32> -> vector<10x16xf32>
    %c0_70 = arith.constant 0 : index
    %c1_71 = arith.constant 1 : index
    %c0_72 = arith.constant 0 : index
    %c0_73 = arith.constant 0 : index
    %109 = vector.load %arg8[%c0_70, %c1_71, %c0_72, %c0_73] : memref<2x4x1x16xf32, #tpu.memory_space<vmem>>, vector<1x1x1x16xf32>
    %110 = vector.shape_cast %109 : vector<1x1x1x16xf32> to vector<1x16xf32>
    %111 = vector.broadcast %110 : vector<1x16xf32> to vector<10x16xf32>
    %112 = arith.addf %108, %111 : vector<10x16xf32>
    %c0_74 = arith.constant 0 : index
    %c1_75 = arith.constant 1 : index
    %c0_76 = arith.constant 0 : index
    %c0_77 = arith.constant 0 : index
    %113 = vector.load %arg6[%c0_74, %c1_75, %c0_76, %c0_77] : memref<2x4x64x16xbf16, #tpu.memory_space<vmem>>, vector<1x1x64x16xbf16>
    %114 = vector.shape_cast %113 : vector<1x1x64x16xbf16> to vector<64x16xbf16>
    %115 = arith.truncf %57 : vector<10x64xf32> to vector<10x64xbf16>
    %cst_78 = arith.constant dense<0.000000e+00> : vector<10x16xf32>
    %116 = tpu.matmul %115, %114, %cst_78 {dimension_numbers = #tpu.dot_dimension_numbers<[1], [0], [0], [1], [0, 0, 1, 1], [], []>} : vector<10x64xbf16>, vector<64x16xbf16>, vector<10x16xf32> -> vector<10x16xf32>
    %c0_79 = arith.constant 0 : index
    %c1_80 = arith.constant 1 : index
    %c0_81 = arith.constant 0 : index
    %c0_82 = arith.constant 0 : index
    %117 = vector.load %arg9[%c0_79, %c1_80, %c0_81, %c0_82] : memref<2x4x1x16xf32, #tpu.memory_space<vmem>>, vector<1x1x1x16xf32>
    %118 = vector.shape_cast %117 : vector<1x1x1x16xf32> to vector<1x16xf32>
    %119 = vector.broadcast %118 : vector<1x16xf32> to vector<10x16xf32>
    %120 = arith.addf %116, %119 : vector<10x16xf32>
    %c0_83 = arith.constant 0 : index
    %c1_84 = arith.constant 1 : index
    %c0_85 = arith.constant 0 : index
    %c0_86 = arith.constant 0 : index
    %121 = vector.load %arg7[%c0_83, %c1_84, %c0_85, %c0_86] : memref<2x4x64x16xbf16, #tpu.memory_space<vmem>>, vector<1x1x64x16xbf16>
    %122 = vector.shape_cast %121 : vector<1x1x64x16xbf16> to vector<64x16xbf16>
    %123 = arith.truncf %57 : vector<10x64xf32> to vector<10x64xbf16>
    %cst_87 = arith.constant dense<0.000000e+00> : vector<10x16xf32>
    %124 = tpu.matmul %123, %122, %cst_87 {dimension_numbers = #tpu.dot_dimension_numbers<[1], [0], [0], [1], [0, 0, 1, 1], [], []>} : vector<10x64xbf16>, vector<64x16xbf16>, vector<10x16xf32> -> vector<10x16xf32>
    %c0_88 = arith.constant 0 : index
    %c1_89 = arith.constant 1 : index
    %c0_90 = arith.constant 0 : index
    %c0_91 = arith.constant 0 : index
    %125 = vector.load %arg10[%c0_88, %c1_89, %c0_90, %c0_91] : memref<2x4x1x16xf32, #tpu.memory_space<vmem>>, vector<1x1x1x16xf32>
    %126 = vector.shape_cast %125 : vector<1x1x1x16xf32> to vector<1x16xf32>
    %127 = vector.broadcast %126 : vector<1x16xf32> to vector<10x16xf32>
    %128 = arith.addf %124, %127 : vector<10x16xf32>
    %129 = arith.truncf %112 : vector<10x16xf32> to vector<10x16xbf16>
    %130 = arith.truncf %120 : vector<10x16xf32> to vector<10x16xbf16>
    %cst_92 = arith.constant dense<0.000000e+00> : vector<10x10xf32>
    %131 = tpu.matmul %129, %130, %cst_92 {dimension_numbers = #tpu.dot_dimension_numbers<[1], [1], [0], [0], [0, 0, 1, 0], [], []>} : vector<10x16xbf16>, vector<10x16xbf16>, vector<10x10xf32> -> vector<10x10xf32>
    %cst_93 = arith.constant 2.500000e-01 : f32
    %132 = vector.broadcast %cst_93 : f32 to vector<10x10xf32>
    %133 = arith.mulf %131, %132 : vector<10x10xf32>
    %134 = arith.addf %133, %23 : vector<10x10xf32>
    %cst_94 = arith.constant dense<0xFF800000> : vector<10xf32>
    %135 = vector.multi_reduction <maximumf>, %134, %cst_94 [1] : vector<10x10xf32> to vector<10xf32>
    %136 = vector.shape_cast %135 : vector<10xf32> to vector<10x1xf32>
    %137 = vector.broadcast %136 : vector<10x1xf32> to vector<10x10xf32>
    %138 = arith.subf %134, %137 : vector<10x10xf32>
    %139 = math.exp %138 : vector<10x10xf32>
    %cst_95 = arith.constant dense<0.000000e+00> : vector<10xf32>
    %140 = vector.multi_reduction <add>, %139, %cst_95 [1] : vector<10x10xf32> to vector<10xf32>
    %141 = vector.shape_cast %140 : vector<10xf32> to vector<10x1xf32>
    %142 = tpu.reciprocal %141 {approx = true} : vector<10x1xf32> -> vector<10x1xf32>
    %143 = vector.broadcast %142 : vector<10x1xf32> to vector<10x10xf32>
    %144 = arith.mulf %139, %143 : vector<10x10xf32>
    %145 = arith.truncf %144 : vector<10x10xf32> to vector<10x10xbf16>
    %146 = arith.truncf %128 : vector<10x16xf32> to vector<10x16xbf16>
    %cst_96 = arith.constant dense<0.000000e+00> : vector<10x16xf32>
    %147 = tpu.matmul %145, %146, %cst_96 {dimension_numbers = #tpu.dot_dimension_numbers<[1], [0], [0], [1], [0, 0, 1, 1], [], []>} : vector<10x10xbf16>, vector<10x16xbf16>, vector<10x16xf32> -> vector<10x16xf32>
    %c0_97 = arith.constant 0 : index
    %c1_98 = arith.constant 1 : index
    %c0_99 = arith.constant 0 : index
    %c0_100 = arith.constant 0 : index
    %148 = vector.load %arg11[%c0_97, %c1_98, %c0_99, %c0_100] : memref<2x4x16x64xbf16, #tpu.memory_space<vmem>>, vector<1x1x16x64xbf16>
    %149 = vector.shape_cast %148 : vector<1x1x16x64xbf16> to vector<16x64xbf16>
    %150 = arith.truncf %147 : vector<10x16xf32> to vector<10x16xbf16>
    %cst_101 = arith.constant dense<0.000000e+00> : vector<10x64xf32>
    %151 = tpu.matmul %150, %149, %cst_101 {dimension_numbers = #tpu.dot_dimension_numbers<[1], [0], [0], [1], [0, 0, 1, 1], [], []>} : vector<10x16xbf16>, vector<16x64xbf16>, vector<10x64xf32> -> vector<10x64xf32>
    %c0_102 = arith.constant 0 : index
    %c2 = arith.constant 2 : index
    %c0_103 = arith.constant 0 : index
    %c0_104 = arith.constant 0 : index
    %152 = vector.load %arg5[%c0_102, %c2, %c0_103, %c0_104] : memref<2x4x64x16xbf16, #tpu.memory_space<vmem>>, vector<1x1x64x16xbf16>
    %153 = vector.shape_cast %152 : vector<1x1x64x16xbf16> to vector<64x16xbf16>
    %154 = arith.truncf %57 : vector<10x64xf32> to vector<10x64xbf16>
    %cst_105 = arith.constant dense<0.000000e+00> : vector<10x16xf32>
    %155 = tpu.matmul %154, %153, %cst_105 {dimension_numbers = #tpu.dot_dimension_numbers<[1], [0], [0], [1], [0, 0, 1, 1], [], []>} : vector<10x64xbf16>, vector<64x16xbf16>, vector<10x16xf32> -> vector<10x16xf32>
    %c0_106 = arith.constant 0 : index
    %c2_107 = arith.constant 2 : index
    %c0_108 = arith.constant 0 : index
    %c0_109 = arith.constant 0 : index
    %156 = vector.load %arg8[%c0_106, %c2_107, %c0_108, %c0_109] : memref<2x4x1x16xf32, #tpu.memory_space<vmem>>, vector<1x1x1x16xf32>
    %157 = vector.shape_cast %156 : vector<1x1x1x16xf32> to vector<1x16xf32>
    %158 = vector.broadcast %157 : vector<1x16xf32> to vector<10x16xf32>
    %159 = arith.addf %155, %158 : vector<10x16xf32>
    %c0_110 = arith.constant 0 : index
    %c2_111 = arith.constant 2 : index
    %c0_112 = arith.constant 0 : index
    %c0_113 = arith.constant 0 : index
    %160 = vector.load %arg6[%c0_110, %c2_111, %c0_112, %c0_113] : memref<2x4x64x16xbf16, #tpu.memory_space<vmem>>, vector<1x1x64x16xbf16>
    %161 = vector.shape_cast %160 : vector<1x1x64x16xbf16> to vector<64x16xbf16>
    %162 = arith.truncf %57 : vector<10x64xf32> to vector<10x64xbf16>
    %cst_114 = arith.constant dense<0.000000e+00> : vector<10x16xf32>
    %163 = tpu.matmul %162, %161, %cst_114 {dimension_numbers = #tpu.dot_dimension_numbers<[1], [0], [0], [1], [0, 0, 1, 1], [], []>} : vector<10x64xbf16>, vector<64x16xbf16>, vector<10x16xf32> -> vector<10x16xf32>
    %c0_115 = arith.constant 0 : index
    %c2_116 = arith.constant 2 : index
    %c0_117 = arith.constant 0 : index
    %c0_118 = arith.constant 0 : index
    %164 = vector.load %arg9[%c0_115, %c2_116, %c0_117, %c0_118] : memref<2x4x1x16xf32, #tpu.memory_space<vmem>>, vector<1x1x1x16xf32>
    %165 = vector.shape_cast %164 : vector<1x1x1x16xf32> to vector<1x16xf32>
    %166 = vector.broadcast %165 : vector<1x16xf32> to vector<10x16xf32>
    %167 = arith.addf %163, %166 : vector<10x16xf32>
    %c0_119 = arith.constant 0 : index
    %c2_120 = arith.constant 2 : index
    %c0_121 = arith.constant 0 : index
    %c0_122 = arith.constant 0 : index
    %168 = vector.load %arg7[%c0_119, %c2_120, %c0_121, %c0_122] : memref<2x4x64x16xbf16, #tpu.memory_space<vmem>>, vector<1x1x64x16xbf16>
    %169 = vector.shape_cast %168 : vector<1x1x64x16xbf16> to vector<64x16xbf16>
    %170 = arith.truncf %57 : vector<10x64xf32> to vector<10x64xbf16>
    %cst_123 = arith.constant dense<0.000000e+00> : vector<10x16xf32>
    %171 = tpu.matmul %170, %169, %cst_123 {dimension_numbers = #tpu.dot_dimension_numbers<[1], [0], [0], [1], [0, 0, 1, 1], [], []>} : vector<10x64xbf16>, vector<64x16xbf16>, vector<10x16xf32> -> vector<10x16xf32>
    %c0_124 = arith.constant 0 : index
    %c2_125 = arith.constant 2 : index
    %c0_126 = arith.constant 0 : index
    %c0_127 = arith.constant 0 : index
    %172 = vector.load %arg10[%c0_124, %c2_125, %c0_126, %c0_127] : memref<2x4x1x16xf32, #tpu.memory_space<vmem>>, vector<1x1x1x16xf32>
    %173 = vector.shape_cast %172 : vector<1x1x1x16xf32> to vector<1x16xf32>
    %174 = vector.broadcast %173 : vector<1x16xf32> to vector<10x16xf32>
    %175 = arith.addf %171, %174 : vector<10x16xf32>
    %176 = arith.truncf %159 : vector<10x16xf32> to vector<10x16xbf16>
    %177 = arith.truncf %167 : vector<10x16xf32> to vector<10x16xbf16>
    %cst_128 = arith.constant dense<0.000000e+00> : vector<10x10xf32>
    %178 = tpu.matmul %176, %177, %cst_128 {dimension_numbers = #tpu.dot_dimension_numbers<[1], [1], [0], [0], [0, 0, 1, 0], [], []>} : vector<10x16xbf16>, vector<10x16xbf16>, vector<10x10xf32> -> vector<10x10xf32>
    %cst_129 = arith.constant 2.500000e-01 : f32
    %179 = vector.broadcast %cst_129 : f32 to vector<10x10xf32>
    %180 = arith.mulf %178, %179 : vector<10x10xf32>
    %181 = arith.addf %180, %23 : vector<10x10xf32>
    %cst_130 = arith.constant dense<0xFF800000> : vector<10xf32>
    %182 = vector.multi_reduction <maximumf>, %181, %cst_130 [1] : vector<10x10xf32> to vector<10xf32>
    %183 = vector.shape_cast %182 : vector<10xf32> to vector<10x1xf32>
    %184 = vector.broadcast %183 : vector<10x1xf32> to vector<10x10xf32>
    %185 = arith.subf %181, %184 : vector<10x10xf32>
    %186 = math.exp %185 : vector<10x10xf32>
    %cst_131 = arith.constant dense<0.000000e+00> : vector<10xf32>
    %187 = vector.multi_reduction <add>, %186, %cst_131 [1] : vector<10x10xf32> to vector<10xf32>
    %188 = vector.shape_cast %187 : vector<10xf32> to vector<10x1xf32>
    %189 = tpu.reciprocal %188 {approx = true} : vector<10x1xf32> -> vector<10x1xf32>
    %190 = vector.broadcast %189 : vector<10x1xf32> to vector<10x10xf32>
    %191 = arith.mulf %186, %190 : vector<10x10xf32>
    %192 = arith.truncf %191 : vector<10x10xf32> to vector<10x10xbf16>
    %193 = arith.truncf %175 : vector<10x16xf32> to vector<10x16xbf16>
    %cst_132 = arith.constant dense<0.000000e+00> : vector<10x16xf32>
    %194 = tpu.matmul %192, %193, %cst_132 {dimension_numbers = #tpu.dot_dimension_numbers<[1], [0], [0], [1], [0, 0, 1, 1], [], []>} : vector<10x10xbf16>, vector<10x16xbf16>, vector<10x16xf32> -> vector<10x16xf32>
    %c0_133 = arith.constant 0 : index
    %c2_134 = arith.constant 2 : index
    %c0_135 = arith.constant 0 : index
    %c0_136 = arith.constant 0 : index
    %195 = vector.load %arg11[%c0_133, %c2_134, %c0_135, %c0_136] : memref<2x4x16x64xbf16, #tpu.memory_space<vmem>>, vector<1x1x16x64xbf16>
    %196 = vector.shape_cast %195 : vector<1x1x16x64xbf16> to vector<16x64xbf16>
    %197 = arith.truncf %194 : vector<10x16xf32> to vector<10x16xbf16>
    %cst_137 = arith.constant dense<0.000000e+00> : vector<10x64xf32>
    %198 = tpu.matmul %197, %196, %cst_137 {dimension_numbers = #tpu.dot_dimension_numbers<[1], [0], [0], [1], [0, 0, 1, 1], [], []>} : vector<10x16xbf16>, vector<16x64xbf16>, vector<10x64xf32> -> vector<10x64xf32>
    %c0_138 = arith.constant 0 : index
    %c3 = arith.constant 3 : index
    %c0_139 = arith.constant 0 : index
    %c0_140 = arith.constant 0 : index
    %199 = vector.load %arg5[%c0_138, %c3, %c0_139, %c0_140] : memref<2x4x64x16xbf16, #tpu.memory_space<vmem>>, vector<1x1x64x16xbf16>
    %200 = vector.shape_cast %199 : vector<1x1x64x16xbf16> to vector<64x16xbf16>
    %201 = arith.truncf %57 : vector<10x64xf32> to vector<10x64xbf16>
    %cst_141 = arith.constant dense<0.000000e+00> : vector<10x16xf32>
    %202 = tpu.matmul %201, %200, %cst_141 {dimension_numbers = #tpu.dot_dimension_numbers<[1], [0], [0], [1], [0, 0, 1, 1], [], []>} : vector<10x64xbf16>, vector<64x16xbf16>, vector<10x16xf32> -> vector<10x16xf32>
    %c0_142 = arith.constant 0 : index
    %c3_143 = arith.constant 3 : index
    %c0_144 = arith.constant 0 : index
    %c0_145 = arith.constant 0 : index
    %203 = vector.load %arg8[%c0_142, %c3_143, %c0_144, %c0_145] : memref<2x4x1x16xf32, #tpu.memory_space<vmem>>, vector<1x1x1x16xf32>
    %204 = vector.shape_cast %203 : vector<1x1x1x16xf32> to vector<1x16xf32>
    %205 = vector.broadcast %204 : vector<1x16xf32> to vector<10x16xf32>
    %206 = arith.addf %202, %205 : vector<10x16xf32>
    %c0_146 = arith.constant 0 : index
    %c3_147 = arith.constant 3 : index
    %c0_148 = arith.constant 0 : index
    %c0_149 = arith.constant 0 : index
    %207 = vector.load %arg6[%c0_146, %c3_147, %c0_148, %c0_149] : memref<2x4x64x16xbf16, #tpu.memory_space<vmem>>, vector<1x1x64x16xbf16>
    %208 = vector.shape_cast %207 : vector<1x1x64x16xbf16> to vector<64x16xbf16>
    %209 = arith.truncf %57 : vector<10x64xf32> to vector<10x64xbf16>
    %cst_150 = arith.constant dense<0.000000e+00> : vector<10x16xf32>
    %210 = tpu.matmul %209, %208, %cst_150 {dimension_numbers = #tpu.dot_dimension_numbers<[1], [0], [0], [1], [0, 0, 1, 1], [], []>} : vector<10x64xbf16>, vector<64x16xbf16>, vector<10x16xf32> -> vector<10x16xf32>
    %c0_151 = arith.constant 0 : index
    %c3_152 = arith.constant 3 : index
    %c0_153 = arith.constant 0 : index
    %c0_154 = arith.constant 0 : index
    %211 = vector.load %arg9[%c0_151, %c3_152, %c0_153, %c0_154] : memref<2x4x1x16xf32, #tpu.memory_space<vmem>>, vector<1x1x1x16xf32>
    %212 = vector.shape_cast %211 : vector<1x1x1x16xf32> to vector<1x16xf32>
    %213 = vector.broadcast %212 : vector<1x16xf32> to vector<10x16xf32>
    %214 = arith.addf %210, %213 : vector<10x16xf32>
    %c0_155 = arith.constant 0 : index
    %c3_156 = arith.constant 3 : index
    %c0_157 = arith.constant 0 : index
    %c0_158 = arith.constant 0 : index
    %215 = vector.load %arg7[%c0_155, %c3_156, %c0_157, %c0_158] : memref<2x4x64x16xbf16, #tpu.memory_space<vmem>>, vector<1x1x64x16xbf16>
    %216 = vector.shape_cast %215 : vector<1x1x64x16xbf16> to vector<64x16xbf16>
    %217 = arith.truncf %57 : vector<10x64xf32> to vector<10x64xbf16>
    %cst_159 = arith.constant dense<0.000000e+00> : vector<10x16xf32>
    %218 = tpu.matmul %217, %216, %cst_159 {dimension_numbers = #tpu.dot_dimension_numbers<[1], [0], [0], [1], [0, 0, 1, 1], [], []>} : vector<10x64xbf16>, vector<64x16xbf16>, vector<10x16xf32> -> vector<10x16xf32>
    %c0_160 = arith.constant 0 : index
    %c3_161 = arith.constant 3 : index
    %c0_162 = arith.constant 0 : index
    %c0_163 = arith.constant 0 : index
    %219 = vector.load %arg10[%c0_160, %c3_161, %c0_162, %c0_163] : memref<2x4x1x16xf32, #tpu.memory_space<vmem>>, vector<1x1x1x16xf32>
    %220 = vector.shape_cast %219 : vector<1x1x1x16xf32> to vector<1x16xf32>
    %221 = vector.broadcast %220 : vector<1x16xf32> to vector<10x16xf32>
    %222 = arith.addf %218, %221 : vector<10x16xf32>
    %223 = arith.truncf %206 : vector<10x16xf32> to vector<10x16xbf16>
    %224 = arith.truncf %214 : vector<10x16xf32> to vector<10x16xbf16>
    %cst_164 = arith.constant dense<0.000000e+00> : vector<10x10xf32>
    %225 = tpu.matmul %223, %224, %cst_164 {dimension_numbers = #tpu.dot_dimension_numbers<[1], [1], [0], [0], [0, 0, 1, 0], [], []>} : vector<10x16xbf16>, vector<10x16xbf16>, vector<10x10xf32> -> vector<10x10xf32>
    %cst_165 = arith.constant 2.500000e-01 : f32
    %226 = vector.broadcast %cst_165 : f32 to vector<10x10xf32>
    %227 = arith.mulf %225, %226 : vector<10x10xf32>
    %228 = arith.addf %227, %23 : vector<10x10xf32>
    %cst_166 = arith.constant dense<0xFF800000> : vector<10xf32>
    %229 = vector.multi_reduction <maximumf>, %228, %cst_166 [1] : vector<10x10xf32> to vector<10xf32>
    %230 = vector.shape_cast %229 : vector<10xf32> to vector<10x1xf32>
    %231 = vector.broadcast %230 : vector<10x1xf32> to vector<10x10xf32>
    %232 = arith.subf %228, %231 : vector<10x10xf32>
    %233 = math.exp %232 : vector<10x10xf32>
    %cst_167 = arith.constant dense<0.000000e+00> : vector<10xf32>
    %234 = vector.multi_reduction <add>, %233, %cst_167 [1] : vector<10x10xf32> to vector<10xf32>
    %235 = vector.shape_cast %234 : vector<10xf32> to vector<10x1xf32>
    %236 = tpu.reciprocal %235 {approx = true} : vector<10x1xf32> -> vector<10x1xf32>
    %237 = vector.broadcast %236 : vector<10x1xf32> to vector<10x10xf32>
    %238 = arith.mulf %233, %237 : vector<10x10xf32>
    %239 = arith.truncf %238 : vector<10x10xf32> to vector<10x10xbf16>
    %240 = arith.truncf %222 : vector<10x16xf32> to vector<10x16xbf16>
    %cst_168 = arith.constant dense<0.000000e+00> : vector<10x16xf32>
    %241 = tpu.matmul %239, %240, %cst_168 {dimension_numbers = #tpu.dot_dimension_numbers<[1], [0], [0], [1], [0, 0, 1, 1], [], []>} : vector<10x10xbf16>, vector<10x16xbf16>, vector<10x16xf32> -> vector<10x16xf32>
    %c0_169 = arith.constant 0 : index
    %c3_170 = arith.constant 3 : index
    %c0_171 = arith.constant 0 : index
    %c0_172 = arith.constant 0 : index
    %242 = vector.load %arg11[%c0_169, %c3_170, %c0_171, %c0_172] : memref<2x4x16x64xbf16, #tpu.memory_space<vmem>>, vector<1x1x16x64xbf16>
    %243 = vector.shape_cast %242 : vector<1x1x16x64xbf16> to vector<16x64xbf16>
    %244 = arith.truncf %241 : vector<10x16xf32> to vector<10x16xbf16>
    %cst_173 = arith.constant dense<0.000000e+00> : vector<10x64xf32>
    %245 = tpu.matmul %244, %243, %cst_173 {dimension_numbers = #tpu.dot_dimension_numbers<[1], [0], [0], [1], [0, 0, 1, 1], [], []>} : vector<10x16xbf16>, vector<16x64xbf16>, vector<10x64xf32> -> vector<10x64xf32>
    %246 = arith.addf %104, %151 : vector<10x64xf32>
    %247 = arith.addf %198, %245 : vector<10x64xf32>
    %248 = arith.addf %246, %247 : vector<10x64xf32>
    %249 = arith.addf %28, %248 : vector<10x64xf32>
    %250 = vector.extract_strided_slice %31 {offsets = [0, 0], sizes = [1, 64], strides = [1, 1]} : vector<2x64xf32> to vector<1x64xf32>
    %251 = vector.broadcast %250 : vector<1x64xf32> to vector<10x64xf32>
    %252 = arith.addf %249, %251 : vector<10x64xf32>
    %253 = vector.extract_strided_slice %32 {offsets = [0, 0], sizes = [1, 64], strides = [1, 1]} : vector<2x64xf32> to vector<1x64xf32>
    %254 = vector.extract_strided_slice %33 {offsets = [0, 0], sizes = [1, 64], strides = [1, 1]} : vector<2x64xf32> to vector<1x64xf32>
    %cst_174 = arith.constant dense<0.000000e+00> : vector<10xf32>
    %255 = vector.multi_reduction <add>, %252, %cst_174 [1] : vector<10x64xf32> to vector<10xf32>
    %256 = vector.shape_cast %255 : vector<10xf32> to vector<10x1xf32>
    %cst_175 = arith.constant 6.400000e+01 : f32
    %257 = vector.broadcast %cst_175 : f32 to vector<10x1xf32>
    %258 = arith.divf %256, %257 : vector<10x1xf32>
    %259 = vector.broadcast %258 : vector<10x1xf32> to vector<10x64xf32>
    %260 = arith.subf %252, %259 : vector<10x64xf32>
    %261 = arith.mulf %260, %260 : vector<10x64xf32>
    %cst_176 = arith.constant dense<0.000000e+00> : vector<10xf32>
    %262 = vector.multi_reduction <add>, %261, %cst_176 [1] : vector<10x64xf32> to vector<10xf32>
    %263 = vector.shape_cast %262 : vector<10xf32> to vector<10x1xf32>
    %cst_177 = arith.constant 6.400000e+01 : f32
    %264 = vector.broadcast %cst_177 : f32 to vector<10x1xf32>
    %265 = arith.divf %263, %264 : vector<10x1xf32>
    %cst_178 = arith.constant 9.99999997E-7 : f32
    %266 = vector.broadcast %cst_178 : f32 to vector<10x1xf32>
    %267 = arith.addf %265, %266 : vector<10x1xf32>
    %268 = math.rsqrt %267 : vector<10x1xf32>
    %269 = vector.broadcast %268 : vector<10x1xf32> to vector<10x64xf32>
    %270 = arith.mulf %260, %269 : vector<10x64xf32>
    %271 = vector.broadcast %253 : vector<1x64xf32> to vector<10x64xf32>
    %272 = arith.mulf %270, %271 : vector<10x64xf32>
    %273 = vector.broadcast %254 : vector<1x64xf32> to vector<10x64xf32>
    %274 = arith.addf %272, %273 : vector<10x64xf32>
    %c0_179 = arith.constant 0 : index
    %c0_180 = arith.constant 0 : index
    %c0_181 = arith.constant 0 : index
    %275 = vector.load %arg15[%c0_179, %c0_180, %c0_181] : memref<2x64x128xbf16, #tpu.memory_space<vmem>>, vector<1x64x128xbf16>
    %276 = vector.shape_cast %275 : vector<1x64x128xbf16> to vector<64x128xbf16>
    %277 = arith.truncf %274 : vector<10x64xf32> to vector<10x64xbf16>
    %cst_182 = arith.constant dense<0.000000e+00> : vector<10x128xf32>
    %278 = tpu.matmul %277, %276, %cst_182 {dimension_numbers = #tpu.dot_dimension_numbers<[1], [0], [0], [1], [0, 0, 1, 1], [], []>} : vector<10x64xbf16>, vector<64x128xbf16>, vector<10x128xf32> -> vector<10x128xf32>
    %279 = vector.extract_strided_slice %34 {offsets = [0, 0], sizes = [1, 128], strides = [1, 1]} : vector<2x128xf32> to vector<1x128xf32>
    %280 = vector.broadcast %279 : vector<1x128xf32> to vector<10x128xf32>
    %281 = arith.addf %278, %280 : vector<10x128xf32>
    %cst_183 = arith.constant 5.000000e-01 : f32
    %282 = vector.broadcast %cst_183 : f32 to vector<10x128xf32>
    %283 = arith.mulf %282, %281 : vector<10x128xf32>
    %cst_184 = arith.constant 0.707106769 : f32
    %284 = vector.broadcast %cst_184 : f32 to vector<10x128xf32>
    %285 = arith.mulf %281, %284 : vector<10x128xf32>
    %286 = math.erf %285 : vector<10x128xf32>
    %cst_185 = arith.constant 1.000000e+00 : f32
    %287 = vector.broadcast %cst_185 : f32 to vector<10x128xf32>
    %288 = arith.addf %287, %286 : vector<10x128xf32>
    %289 = arith.mulf %283, %288 : vector<10x128xf32>
    %c0_186 = arith.constant 0 : index
    %c0_187 = arith.constant 0 : index
    %c0_188 = arith.constant 0 : index
    %290 = vector.load %arg17[%c0_186, %c0_187, %c0_188] : memref<2x128x64xbf16, #tpu.memory_space<vmem>>, vector<1x128x64xbf16>
    %291 = vector.shape_cast %290 : vector<1x128x64xbf16> to vector<128x64xbf16>
    %292 = arith.truncf %289 : vector<10x128xf32> to vector<10x128xbf16>
    %cst_189 = arith.constant dense<0.000000e+00> : vector<10x64xf32>
    %293 = tpu.matmul %292, %291, %cst_189 {dimension_numbers = #tpu.dot_dimension_numbers<[1], [0], [0], [1], [0, 0, 1, 1], [], []>} : vector<10x128xbf16>, vector<128x64xbf16>, vector<10x64xf32> -> vector<10x64xf32>
    %294 = vector.extract_strided_slice %35 {offsets = [0, 0], sizes = [1, 64], strides = [1, 1]} : vector<2x64xf32> to vector<1x64xf32>
    %295 = vector.broadcast %294 : vector<1x64xf32> to vector<10x64xf32>
    %296 = arith.addf %293, %295 : vector<10x64xf32>
    %297 = arith.addf %252, %296 : vector<10x64xf32>
    %298 = vector.extract_strided_slice %29 {offsets = [1, 0], sizes = [1, 64], strides = [1, 1]} : vector<2x64xf32> to vector<1x64xf32>
    %299 = vector.extract_strided_slice %30 {offsets = [1, 0], sizes = [1, 64], strides = [1, 1]} : vector<2x64xf32> to vector<1x64xf32>
    %cst_190 = arith.constant dense<0.000000e+00> : vector<10xf32>
    %300 = vector.multi_reduction <add>, %297, %cst_190 [1] : vector<10x64xf32> to vector<10xf32>
    %301 = vector.shape_cast %300 : vector<10xf32> to vector<10x1xf32>
    %cst_191 = arith.constant 6.400000e+01 : f32
    %302 = vector.broadcast %cst_191 : f32 to vector<10x1xf32>
    %303 = arith.divf %301, %302 : vector<10x1xf32>
    %304 = vector.broadcast %303 : vector<10x1xf32> to vector<10x64xf32>
    %305 = arith.subf %297, %304 : vector<10x64xf32>
    %306 = arith.mulf %305, %305 : vector<10x64xf32>
    %cst_192 = arith.constant dense<0.000000e+00> : vector<10xf32>
    %307 = vector.multi_reduction <add>, %306, %cst_192 [1] : vector<10x64xf32> to vector<10xf32>
    %308 = vector.shape_cast %307 : vector<10xf32> to vector<10x1xf32>
    %cst_193 = arith.constant 6.400000e+01 : f32
    %309 = vector.broadcast %cst_193 : f32 to vector<10x1xf32>
    %310 = arith.divf %308, %309 : vector<10x1xf32>
    %cst_194 = arith.constant 9.99999997E-7 : f32
    %311 = vector.broadcast %cst_194 : f32 to vector<10x1xf32>
    %312 = arith.addf %310, %311 : vector<10x1xf32>
    %313 = math.rsqrt %312 : vector<10x1xf32>
    %314 = vector.broadcast %313 : vector<10x1xf32> to vector<10x64xf32>
    %315 = arith.mulf %305, %314 : vector<10x64xf32>
    %316 = vector.broadcast %298 : vector<1x64xf32> to vector<10x64xf32>
    %317 = arith.mulf %315, %316 : vector<10x64xf32>
    %318 = vector.broadcast %299 : vector<1x64xf32> to vector<10x64xf32>
    %319 = arith.addf %317, %318 : vector<10x64xf32>
    %c1_195 = arith.constant 1 : index
    %c0_196 = arith.constant 0 : index
    %c0_197 = arith.constant 0 : index
    %c0_198 = arith.constant 0 : index
    %320 = vector.load %arg5[%c1_195, %c0_196, %c0_197, %c0_198] : memref<2x4x64x16xbf16, #tpu.memory_space<vmem>>, vector<1x1x64x16xbf16>
    %321 = vector.shape_cast %320 : vector<1x1x64x16xbf16> to vector<64x16xbf16>
    %322 = arith.truncf %319 : vector<10x64xf32> to vector<10x64xbf16>
    %cst_199 = arith.constant dense<0.000000e+00> : vector<10x16xf32>
    %323 = tpu.matmul %322, %321, %cst_199 {dimension_numbers = #tpu.dot_dimension_numbers<[1], [0], [0], [1], [0, 0, 1, 1], [], []>} : vector<10x64xbf16>, vector<64x16xbf16>, vector<10x16xf32> -> vector<10x16xf32>
    %c1_200 = arith.constant 1 : index
    %c0_201 = arith.constant 0 : index
    %c0_202 = arith.constant 0 : index
    %c0_203 = arith.constant 0 : index
    %324 = vector.load %arg8[%c1_200, %c0_201, %c0_202, %c0_203] : memref<2x4x1x16xf32, #tpu.memory_space<vmem>>, vector<1x1x1x16xf32>
    %325 = vector.shape_cast %324 : vector<1x1x1x16xf32> to vector<1x16xf32>
    %326 = vector.broadcast %325 : vector<1x16xf32> to vector<10x16xf32>
    %327 = arith.addf %323, %326 : vector<10x16xf32>
    %c1_204 = arith.constant 1 : index
    %c0_205 = arith.constant 0 : index
    %c0_206 = arith.constant 0 : index
    %c0_207 = arith.constant 0 : index
    %328 = vector.load %arg6[%c1_204, %c0_205, %c0_206, %c0_207] : memref<2x4x64x16xbf16, #tpu.memory_space<vmem>>, vector<1x1x64x16xbf16>
    %329 = vector.shape_cast %328 : vector<1x1x64x16xbf16> to vector<64x16xbf16>
    %330 = arith.truncf %319 : vector<10x64xf32> to vector<10x64xbf16>
    %cst_208 = arith.constant dense<0.000000e+00> : vector<10x16xf32>
    %331 = tpu.matmul %330, %329, %cst_208 {dimension_numbers = #tpu.dot_dimension_numbers<[1], [0], [0], [1], [0, 0, 1, 1], [], []>} : vector<10x64xbf16>, vector<64x16xbf16>, vector<10x16xf32> -> vector<10x16xf32>
    %c1_209 = arith.constant 1 : index
    %c0_210 = arith.constant 0 : index
    %c0_211 = arith.constant 0 : index
    %c0_212 = arith.constant 0 : index
    %332 = vector.load %arg9[%c1_209, %c0_210, %c0_211, %c0_212] : memref<2x4x1x16xf32, #tpu.memory_space<vmem>>, vector<1x1x1x16xf32>
    %333 = vector.shape_cast %332 : vector<1x1x1x16xf32> to vector<1x16xf32>
    %334 = vector.broadcast %333 : vector<1x16xf32> to vector<10x16xf32>
    %335 = arith.addf %331, %334 : vector<10x16xf32>
    %c1_213 = arith.constant 1 : index
    %c0_214 = arith.constant 0 : index
    %c0_215 = arith.constant 0 : index
    %c0_216 = arith.constant 0 : index
    %336 = vector.load %arg7[%c1_213, %c0_214, %c0_215, %c0_216] : memref<2x4x64x16xbf16, #tpu.memory_space<vmem>>, vector<1x1x64x16xbf16>
    %337 = vector.shape_cast %336 : vector<1x1x64x16xbf16> to vector<64x16xbf16>
    %338 = arith.truncf %319 : vector<10x64xf32> to vector<10x64xbf16>
    %cst_217 = arith.constant dense<0.000000e+00> : vector<10x16xf32>
    %339 = tpu.matmul %338, %337, %cst_217 {dimension_numbers = #tpu.dot_dimension_numbers<[1], [0], [0], [1], [0, 0, 1, 1], [], []>} : vector<10x64xbf16>, vector<64x16xbf16>, vector<10x16xf32> -> vector<10x16xf32>
    %c1_218 = arith.constant 1 : index
    %c0_219 = arith.constant 0 : index
    %c0_220 = arith.constant 0 : index
    %c0_221 = arith.constant 0 : index
    %340 = vector.load %arg10[%c1_218, %c0_219, %c0_220, %c0_221] : memref<2x4x1x16xf32, #tpu.memory_space<vmem>>, vector<1x1x1x16xf32>
    %341 = vector.shape_cast %340 : vector<1x1x1x16xf32> to vector<1x16xf32>
    %342 = vector.broadcast %341 : vector<1x16xf32> to vector<10x16xf32>
    %343 = arith.addf %339, %342 : vector<10x16xf32>
    %344 = arith.truncf %327 : vector<10x16xf32> to vector<10x16xbf16>
    %345 = arith.truncf %335 : vector<10x16xf32> to vector<10x16xbf16>
    %cst_222 = arith.constant dense<0.000000e+00> : vector<10x10xf32>
    %346 = tpu.matmul %344, %345, %cst_222 {dimension_numbers = #tpu.dot_dimension_numbers<[1], [1], [0], [0], [0, 0, 1, 0], [], []>} : vector<10x16xbf16>, vector<10x16xbf16>, vector<10x10xf32> -> vector<10x10xf32>
    %cst_223 = arith.constant 2.500000e-01 : f32
    %347 = vector.broadcast %cst_223 : f32 to vector<10x10xf32>
    %348 = arith.mulf %346, %347 : vector<10x10xf32>
    %349 = arith.addf %348, %23 : vector<10x10xf32>
    %cst_224 = arith.constant dense<0xFF800000> : vector<10xf32>
    %350 = vector.multi_reduction <maximumf>, %349, %cst_224 [1] : vector<10x10xf32> to vector<10xf32>
    %351 = vector.shape_cast %350 : vector<10xf32> to vector<10x1xf32>
    %352 = vector.broadcast %351 : vector<10x1xf32> to vector<10x10xf32>
    %353 = arith.subf %349, %352 : vector<10x10xf32>
    %354 = math.exp %353 : vector<10x10xf32>
    %cst_225 = arith.constant dense<0.000000e+00> : vector<10xf32>
    %355 = vector.multi_reduction <add>, %354, %cst_225 [1] : vector<10x10xf32> to vector<10xf32>
    %356 = vector.shape_cast %355 : vector<10xf32> to vector<10x1xf32>
    %357 = tpu.reciprocal %356 {approx = true} : vector<10x1xf32> -> vector<10x1xf32>
    %358 = vector.broadcast %357 : vector<10x1xf32> to vector<10x10xf32>
    %359 = arith.mulf %354, %358 : vector<10x10xf32>
    %360 = arith.truncf %359 : vector<10x10xf32> to vector<10x10xbf16>
    %361 = arith.truncf %343 : vector<10x16xf32> to vector<10x16xbf16>
    %cst_226 = arith.constant dense<0.000000e+00> : vector<10x16xf32>
    %362 = tpu.matmul %360, %361, %cst_226 {dimension_numbers = #tpu.dot_dimension_numbers<[1], [0], [0], [1], [0, 0, 1, 1], [], []>} : vector<10x10xbf16>, vector<10x16xbf16>, vector<10x16xf32> -> vector<10x16xf32>
    %c1_227 = arith.constant 1 : index
    %c0_228 = arith.constant 0 : index
    %c0_229 = arith.constant 0 : index
    %c0_230 = arith.constant 0 : index
    %363 = vector.load %arg11[%c1_227, %c0_228, %c0_229, %c0_230] : memref<2x4x16x64xbf16, #tpu.memory_space<vmem>>, vector<1x1x16x64xbf16>
    %364 = vector.shape_cast %363 : vector<1x1x16x64xbf16> to vector<16x64xbf16>
    %365 = arith.truncf %362 : vector<10x16xf32> to vector<10x16xbf16>
    %cst_231 = arith.constant dense<0.000000e+00> : vector<10x64xf32>
    %366 = tpu.matmul %365, %364, %cst_231 {dimension_numbers = #tpu.dot_dimension_numbers<[1], [0], [0], [1], [0, 0, 1, 1], [], []>} : vector<10x16xbf16>, vector<16x64xbf16>, vector<10x64xf32> -> vector<10x64xf32>
    %c1_232 = arith.constant 1 : index
    %c1_233 = arith.constant 1 : index
    %c0_234 = arith.constant 0 : index
    %c0_235 = arith.constant 0 : index
    %367 = vector.load %arg5[%c1_232, %c1_233, %c0_234, %c0_235] : memref<2x4x64x16xbf16, #tpu.memory_space<vmem>>, vector<1x1x64x16xbf16>
    %368 = vector.shape_cast %367 : vector<1x1x64x16xbf16> to vector<64x16xbf16>
    %369 = arith.truncf %319 : vector<10x64xf32> to vector<10x64xbf16>
    %cst_236 = arith.constant dense<0.000000e+00> : vector<10x16xf32>
    %370 = tpu.matmul %369, %368, %cst_236 {dimension_numbers = #tpu.dot_dimension_numbers<[1], [0], [0], [1], [0, 0, 1, 1], [], []>} : vector<10x64xbf16>, vector<64x16xbf16>, vector<10x16xf32> -> vector<10x16xf32>
    %c1_237 = arith.constant 1 : index
    %c1_238 = arith.constant 1 : index
    %c0_239 = arith.constant 0 : index
    %c0_240 = arith.constant 0 : index
    %371 = vector.load %arg8[%c1_237, %c1_238, %c0_239, %c0_240] : memref<2x4x1x16xf32, #tpu.memory_space<vmem>>, vector<1x1x1x16xf32>
    %372 = vector.shape_cast %371 : vector<1x1x1x16xf32> to vector<1x16xf32>
    %373 = vector.broadcast %372 : vector<1x16xf32> to vector<10x16xf32>
    %374 = arith.addf %370, %373 : vector<10x16xf32>
    %c1_241 = arith.constant 1 : index
    %c1_242 = arith.constant 1 : index
    %c0_243 = arith.constant 0 : index
    %c0_244 = arith.constant 0 : index
    %375 = vector.load %arg6[%c1_241, %c1_242, %c0_243, %c0_244] : memref<2x4x64x16xbf16, #tpu.memory_space<vmem>>, vector<1x1x64x16xbf16>
    %376 = vector.shape_cast %375 : vector<1x1x64x16xbf16> to vector<64x16xbf16>
    %377 = arith.truncf %319 : vector<10x64xf32> to vector<10x64xbf16>
    %cst_245 = arith.constant dense<0.000000e+00> : vector<10x16xf32>
    %378 = tpu.matmul %377, %376, %cst_245 {dimension_numbers = #tpu.dot_dimension_numbers<[1], [0], [0], [1], [0, 0, 1, 1], [], []>} : vector<10x64xbf16>, vector<64x16xbf16>, vector<10x16xf32> -> vector<10x16xf32>
    %c1_246 = arith.constant 1 : index
    %c1_247 = arith.constant 1 : index
    %c0_248 = arith.constant 0 : index
    %c0_249 = arith.constant 0 : index
    %379 = vector.load %arg9[%c1_246, %c1_247, %c0_248, %c0_249] : memref<2x4x1x16xf32, #tpu.memory_space<vmem>>, vector<1x1x1x16xf32>
    %380 = vector.shape_cast %379 : vector<1x1x1x16xf32> to vector<1x16xf32>
    %381 = vector.broadcast %380 : vector<1x16xf32> to vector<10x16xf32>
    %382 = arith.addf %378, %381 : vector<10x16xf32>
    %c1_250 = arith.constant 1 : index
    %c1_251 = arith.constant 1 : index
    %c0_252 = arith.constant 0 : index
    %c0_253 = arith.constant 0 : index
    %383 = vector.load %arg7[%c1_250, %c1_251, %c0_252, %c0_253] : memref<2x4x64x16xbf16, #tpu.memory_space<vmem>>, vector<1x1x64x16xbf16>
    %384 = vector.shape_cast %383 : vector<1x1x64x16xbf16> to vector<64x16xbf16>
    %385 = arith.truncf %319 : vector<10x64xf32> to vector<10x64xbf16>
    %cst_254 = arith.constant dense<0.000000e+00> : vector<10x16xf32>
    %386 = tpu.matmul %385, %384, %cst_254 {dimension_numbers = #tpu.dot_dimension_numbers<[1], [0], [0], [1], [0, 0, 1, 1], [], []>} : vector<10x64xbf16>, vector<64x16xbf16>, vector<10x16xf32> -> vector<10x16xf32>
    %c1_255 = arith.constant 1 : index
    %c1_256 = arith.constant 1 : index
    %c0_257 = arith.constant 0 : index
    %c0_258 = arith.constant 0 : index
    %387 = vector.load %arg10[%c1_255, %c1_256, %c0_257, %c0_258] : memref<2x4x1x16xf32, #tpu.memory_space<vmem>>, vector<1x1x1x16xf32>
    %388 = vector.shape_cast %387 : vector<1x1x1x16xf32> to vector<1x16xf32>
    %389 = vector.broadcast %388 : vector<1x16xf32> to vector<10x16xf32>
    %390 = arith.addf %386, %389 : vector<10x16xf32>
    %391 = arith.truncf %374 : vector<10x16xf32> to vector<10x16xbf16>
    %392 = arith.truncf %382 : vector<10x16xf32> to vector<10x16xbf16>
    %cst_259 = arith.constant dense<0.000000e+00> : vector<10x10xf32>
    %393 = tpu.matmul %391, %392, %cst_259 {dimension_numbers = #tpu.dot_dimension_numbers<[1], [1], [0], [0], [0, 0, 1, 0], [], []>} : vector<10x16xbf16>, vector<10x16xbf16>, vector<10x10xf32> -> vector<10x10xf32>
    %cst_260 = arith.constant 2.500000e-01 : f32
    %394 = vector.broadcast %cst_260 : f32 to vector<10x10xf32>
    %395 = arith.mulf %393, %394 : vector<10x10xf32>
    %396 = arith.addf %395, %23 : vector<10x10xf32>
    %cst_261 = arith.constant dense<0xFF800000> : vector<10xf32>
    %397 = vector.multi_reduction <maximumf>, %396, %cst_261 [1] : vector<10x10xf32> to vector<10xf32>
    %398 = vector.shape_cast %397 : vector<10xf32> to vector<10x1xf32>
    %399 = vector.broadcast %398 : vector<10x1xf32> to vector<10x10xf32>
    %400 = arith.subf %396, %399 : vector<10x10xf32>
    %401 = math.exp %400 : vector<10x10xf32>
    %cst_262 = arith.constant dense<0.000000e+00> : vector<10xf32>
    %402 = vector.multi_reduction <add>, %401, %cst_262 [1] : vector<10x10xf32> to vector<10xf32>
    %403 = vector.shape_cast %402 : vector<10xf32> to vector<10x1xf32>
    %404 = tpu.reciprocal %403 {approx = true} : vector<10x1xf32> -> vector<10x1xf32>
    %405 = vector.broadcast %404 : vector<10x1xf32> to vector<10x10xf32>
    %406 = arith.mulf %401, %405 : vector<10x10xf32>
    %407 = arith.truncf %406 : vector<10x10xf32> to vector<10x10xbf16>
    %408 = arith.truncf %390 : vector<10x16xf32> to vector<10x16xbf16>
    %cst_263 = arith.constant dense<0.000000e+00> : vector<10x16xf32>
    %409 = tpu.matmul %407, %408, %cst_263 {dimension_numbers = #tpu.dot_dimension_numbers<[1], [0], [0], [1], [0, 0, 1, 1], [], []>} : vector<10x10xbf16>, vector<10x16xbf16>, vector<10x16xf32> -> vector<10x16xf32>
    %c1_264 = arith.constant 1 : index
    %c1_265 = arith.constant 1 : index
    %c0_266 = arith.constant 0 : index
    %c0_267 = arith.constant 0 : index
    %410 = vector.load %arg11[%c1_264, %c1_265, %c0_266, %c0_267] : memref<2x4x16x64xbf16, #tpu.memory_space<vmem>>, vector<1x1x16x64xbf16>
    %411 = vector.shape_cast %410 : vector<1x1x16x64xbf16> to vector<16x64xbf16>
    %412 = arith.truncf %409 : vector<10x16xf32> to vector<10x16xbf16>
    %cst_268 = arith.constant dense<0.000000e+00> : vector<10x64xf32>
    %413 = tpu.matmul %412, %411, %cst_268 {dimension_numbers = #tpu.dot_dimension_numbers<[1], [0], [0], [1], [0, 0, 1, 1], [], []>} : vector<10x16xbf16>, vector<16x64xbf16>, vector<10x64xf32> -> vector<10x64xf32>
    %c1_269 = arith.constant 1 : index
    %c2_270 = arith.constant 2 : index
    %c0_271 = arith.constant 0 : index
    %c0_272 = arith.constant 0 : index
    %414 = vector.load %arg5[%c1_269, %c2_270, %c0_271, %c0_272] : memref<2x4x64x16xbf16, #tpu.memory_space<vmem>>, vector<1x1x64x16xbf16>
    %415 = vector.shape_cast %414 : vector<1x1x64x16xbf16> to vector<64x16xbf16>
    %416 = arith.truncf %319 : vector<10x64xf32> to vector<10x64xbf16>
    %cst_273 = arith.constant dense<0.000000e+00> : vector<10x16xf32>
    %417 = tpu.matmul %416, %415, %cst_273 {dimension_numbers = #tpu.dot_dimension_numbers<[1], [0], [0], [1], [0, 0, 1, 1], [], []>} : vector<10x64xbf16>, vector<64x16xbf16>, vector<10x16xf32> -> vector<10x16xf32>
    %c1_274 = arith.constant 1 : index
    %c2_275 = arith.constant 2 : index
    %c0_276 = arith.constant 0 : index
    %c0_277 = arith.constant 0 : index
    %418 = vector.load %arg8[%c1_274, %c2_275, %c0_276, %c0_277] : memref<2x4x1x16xf32, #tpu.memory_space<vmem>>, vector<1x1x1x16xf32>
    %419 = vector.shape_cast %418 : vector<1x1x1x16xf32> to vector<1x16xf32>
    %420 = vector.broadcast %419 : vector<1x16xf32> to vector<10x16xf32>
    %421 = arith.addf %417, %420 : vector<10x16xf32>
    %c1_278 = arith.constant 1 : index
    %c2_279 = arith.constant 2 : index
    %c0_280 = arith.constant 0 : index
    %c0_281 = arith.constant 0 : index
    %422 = vector.load %arg6[%c1_278, %c2_279, %c0_280, %c0_281] : memref<2x4x64x16xbf16, #tpu.memory_space<vmem>>, vector<1x1x64x16xbf16>
    %423 = vector.shape_cast %422 : vector<1x1x64x16xbf16> to vector<64x16xbf16>
    %424 = arith.truncf %319 : vector<10x64xf32> to vector<10x64xbf16>
    %cst_282 = arith.constant dense<0.000000e+00> : vector<10x16xf32>
    %425 = tpu.matmul %424, %423, %cst_282 {dimension_numbers = #tpu.dot_dimension_numbers<[1], [0], [0], [1], [0, 0, 1, 1], [], []>} : vector<10x64xbf16>, vector<64x16xbf16>, vector<10x16xf32> -> vector<10x16xf32>
    %c1_283 = arith.constant 1 : index
    %c2_284 = arith.constant 2 : index
    %c0_285 = arith.constant 0 : index
    %c0_286 = arith.constant 0 : index
    %426 = vector.load %arg9[%c1_283, %c2_284, %c0_285, %c0_286] : memref<2x4x1x16xf32, #tpu.memory_space<vmem>>, vector<1x1x1x16xf32>
    %427 = vector.shape_cast %426 : vector<1x1x1x16xf32> to vector<1x16xf32>
    %428 = vector.broadcast %427 : vector<1x16xf32> to vector<10x16xf32>
    %429 = arith.addf %425, %428 : vector<10x16xf32>
    %c1_287 = arith.constant 1 : index
    %c2_288 = arith.constant 2 : index
    %c0_289 = arith.constant 0 : index
    %c0_290 = arith.constant 0 : index
    %430 = vector.load %arg7[%c1_287, %c2_288, %c0_289, %c0_290] : memref<2x4x64x16xbf16, #tpu.memory_space<vmem>>, vector<1x1x64x16xbf16>
    %431 = vector.shape_cast %430 : vector<1x1x64x16xbf16> to vector<64x16xbf16>
    %432 = arith.truncf %319 : vector<10x64xf32> to vector<10x64xbf16>
    %cst_291 = arith.constant dense<0.000000e+00> : vector<10x16xf32>
    %433 = tpu.matmul %432, %431, %cst_291 {dimension_numbers = #tpu.dot_dimension_numbers<[1], [0], [0], [1], [0, 0, 1, 1], [], []>} : vector<10x64xbf16>, vector<64x16xbf16>, vector<10x16xf32> -> vector<10x16xf32>
    %c1_292 = arith.constant 1 : index
    %c2_293 = arith.constant 2 : index
    %c0_294 = arith.constant 0 : index
    %c0_295 = arith.constant 0 : index
    %434 = vector.load %arg10[%c1_292, %c2_293, %c0_294, %c0_295] : memref<2x4x1x16xf32, #tpu.memory_space<vmem>>, vector<1x1x1x16xf32>
    %435 = vector.shape_cast %434 : vector<1x1x1x16xf32> to vector<1x16xf32>
    %436 = vector.broadcast %435 : vector<1x16xf32> to vector<10x16xf32>
    %437 = arith.addf %433, %436 : vector<10x16xf32>
    %438 = arith.truncf %421 : vector<10x16xf32> to vector<10x16xbf16>
    %439 = arith.truncf %429 : vector<10x16xf32> to vector<10x16xbf16>
    %cst_296 = arith.constant dense<0.000000e+00> : vector<10x10xf32>
    %440 = tpu.matmul %438, %439, %cst_296 {dimension_numbers = #tpu.dot_dimension_numbers<[1], [1], [0], [0], [0, 0, 1, 0], [], []>} : vector<10x16xbf16>, vector<10x16xbf16>, vector<10x10xf32> -> vector<10x10xf32>
    %cst_297 = arith.constant 2.500000e-01 : f32
    %441 = vector.broadcast %cst_297 : f32 to vector<10x10xf32>
    %442 = arith.mulf %440, %441 : vector<10x10xf32>
    %443 = arith.addf %442, %23 : vector<10x10xf32>
    %cst_298 = arith.constant dense<0xFF800000> : vector<10xf32>
    %444 = vector.multi_reduction <maximumf>, %443, %cst_298 [1] : vector<10x10xf32> to vector<10xf32>
    %445 = vector.shape_cast %444 : vector<10xf32> to vector<10x1xf32>
    %446 = vector.broadcast %445 : vector<10x1xf32> to vector<10x10xf32>
    %447 = arith.subf %443, %446 : vector<10x10xf32>
    %448 = math.exp %447 : vector<10x10xf32>
    %cst_299 = arith.constant dense<0.000000e+00> : vector<10xf32>
    %449 = vector.multi_reduction <add>, %448, %cst_299 [1] : vector<10x10xf32> to vector<10xf32>
    %450 = vector.shape_cast %449 : vector<10xf32> to vector<10x1xf32>
    %451 = tpu.reciprocal %450 {approx = true} : vector<10x1xf32> -> vector<10x1xf32>
    %452 = vector.broadcast %451 : vector<10x1xf32> to vector<10x10xf32>
    %453 = arith.mulf %448, %452 : vector<10x10xf32>
    %454 = arith.truncf %453 : vector<10x10xf32> to vector<10x10xbf16>
    %455 = arith.truncf %437 : vector<10x16xf32> to vector<10x16xbf16>
    %cst_300 = arith.constant dense<0.000000e+00> : vector<10x16xf32>
    %456 = tpu.matmul %454, %455, %cst_300 {dimension_numbers = #tpu.dot_dimension_numbers<[1], [0], [0], [1], [0, 0, 1, 1], [], []>} : vector<10x10xbf16>, vector<10x16xbf16>, vector<10x16xf32> -> vector<10x16xf32>
    %c1_301 = arith.constant 1 : index
    %c2_302 = arith.constant 2 : index
    %c0_303 = arith.constant 0 : index
    %c0_304 = arith.constant 0 : index
    %457 = vector.load %arg11[%c1_301, %c2_302, %c0_303, %c0_304] : memref<2x4x16x64xbf16, #tpu.memory_space<vmem>>, vector<1x1x16x64xbf16>
    %458 = vector.shape_cast %457 : vector<1x1x16x64xbf16> to vector<16x64xbf16>
    %459 = arith.truncf %456 : vector<10x16xf32> to vector<10x16xbf16>
    %cst_305 = arith.constant dense<0.000000e+00> : vector<10x64xf32>
    %460 = tpu.matmul %459, %458, %cst_305 {dimension_numbers = #tpu.dot_dimension_numbers<[1], [0], [0], [1], [0, 0, 1, 1], [], []>} : vector<10x16xbf16>, vector<16x64xbf16>, vector<10x64xf32> -> vector<10x64xf32>
    %c1_306 = arith.constant 1 : index
    %c3_307 = arith.constant 3 : index
    %c0_308 = arith.constant 0 : index
    %c0_309 = arith.constant 0 : index
    %461 = vector.load %arg5[%c1_306, %c3_307, %c0_308, %c0_309] : memref<2x4x64x16xbf16, #tpu.memory_space<vmem>>, vector<1x1x64x16xbf16>
    %462 = vector.shape_cast %461 : vector<1x1x64x16xbf16> to vector<64x16xbf16>
    %463 = arith.truncf %319 : vector<10x64xf32> to vector<10x64xbf16>
    %cst_310 = arith.constant dense<0.000000e+00> : vector<10x16xf32>
    %464 = tpu.matmul %463, %462, %cst_310 {dimension_numbers = #tpu.dot_dimension_numbers<[1], [0], [0], [1], [0, 0, 1, 1], [], []>} : vector<10x64xbf16>, vector<64x16xbf16>, vector<10x16xf32> -> vector<10x16xf32>
    %c1_311 = arith.constant 1 : index
    %c3_312 = arith.constant 3 : index
    %c0_313 = arith.constant 0 : index
    %c0_314 = arith.constant 0 : index
    %465 = vector.load %arg8[%c1_311, %c3_312, %c0_313, %c0_314] : memref<2x4x1x16xf32, #tpu.memory_space<vmem>>, vector<1x1x1x16xf32>
    %466 = vector.shape_cast %465 : vector<1x1x1x16xf32> to vector<1x16xf32>
    %467 = vector.broadcast %466 : vector<1x16xf32> to vector<10x16xf32>
    %468 = arith.addf %464, %467 : vector<10x16xf32>
    %c1_315 = arith.constant 1 : index
    %c3_316 = arith.constant 3 : index
    %c0_317 = arith.constant 0 : index
    %c0_318 = arith.constant 0 : index
    %469 = vector.load %arg6[%c1_315, %c3_316, %c0_317, %c0_318] : memref<2x4x64x16xbf16, #tpu.memory_space<vmem>>, vector<1x1x64x16xbf16>
    %470 = vector.shape_cast %469 : vector<1x1x64x16xbf16> to vector<64x16xbf16>
    %471 = arith.truncf %319 : vector<10x64xf32> to vector<10x64xbf16>
    %cst_319 = arith.constant dense<0.000000e+00> : vector<10x16xf32>
    %472 = tpu.matmul %471, %470, %cst_319 {dimension_numbers = #tpu.dot_dimension_numbers<[1], [0], [0], [1], [0, 0, 1, 1], [], []>} : vector<10x64xbf16>, vector<64x16xbf16>, vector<10x16xf32> -> vector<10x16xf32>
    %c1_320 = arith.constant 1 : index
    %c3_321 = arith.constant 3 : index
    %c0_322 = arith.constant 0 : index
    %c0_323 = arith.constant 0 : index
    %473 = vector.load %arg9[%c1_320, %c3_321, %c0_322, %c0_323] : memref<2x4x1x16xf32, #tpu.memory_space<vmem>>, vector<1x1x1x16xf32>
    %474 = vector.shape_cast %473 : vector<1x1x1x16xf32> to vector<1x16xf32>
    %475 = vector.broadcast %474 : vector<1x16xf32> to vector<10x16xf32>
    %476 = arith.addf %472, %475 : vector<10x16xf32>
    %c1_324 = arith.constant 1 : index
    %c3_325 = arith.constant 3 : index
    %c0_326 = arith.constant 0 : index
    %c0_327 = arith.constant 0 : index
    %477 = vector.load %arg7[%c1_324, %c3_325, %c0_326, %c0_327] : memref<2x4x64x16xbf16, #tpu.memory_space<vmem>>, vector<1x1x64x16xbf16>
    %478 = vector.shape_cast %477 : vector<1x1x64x16xbf16> to vector<64x16xbf16>
    %479 = arith.truncf %319 : vector<10x64xf32> to vector<10x64xbf16>
    %cst_328 = arith.constant dense<0.000000e+00> : vector<10x16xf32>
    %480 = tpu.matmul %479, %478, %cst_328 {dimension_numbers = #tpu.dot_dimension_numbers<[1], [0], [0], [1], [0, 0, 1, 1], [], []>} : vector<10x64xbf16>, vector<64x16xbf16>, vector<10x16xf32> -> vector<10x16xf32>
    %c1_329 = arith.constant 1 : index
    %c3_330 = arith.constant 3 : index
    %c0_331 = arith.constant 0 : index
    %c0_332 = arith.constant 0 : index
    %481 = vector.load %arg10[%c1_329, %c3_330, %c0_331, %c0_332] : memref<2x4x1x16xf32, #tpu.memory_space<vmem>>, vector<1x1x1x16xf32>
    %482 = vector.shape_cast %481 : vector<1x1x1x16xf32> to vector<1x16xf32>
    %483 = vector.broadcast %482 : vector<1x16xf32> to vector<10x16xf32>
    %484 = arith.addf %480, %483 : vector<10x16xf32>
    %485 = arith.truncf %468 : vector<10x16xf32> to vector<10x16xbf16>
    %486 = arith.truncf %476 : vector<10x16xf32> to vector<10x16xbf16>
    %cst_333 = arith.constant dense<0.000000e+00> : vector<10x10xf32>
    %487 = tpu.matmul %485, %486, %cst_333 {dimension_numbers = #tpu.dot_dimension_numbers<[1], [1], [0], [0], [0, 0, 1, 0], [], []>} : vector<10x16xbf16>, vector<10x16xbf16>, vector<10x10xf32> -> vector<10x10xf32>
    %cst_334 = arith.constant 2.500000e-01 : f32
    %488 = vector.broadcast %cst_334 : f32 to vector<10x10xf32>
    %489 = arith.mulf %487, %488 : vector<10x10xf32>
    %490 = arith.addf %489, %23 : vector<10x10xf32>
    %cst_335 = arith.constant dense<0xFF800000> : vector<10xf32>
    %491 = vector.multi_reduction <maximumf>, %490, %cst_335 [1] : vector<10x10xf32> to vector<10xf32>
    %492 = vector.shape_cast %491 : vector<10xf32> to vector<10x1xf32>
    %493 = vector.broadcast %492 : vector<10x1xf32> to vector<10x10xf32>
    %494 = arith.subf %490, %493 : vector<10x10xf32>
    %495 = math.exp %494 : vector<10x10xf32>
    %cst_336 = arith.constant dense<0.000000e+00> : vector<10xf32>
    %496 = vector.multi_reduction <add>, %495, %cst_336 [1] : vector<10x10xf32> to vector<10xf32>
    %497 = vector.shape_cast %496 : vector<10xf32> to vector<10x1xf32>
    %498 = tpu.reciprocal %497 {approx = true} : vector<10x1xf32> -> vector<10x1xf32>
    %499 = vector.broadcast %498 : vector<10x1xf32> to vector<10x10xf32>
    %500 = arith.mulf %495, %499 : vector<10x10xf32>
    %501 = arith.truncf %500 : vector<10x10xf32> to vector<10x10xbf16>
    %502 = arith.truncf %484 : vector<10x16xf32> to vector<10x16xbf16>
    %cst_337 = arith.constant dense<0.000000e+00> : vector<10x16xf32>
    %503 = tpu.matmul %501, %502, %cst_337 {dimension_numbers = #tpu.dot_dimension_numbers<[1], [0], [0], [1], [0, 0, 1, 1], [], []>} : vector<10x10xbf16>, vector<10x16xbf16>, vector<10x16xf32> -> vector<10x16xf32>
    %c1_338 = arith.constant 1 : index
    %c3_339 = arith.constant 3 : index
    %c0_340 = arith.constant 0 : index
    %c0_341 = arith.constant 0 : index
    %504 = vector.load %arg11[%c1_338, %c3_339, %c0_340, %c0_341] : memref<2x4x16x64xbf16, #tpu.memory_space<vmem>>, vector<1x1x16x64xbf16>
    %505 = vector.shape_cast %504 : vector<1x1x16x64xbf16> to vector<16x64xbf16>
    %506 = arith.truncf %503 : vector<10x16xf32> to vector<10x16xbf16>
    %cst_342 = arith.constant dense<0.000000e+00> : vector<10x64xf32>
    %507 = tpu.matmul %506, %505, %cst_342 {dimension_numbers = #tpu.dot_dimension_numbers<[1], [0], [0], [1], [0, 0, 1, 1], [], []>} : vector<10x16xbf16>, vector<16x64xbf16>, vector<10x64xf32> -> vector<10x64xf32>
    %508 = arith.addf %366, %413 : vector<10x64xf32>
    %509 = arith.addf %460, %507 : vector<10x64xf32>
    %510 = arith.addf %508, %509 : vector<10x64xf32>
    %511 = arith.addf %297, %510 : vector<10x64xf32>
    %512 = vector.extract_strided_slice %31 {offsets = [1, 0], sizes = [1, 64], strides = [1, 1]} : vector<2x64xf32> to vector<1x64xf32>
    %513 = vector.broadcast %512 : vector<1x64xf32> to vector<10x64xf32>
    %514 = arith.addf %511, %513 : vector<10x64xf32>
    %515 = vector.extract_strided_slice %32 {offsets = [1, 0], sizes = [1, 64], strides = [1, 1]} : vector<2x64xf32> to vector<1x64xf32>
    %516 = vector.extract_strided_slice %33 {offsets = [1, 0], sizes = [1, 64], strides = [1, 1]} : vector<2x64xf32> to vector<1x64xf32>
    %cst_343 = arith.constant dense<0.000000e+00> : vector<10xf32>
    %517 = vector.multi_reduction <add>, %514, %cst_343 [1] : vector<10x64xf32> to vector<10xf32>
    %518 = vector.shape_cast %517 : vector<10xf32> to vector<10x1xf32>
    %cst_344 = arith.constant 6.400000e+01 : f32
    %519 = vector.broadcast %cst_344 : f32 to vector<10x1xf32>
    %520 = arith.divf %518, %519 : vector<10x1xf32>
    %521 = vector.broadcast %520 : vector<10x1xf32> to vector<10x64xf32>
    %522 = arith.subf %514, %521 : vector<10x64xf32>
    %523 = arith.mulf %522, %522 : vector<10x64xf32>
    %cst_345 = arith.constant dense<0.000000e+00> : vector<10xf32>
    %524 = vector.multi_reduction <add>, %523, %cst_345 [1] : vector<10x64xf32> to vector<10xf32>
    %525 = vector.shape_cast %524 : vector<10xf32> to vector<10x1xf32>
    %cst_346 = arith.constant 6.400000e+01 : f32
    %526 = vector.broadcast %cst_346 : f32 to vector<10x1xf32>
    %527 = arith.divf %525, %526 : vector<10x1xf32>
    %cst_347 = arith.constant 9.99999997E-7 : f32
    %528 = vector.broadcast %cst_347 : f32 to vector<10x1xf32>
    %529 = arith.addf %527, %528 : vector<10x1xf32>
    %530 = math.rsqrt %529 : vector<10x1xf32>
    %531 = vector.broadcast %530 : vector<10x1xf32> to vector<10x64xf32>
    %532 = arith.mulf %522, %531 : vector<10x64xf32>
    %533 = vector.broadcast %515 : vector<1x64xf32> to vector<10x64xf32>
    %534 = arith.mulf %532, %533 : vector<10x64xf32>
    %535 = vector.broadcast %516 : vector<1x64xf32> to vector<10x64xf32>
    %536 = arith.addf %534, %535 : vector<10x64xf32>
    %c1_348 = arith.constant 1 : index
    %c0_349 = arith.constant 0 : index
    %c0_350 = arith.constant 0 : index
    %537 = vector.load %arg15[%c1_348, %c0_349, %c0_350] : memref<2x64x128xbf16, #tpu.memory_space<vmem>>, vector<1x64x128xbf16>
    %538 = vector.shape_cast %537 : vector<1x64x128xbf16> to vector<64x128xbf16>
    %539 = arith.truncf %536 : vector<10x64xf32> to vector<10x64xbf16>
    %cst_351 = arith.constant dense<0.000000e+00> : vector<10x128xf32>
    %540 = tpu.matmul %539, %538, %cst_351 {dimension_numbers = #tpu.dot_dimension_numbers<[1], [0], [0], [1], [0, 0, 1, 1], [], []>} : vector<10x64xbf16>, vector<64x128xbf16>, vector<10x128xf32> -> vector<10x128xf32>
    %541 = vector.extract_strided_slice %34 {offsets = [1, 0], sizes = [1, 128], strides = [1, 1]} : vector<2x128xf32> to vector<1x128xf32>
    %542 = vector.broadcast %541 : vector<1x128xf32> to vector<10x128xf32>
    %543 = arith.addf %540, %542 : vector<10x128xf32>
    %cst_352 = arith.constant 5.000000e-01 : f32
    %544 = vector.broadcast %cst_352 : f32 to vector<10x128xf32>
    %545 = arith.mulf %544, %543 : vector<10x128xf32>
    %cst_353 = arith.constant 0.707106769 : f32
    %546 = vector.broadcast %cst_353 : f32 to vector<10x128xf32>
    %547 = arith.mulf %543, %546 : vector<10x128xf32>
    %548 = math.erf %547 : vector<10x128xf32>
    %cst_354 = arith.constant 1.000000e+00 : f32
    %549 = vector.broadcast %cst_354 : f32 to vector<10x128xf32>
    %550 = arith.addf %549, %548 : vector<10x128xf32>
    %551 = arith.mulf %545, %550 : vector<10x128xf32>
    %c1_355 = arith.constant 1 : index
    %c0_356 = arith.constant 0 : index
    %c0_357 = arith.constant 0 : index
    %552 = vector.load %arg17[%c1_355, %c0_356, %c0_357] : memref<2x128x64xbf16, #tpu.memory_space<vmem>>, vector<1x128x64xbf16>
    %553 = vector.shape_cast %552 : vector<1x128x64xbf16> to vector<128x64xbf16>
    %554 = arith.truncf %551 : vector<10x128xf32> to vector<10x128xbf16>
    %cst_358 = arith.constant dense<0.000000e+00> : vector<10x64xf32>
    %555 = tpu.matmul %554, %553, %cst_358 {dimension_numbers = #tpu.dot_dimension_numbers<[1], [0], [0], [1], [0, 0, 1, 1], [], []>} : vector<10x128xbf16>, vector<128x64xbf16>, vector<10x64xf32> -> vector<10x64xf32>
    %556 = vector.extract_strided_slice %35 {offsets = [1, 0], sizes = [1, 64], strides = [1, 1]} : vector<2x64xf32> to vector<1x64xf32>
    %557 = vector.broadcast %556 : vector<1x64xf32> to vector<10x64xf32>
    %558 = arith.addf %555, %557 : vector<10x64xf32>
    %559 = arith.addf %514, %558 : vector<10x64xf32>
    %560 = vector.extract_strided_slice %559 {offsets = [0, 0], sizes = [8, 64], strides = [1, 1]} : vector<10x64xf32> to vector<8x64xf32>
    %c0_359 = arith.constant 0 : index
    %c0_360 = arith.constant 0 : index
    %561 = vector.load %arg19[%c0_359, %c0_360] : memref<1x64xf32, #tpu.memory_space<vmem>>, vector<1x64xf32>
    %c0_361 = arith.constant 0 : index
    %c0_362 = arith.constant 0 : index
    %562 = vector.load %arg20[%c0_361, %c0_362] : memref<1x64xf32, #tpu.memory_space<vmem>>, vector<1x64xf32>
    %cst_363 = arith.constant dense<0.000000e+00> : vector<8xf32>
    %563 = vector.multi_reduction <add>, %560, %cst_363 [1] : vector<8x64xf32> to vector<8xf32>
    %564 = vector.shape_cast %563 : vector<8xf32> to vector<8x1xf32>
    %cst_364 = arith.constant 6.400000e+01 : f32
    %565 = vector.broadcast %cst_364 : f32 to vector<8x1xf32>
    %566 = arith.divf %564, %565 : vector<8x1xf32>
    %567 = vector.broadcast %566 : vector<8x1xf32> to vector<8x64xf32>
    %568 = arith.subf %560, %567 : vector<8x64xf32>
    %569 = arith.mulf %568, %568 : vector<8x64xf32>
    %cst_365 = arith.constant dense<0.000000e+00> : vector<8xf32>
    %570 = vector.multi_reduction <add>, %569, %cst_365 [1] : vector<8x64xf32> to vector<8xf32>
    %571 = vector.shape_cast %570 : vector<8xf32> to vector<8x1xf32>
    %cst_366 = arith.constant 6.400000e+01 : f32
    %572 = vector.broadcast %cst_366 : f32 to vector<8x1xf32>
    %573 = arith.divf %571, %572 : vector<8x1xf32>
    %cst_367 = arith.constant 9.99999997E-7 : f32
    %574 = vector.broadcast %cst_367 : f32 to vector<8x1xf32>
    %575 = arith.addf %573, %574 : vector<8x1xf32>
    %576 = math.rsqrt %575 : vector<8x1xf32>
    %577 = vector.broadcast %576 : vector<8x1xf32> to vector<8x64xf32>
    %578 = arith.mulf %568, %577 : vector<8x64xf32>
    %579 = vector.broadcast %561 : vector<1x64xf32> to vector<8x64xf32>
    %580 = arith.mulf %578, %579 : vector<8x64xf32>
    %581 = vector.broadcast %562 : vector<1x64xf32> to vector<8x64xf32>
    %582 = arith.addf %580, %581 : vector<8x64xf32>
    %c0_368 = arith.constant 0 : index
    %c0_369 = arith.constant 0 : index
    %583 = vector.load %arg21[%c0_368, %c0_369] : memref<64x128xbf16, #tpu.memory_space<vmem>>, vector<64x128xbf16>
    %584 = arith.truncf %582 : vector<8x64xf32> to vector<8x64xbf16>
    %cst_370 = arith.constant dense<0.000000e+00> : vector<8x128xf32>
    %585 = tpu.matmul %584, %583, %cst_370 {dimension_numbers = #tpu.dot_dimension_numbers<[1], [0], [0], [1], [0, 0, 1, 1], [], []>} : vector<8x64xbf16>, vector<64x128xbf16>, vector<8x128xf32> -> vector<8x128xf32>
    %c0_371 = arith.constant 0 : index
    %c0_372 = arith.constant 0 : index
    %586 = vector.load %arg22[%c0_371, %c0_372] : memref<1x128xf32, #tpu.memory_space<vmem>>, vector<1x128xf32>
    %587 = vector.broadcast %586 : vector<1x128xf32> to vector<8x128xf32>
    %588 = arith.addf %585, %587 : vector<8x128xf32>
    %c0_373 = arith.constant 0 : index
    %c0_374 = arith.constant 0 : index
    %589 = vector.load %arg23[%c0_373, %c0_374] : memref<8x128xf32, #tpu.memory_space<vmem>>, vector<8x128xf32>
    tpu.vector_store %arg23[%c0_373, %c0_374], %588 {strides = array<i32>} : memref<8x128xf32, #tpu.memory_space<vmem>>, vector<8x128xf32>,
    return
  }
}

</mosaic_0001>

<llo_original>
// kernel: vit_forward.1
$region0: #{vit_forward.1}
  #allocation0 [shape = 'u32[]', space=smem, size = 0x4, offset = 0x4, fixed_abs, tag = 'smem constant byte address 0x4 - core index']
  #allocation1 [shape = 'u32[144,128]{1,0:T(1,128)}', space=vmem, size = 0x12000, scoped, tag = 'internal scratch']
  %s0 = inlined_call_operand.vmem [shape: bf16[10,768], index: 0, kind: input, shape index: {}]
  %s1 = inlined_call_operand.vmem [shape: bf16[768,64], index: 1, kind: input, shape index: {}]
  %s2 = inlined_call_operand.vmem [shape: f32[10,64], index: 2, kind: input, shape index: {}]
  %s3 = inlined_call_operand.vmem [shape: f32[2,64], index: 3, kind: input, shape index: {}]
  %s4 = inlined_call_operand.vmem [shape: f32[2,64], index: 4, kind: input, shape index: {}]
  %s5 = inlined_call_operand.vmem [shape: bf16[2,4,64,16], index: 5, kind: input, shape index: {}]
  %s6 = inlined_call_operand.vmem [shape: bf16[2,4,64,16], index: 6, kind: input, shape index: {}]
  %s7 = inlined_call_operand.vmem [shape: bf16[2,4,64,16], index: 7, kind: input, shape index: {}]
  %s8 = inlined_call_operand.vmem [shape: f32[2,4,1,16], index: 8, kind: input, shape index: {}]
  %s9 = inlined_call_operand.vmem [shape: f32[2,4,1,16], index: 9, kind: input, shape index: {}]
  %s10 = inlined_call_operand.vmem [shape: f32[2,4,1,16], index: 10, kind: input, shape index: {}]
  %s11 = inlined_call_operand.vmem [shape: bf16[2,4,16,64], index: 11, kind: input, shape index: {}]
  %s12 = inlined_call_operand.vmem [shape: f32[2,64], index: 12, kind: input, shape index: {}]
  %s13 = inlined_call_operand.vmem [shape: f32[2,64], index: 13, kind: input, shape index: {}]
  %s14 = inlined_call_operand.vmem [shape: f32[2,64], index: 14, kind: input, shape index: {}]
  %s15 = inlined_call_operand.vmem [shape: bf16[2,64,128], index: 15, kind: input, shape index: {}]
  %s16 = inlined_call_operand.vmem [shape: f32[2,128], index: 16, kind: input, shape index: {}]
  %s17 = inlined_call_operand.vmem [shape: bf16[2,128,64], index: 17, kind: input, shape index: {}]
  %s18 = inlined_call_operand.vmem [shape: f32[2,64], index: 18, kind: input, shape index: {}]
  %s19 = inlined_call_operand.vmem [shape: f32[1,64], index: 19, kind: input, shape index: {}]
  %s20 = inlined_call_operand.vmem [shape: f32[1,64], index: 20, kind: input, shape index: {}]
  %s21 = inlined_call_operand.vmem [shape: bf16[64,128], index: 21, kind: input, shape index: {}]
  %s22 = inlined_call_operand.vmem [shape: f32[1,128], index: 22, kind: input, shape index: {}]
  %s23 = inlined_call_operand.vmem [shape: f32[8,128], index: 23, kind: output, shape index: {}]
  %s24 = sld [smem:[#allocation0]]
  $region102: #{vit_forward.1} parent=0
    _
  %s26 = ssub.s32 1, %s24
  %s27 = scalar_select 0, %s26, %s24
  // Predicated region
  $region2: #{vit_forward.1} parent=0 // pred_check
    _
  $region3: #{vit_forward.1} parent=0 // pred_check_branch
    %29 = sbr.rel (0) target = $region5
  $region4: #{vit_forward.1} parent=0 // pred_region
    _
  $region5: #{vit_forward.1} parent=0 // pred_fallthru
    _
  // Predicated region
  $region6: #{vit_forward.1} parent=0 // pred_check
    _
  $region7: #{vit_forward.1} parent=0 // pred_check_branch
    %31 = sbr.rel (0) target = $region9
  $region8: #{vit_forward.1} parent=0 // pred_region
    _
  $region9: #{vit_forward.1} parent=0 // pred_fallthru
    _
  // Predicated region
  $region10: #{vit_forward.1} parent=0 // pred_check
    _
  $region11: #{vit_forward.1} parent=0 // pred_check_branch
    %33 = sbr.rel (0) target = $region13
  $region12: #{vit_forward.1} parent=0 // pred_region
    _
  $region13: #{vit_forward.1} parent=0 // pred_fallthru
    _
  // Predicated region
  $region14: #{vit_forward.1} parent=0 // pred_check
    _
  $region15: #{vit_forward.1} parent=0 // pred_check_branch
    %35 = sbr.rel (0) target = $region17
  $region16: #{vit_forward.1} parent=0 // pred_region
    _
  $region17: #{vit_forward.1} parent=0 // pred_fallthru
    _
  // Predicated region
  $region18: #{vit_forward.1} parent=0 // pred_check
    _
  $region19: #{vit_forward.1} parent=0 // pred_check_branch
    %37 = sbr.rel (0) target = $region21
  $region20: #{vit_forward.1} parent=0 // pred_region
    _
  $region21: #{vit_forward.1} parent=0 // pred_fallthru
    _
  // Predicated region
  $region22: #{vit_forward.1} parent=0 // pred_check
    _
  $region23: #{vit_forward.1} parent=0 // pred_check_branch
    %39 = sbr.rel (0) target = $region25
  $region24: #{vit_forward.1} parent=0 // pred_region
    _
  $region25: #{vit_forward.1} parent=0 // pred_fallthru
    _
  // Predicated region
  $region26: #{vit_forward.1} parent=0 // pred_check
    _
  $region27: #{vit_forward.1} parent=0 // pred_check_branch
    %41 = sbr.rel (0) target = $region29
  $region28: #{vit_forward.1} parent=0 // pred_region
    _
  $region29: #{vit_forward.1} parent=0 // pred_fallthru
    _
  // Predicated region
  $region30: #{vit_forward.1} parent=0 // pred_check
    _
  $region31: #{vit_forward.1} parent=0 // pred_check_branch
    %43 = sbr.rel (0) target = $region33
  $region32: #{vit_forward.1} parent=0 // pred_region
    _
  $region33: #{vit_forward.1} parent=0 // pred_fallthru
    _
  // Predicated region
  $region34: #{vit_forward.1} parent=0 // pred_check
    _
  $region35: #{vit_forward.1} parent=0 // pred_check_branch
    %45 = sbr.rel (0) target = $region37
  $region36: #{vit_forward.1} parent=0 // pred_region
    _
  $region37: #{vit_forward.1} parent=0 // pred_fallthru
    _
  // Predicated region
  $region38: #{vit_forward.1} parent=0 // pred_check
    _
  $region39: #{vit_forward.1} parent=0 // pred_check_branch
    %47 = sbr.rel (0) target = $region41
  $region40: #{vit_forward.1} parent=0 // pred_region
    _
  $region41: #{vit_forward.1} parent=0 // pred_fallthru
    _
  // Predicated region
  $region42: #{vit_forward.1} parent=0 // pred_check
    _
  $region43: #{vit_forward.1} parent=0 // pred_check_branch
    %49 = sbr.rel (0) target = $region45
  $region44: #{vit_forward.1} parent=0 // pred_region
    _
  $region45: #{vit_forward.1} parent=0 // pred_fallthru
    _
  // Predicated region
  $region46: #{vit_forward.1} parent=0 // pred_check
    _
  $region47: #{vit_forward.1} parent=0 // pred_check_branch
    %51 = sbr.rel (0) target = $region49
  $region48: #{vit_forward.1} parent=0 // pred_region
    _
  $region49: #{vit_forward.1} parent=0 // pred_fallthru
    _
  // Predicated region
  $region50: #{vit_forward.1} parent=0 // pred_check
    _
  $region51: #{vit_forward.1} parent=0 // pred_check_branch
    %53 = sbr.rel (0) target = $region53
  $region52: #{vit_forward.1} parent=0 // pred_region
    _
  $region53: #{vit_forward.1} parent=0 // pred_fallthru
    _
  // Predicated region
  $region54: #{vit_forward.1} parent=0 // pred_check
    _
  $region55: #{vit_forward.1} parent=0 // pred_check_branch
    %55 = sbr.rel (0) target = $region57
  $region56: #{vit_forward.1} parent=0 // pred_region
    _
  $region57: #{vit_forward.1} parent=0 // pred_fallthru
    _
  // Predicated region
  $region58: #{vit_forward.1} parent=0 // pred_check
    _
  $region59: #{vit_forward.1} parent=0 // pred_check_branch
    %57 = sbr.rel (0) target = $region61
  $region60: #{vit_forward.1} parent=0 // pred_region
    _
  $region61: #{vit_forward.1} parent=0 // pred_fallthru
    _
  // Predicated region
  $region62: #{vit_forward.1} parent=0 // pred_check
    _
  $region63: #{vit_forward.1} parent=0 // pred_check_branch
    %59 = sbr.rel (0) target = $region65
  $region64: #{vit_forward.1} parent=0 // pred_region
    _
  $region65: #{vit_forward.1} parent=0 // pred_fallthru
    _
  // Predicated region
  $region66: #{vit_forward.1} parent=0 // pred_check
    _
  $region67: #{vit_forward.1} parent=0 // pred_check_branch
    %61 = sbr.rel (0) target = $region69
  $region68: #{vit_forward.1} parent=0 // pred_region
    _
  $region69: #{vit_forward.1} parent=0 // pred_fallthru
    _
  // Predicated region
  $region70: #{vit_forward.1} parent=0 // pred_check
    _
  $region71: #{vit_forward.1} parent=0 // pred_check_branch
    %63 = sbr.rel (0) target = $region73
  $region72: #{vit_forward.1} parent=0 // pred_region
    _
  $region73: #{vit_forward.1} parent=0 // pred_fallthru
    _
  // Predicated region
  $region74: #{vit_forward.1} parent=0 // pred_check
    _
  $region75: #{vit_forward.1} parent=0 // pred_check_branch
    %65 = sbr.rel (0) target = $region77
  $region76: #{vit_forward.1} parent=0 // pred_region
    _
  $region77: #{vit_forward.1} parent=0 // pred_fallthru
    _
  // Predicated region
  $region78: #{vit_forward.1} parent=0 // pred_check
    _
  $region79: #{vit_forward.1} parent=0 // pred_check_branch
    %67 = sbr.rel (0) target = $region81
  $region80: #{vit_forward.1} parent=0 // pred_region
    _
  $region81: #{vit_forward.1} parent=0 // pred_fallthru
    _
  // Predicated region
  $region82: #{vit_forward.1} parent=0 // pred_check
    _
  $region83: #{vit_forward.1} parent=0 // pred_check_branch
    %69 = sbr.rel (0) target = $region85
  $region84: #{vit_forward.1} parent=0 // pred_region
    _
  $region85: #{vit_forward.1} parent=0 // pred_fallthru
    _
  // Predicated region
  $region86: #{vit_forward.1} parent=0 // pred_check
    _
  $region87: #{vit_forward.1} parent=0 // pred_check_branch
    %71 = sbr.rel (0) target = $region89
  $region88: #{vit_forward.1} parent=0 // pred_region
    _
  $region89: #{vit_forward.1} parent=0 // pred_fallthru
    _
  // Predicated region
  $region90: #{vit_forward.1} parent=0 // pred_check
    _
  $region91: #{vit_forward.1} parent=0 // pred_check_branch
    %73 = sbr.rel (0) target = $region93
  $region92: #{vit_forward.1} parent=0 // pred_region
    _
  $region93: #{vit_forward.1} parent=0 // pred_fallthru
    _
  %v75 = vlaneseq
  %v76 = vshrl.u32 %v75, 7
  %v77 = vadd.s32 %v76, 8
  %vm78 = vcmp.ge.s32.totalorder %v76, 6
  %vm79 = vcmp.ge.s32.totalorder %v77, 6
  %v80 = vsel %vm78, 1, 0
  %v81 = vsel %vm79, 1, 0
  %vm82 = vcmp.lt.s32.totalorder %v76, 2
  %vm83 = vcmp.lt.s32.totalorder %v77, 2
  %v84 = vsel %vm82, %v76, %v80
  %v85 = vsel %vm83, %v77, %v81
  %v86 = vlaneseq
  %v87 = vand.u32 %v86, 127
  %vm88 = vcmp.ge.s32.totalorder %v87, 6
  %v89 = vsel %vm88, 1, 0
  %vm90 = vcmp.lt.s32.totalorder %v87, 2
  %v91 = vsel %vm90, %v87, %v89
  %vm92 = vcmp.eq.s32.totalorder %v84, %v91
  %vm93 = vcmp.eq.s32.totalorder %v85, %v91
  %v94 = vsel %vm92, 0.0, -1e+30
  %v95 = vsel %vm93, 0.0, -1e+30
  %v96 = vld [vmem:[%s0] sm:$0xff]
  %v97 = vld [vmem:[%s0 + $0x8] sm:$0xff]
  %v98 = vld [vmem:[%s0 + $0x10] sm:$0xff]
  %v99 = vld [vmem:[%s0 + $0x18] sm:$0x11]
  %v100 = vld [vmem:[%s0 + $0x20] sm:$0x11]
  %v101 = vld [vmem:[%s0 + $0x28] sm:$0x11]
  %v102 = vld [vmem:[%s1] sm:$0xf]
  %v103 = vld [vmem:[%s1 + $0x4] sm:$0xf]
  %v104 = vld [vmem:[%s1 + $0x8] sm:$0xf]
  %v105 = vld [vmem:[%s1 + $0xc] sm:$0xf]
  %v106 = vld [vmem:[%s1 + $0x10] sm:$0xf]
  %v107 = vld [vmem:[%s1 + $0x14] sm:$0xf]
  %v108 = vld [vmem:[%s1 + $0x18] sm:$0xf]
  %v109 = vld [vmem:[%s1 + $0x1c] sm:$0xf]
  %v110 = vld [vmem:[%s1 + $0x20] sm:$0xf]
  %v111 = vld [vmem:[%s1 + $0x24] sm:$0xf]
  %v112 = vld [vmem:[%s1 + $0x28] sm:$0xf]
  %v113 = vld [vmem:[%s1 + $0x2c] sm:$0xf]
  %v114 = vld [vmem:[%s1 + $0x30] sm:$0xf]
  %v115 = vld [vmem:[%s1 + $0x34] sm:$0xf]
  %v116 = vld [vmem:[%s1 + $0x38] sm:$0xf]
  %v117 = vld [vmem:[%s1 + $0x3c] sm:$0xf]
  %v118 = vld [vmem:[%s1 + $0x40] sm:$0xf]
  %v119 = vld [vmem:[%s1 + $0x44] sm:$0xf]
  %v120 = vld [vmem:[%s1 + $0x48] sm:$0xf]
  %v121 = vld [vmem:[%s1 + $0x4c] sm:$0xf]
  %v122 = vld [vmem:[%s1 + $0x50] sm:$0xf]
  %v123 = vld [vmem:[%s1 + $0x54] sm:$0xf]
  %v124 = vld [vmem:[%s1 + $0x58] sm:$0xf]
  %v125 = vld [vmem:[%s1 + $0x5c] sm:$0xf]
  %v126 = vld [vmem:[%s1 + $0x60] sm:$0xf]
  %v127 = vld [vmem:[%s1 + $0x64] sm:$0xf]
  %v128 = vld [vmem:[%s1 + $0x68] sm:$0xf]
  %v129 = vld [vmem:[%s1 + $0x6c] sm:$0xf]
  %v130 = vld [vmem:[%s1 + $0x70] sm:$0xf]
  %v131 = vld [vmem:[%s1 + $0x74] sm:$0xf]
  %v132 = vld [vmem:[%s1 + $0x78] sm:$0xf]
  %v133 = vld [vmem:[%s1 + $0x7c] sm:$0xf]
  %v134 = vld [vmem:[%s1 + $0x80] sm:$0xf]
  %v135 = vld [vmem:[%s1 + $0x84] sm:$0xf]
  %v136 = vld [vmem:[%s1 + $0x88] sm:$0xf]
  %v137 = vld [vmem:[%s1 + $0x8c] sm:$0xf]
  %v138 = vld [vmem:[%s1 + $0x90] sm:$0xf]
  %v139 = vld [vmem:[%s1 + $0x94] sm:$0xf]
  %v140 = vld [vmem:[%s1 + $0x98] sm:$0xf]
  %v141 = vld [vmem:[%s1 + $0x9c] sm:$0xf]
  %v142 = vld [vmem:[%s1 + $0xa0] sm:$0xf]
  %v143 = vld [vmem:[%s1 + $0xa4] sm:$0xf]
  %v144 = vld [vmem:[%s1 + $0xa8] sm:$0xf]
  %v145 = vld [vmem:[%s1 + $0xac] sm:$0xf]
  %v146 = vld [vmem:[%s1 + $0xb0] sm:$0xf]
  %v147 = vld [vmem:[%s1 + $0xb4] sm:$0xf]
  %v148 = vld [vmem:[%s1 + $0xb8] sm:$0xf]
  %v149 = vld [vmem:[%s1 + $0xbc] sm:$0xf]
  %v150 = vld [vmem:[%s1 + $0xc0] sm:$0xf]
  %v151 = vld [vmem:[%s1 + $0xc4] sm:$0xf]
  %v152 = vld [vmem:[%s1 + $0xc8] sm:$0xf]
  %v153 = vld [vmem:[%s1 + $0xcc] sm:$0xf]
  %v154 = vld [vmem:[%s1 + $0xd0] sm:$0xf]
  %v155 = vld [vmem:[%s1 + $0xd4] sm:$0xf]
  %v156 = vld [vmem:[%s1 + $0xd8] sm:$0xf]
  %v157 = vld [vmem:[%s1 + $0xdc] sm:$0xf]
  %v158 = vld [vmem:[%s1 + $0xe0] sm:$0xf]
  %v159 = vld [vmem:[%s1 + $0xe4] sm:$0xf]
  %v160 = vld [vmem:[%s1 + $0xe8] sm:$0xf]
  %v161 = vld [vmem:[%s1 + $0xec] sm:$0xf]
  %v162 = vld [vmem:[%s1 + $0xf0] sm:$0xf]
  %v163 = vld [vmem:[%s1 + $0xf4] sm:$0xf]
  %v164 = vld [vmem:[%s1 + $0xf8] sm:$0xf]
  %v165 = vld [vmem:[%s1 + $0xfc] sm:$0xf]
  %v166 = vld [vmem:[%s1 + $0x100] sm:$0xf]
  %v167 = vld [vmem:[%s1 + $0x104] sm:$0xf]
  %v168 = vld [vmem:[%s1 + $0x108] sm:$0xf]
  %v169 = vld [vmem:[%s1 + $0x10c] sm:$0xf]
  %v170 = vld [vmem:[%s1 + $0x110] sm:$0xf]
  %v171 = vld [vmem:[%s1 + $0x114] sm:$0xf]
  %v172 = vld [vmem:[%s1 + $0x118] sm:$0xf]
  %v173 = vld [vmem:[%s1 + $0x11c] sm:$0xf]
  %v174 = vld [vmem:[%s1 + $0x120] sm:$0xf]
  %v175 = vld [vmem:[%s1 + $0x124] sm:$0xf]
  %v176 = vld [vmem:[%s1 + $0x128] sm:$0xf]
  %v177 = vld [vmem:[%s1 + $0x12c] sm:$0xf]
  %v178 = vld [vmem:[%s1 + $0x130] sm:$0xf]
  %v179 = vld [vmem:[%s1 + $0x134] sm:$0xf]
  %v180 = vld [vmem:[%s1 + $0x138] sm:$0xf]
  %v181 = vld [vmem:[%s1 + $0x13c] sm:$0xf]
  %v182 = vld [vmem:[%s1 + $0x140] sm:$0xf]
  %v183 = vld [vmem:[%s1 + $0x144] sm:$0xf]
  %v184 = vld [vmem:[%s1 + $0x148] sm:$0xf]
  %v185 = vld [vmem:[%s1 + $0x14c] sm:$0xf]
  %v186 = vld [vmem:[%s1 + $0x150] sm:$0xf]
  %v187 = vld [vmem:[%s1 + $0x154] sm:$0xf]
  %v188 = vld [vmem:[%s1 + $0x158] sm:$0xf]
  %v189 = vld [vmem:[%s1 + $0x15c] sm:$0xf]
  %v190 = vld [vmem:[%s1 + $0x160] sm:$0xf]
  %v191 = vld [vmem:[%s1 + $0x164] sm:$0xf]
  %v192 = vld [vmem:[%s1 + $0x168] sm:$0xf]
  %v193 = vld [vmem:[%s1 + $0x16c] sm:$0xf]
  %v194 = vld [vmem:[%s1 + $0x170] sm:$0xf]
  %v195 = vld [vmem:[%s1 + $0x174] sm:$0xf]
  %v196 = vld [vmem:[%s1 + $0x178] sm:$0xf]
  %v197 = vld [vmem:[%s1 + $0x17c] sm:$0xf]
  %v198 = vld [vmem:[%s2] sm:$0xff]
  %v199 = vld [vmem:[%s2 + $0x8] sm:$0x3]
  %v206 = vunpack.c.l.b16 %v96
  %v207 = vunpack.c.h.b16 %v96
  %v208 = vunpack.c.l.b16 %v97
  %v209 = vunpack.c.h.b16 %v97
  %v210 = vunpack.c.l.b16 %v98
  %v211 = vunpack.c.h.b16 %v98
  %v212 = vunpack.c.l.b16 %v99
  %v213 = vunpack.c.h.b16 %v99
  %v214 = vunpack.c.l.b16 %v100
  %v215 = vunpack.c.h.b16 %v100
  %v216 = vunpack.c.l.b16 %v101
  %v217 = vunpack.c.h.b16 %v101
  %v218 = vpack.c.b16 %v212, %v206
  %v219 = vpack.c.b16 %v213, %v207
  %v220 = vpack.c.b16 %v214, %v208
  %v221 = vpack.c.b16 %v215, %v209
  %v222 = vpack.c.b16 %v216, %v210
  %v223 = vpack.c.b16 %v217, %v211
  %v326 = vunpack.c.l.b16 %v102
  %v327 = vunpack.c.l.b16 %v103
  %v328 = vunpack.c.l.b16 %v104
  %v329 = vunpack.c.l.b16 %v105
  %v330 = vunpack.c.l.b16 %v106
  %v331 = vunpack.c.l.b16 %v107
  %v332 = vunpack.c.l.b16 %v108
  %v333 = vunpack.c.l.b16 %v109
  %v334 = vunpack.c.l.b16 %v110
  %v335 = vunpack.c.l.b16 %v111
  %v336 = vunpack.c.l.b16 %v112
  %v337 = vunpack.c.l.b16 %v113
  %v338 = vunpack.c.l.b16 %v114
  %v339 = vunpack.c.l.b16 %v115
  %v340 = vunpack.c.l.b16 %v116
  %v341 = vunpack.c.l.b16 %v117
  %v342 = vunpack.c.l.b16 %v118
  %v343 = vunpack.c.l.b16 %v119
  %v344 = vunpack.c.l.b16 %v120
  %v345 = vunpack.c.l.b16 %v121
  %v346 = vunpack.c.l.b16 %v122
  %v347 = vunpack.c.l.b16 %v123
  %v348 = vunpack.c.l.b16 %v124
  %v349 = vunpack.c.l.b16 %v125
  %v350 = vunpack.c.l.b16 %v126
  %v351 = vunpack.c.l.b16 %v127
  %v352 = vunpack.c.l.b16 %v128
  %v353 = vunpack.c.l.b16 %v129
  %v354 = vunpack.c.l.b16 %v130
  %v355 = vunpack.c.l.b16 %v131
  %v356 = vunpack.c.l.b16 %v132
  %v357 = vunpack.c.l.b16 %v133
  %v358 = vunpack.c.l.b16 %v134
  %v359 = vunpack.c.l.b16 %v135
  %v360 = vunpack.c.l.b16 %v136
  %v361 = vunpack.c.l.b16 %v137
  %v362 = vunpack.c.l.b16 %v138
  %v363 = vunpack.c.l.b16 %v139
  %v364 = vunpack.c.l.b16 %v140
  %v365 = vunpack.c.l.b16 %v141
  %v366 = vunpack.c.l.b16 %v142
  %v367 = vunpack.c.l.b16 %v143
  %v368 = vunpack.c.l.b16 %v144
  %v369 = vunpack.c.l.b16 %v145
  %v370 = vunpack.c.l.b16 %v146
  %v371 = vunpack.c.l.b16 %v147
  %v372 = vunpack.c.l.b16 %v148
  %v373 = vunpack.c.l.b16 %v149
  %v374 = vunpack.c.l.b16 %v150
  %v375 = vunpack.c.l.b16 %v151
  %v376 = vunpack.c.l.b16 %v152
  %v377 = vunpack.c.l.b16 %v153
  %v378 = vunpack.c.l.b16 %v154
  %v379 = vunpack.c.l.b16 %v155
  %v380 = vunpack.c.l.b16 %v156
  %v381 = vunpack.c.l.b16 %v157
  %v382 = vunpack.c.l.b16 %v158
  %v383 = vunpack.c.l.b16 %v159
  %v384 = vunpack.c.l.b16 %v160
  %v385 = vunpack.c.l.b16 %v161
  %v386 = vunpack.c.l.b16 %v162
  %v387 = vunpack.c.l.b16 %v163
  %v388 = vunpack.c.l.b16 %v164
  %v389 = vunpack.c.l.b16 %v165
  %v390 = vunpack.c.l.b16 %v166
  %v391 = vunpack.c.l.b16 %v167
  %v392 = vunpack.c.l.b16 %v168
  %v393 = vunpack.c.l.b16 %v169
  %v394 = vunpack.c.l.b16 %v170
  %v395 = vunpack.c.l.b16 %v171
  %v396 = vunpack.c.l.b16 %v172
  %v397 = vunpack.c.l.b16 %v173
  %v398 = vunpack.c.l.b16 %v174
  %v399 = vunpack.c.l.b16 %v175
  %v400 = vunpack.c.l.b16 %v176
  %v401 = vunpack.c.l.b16 %v177
  %v402 = vunpack.c.l.b16 %v178
  %v403 = vunpack.c.l.b16 %v179
  %v404 = vunpack.c.l.b16 %v180
  %v405 = vunpack.c.l.b16 %v181
  %v406 = vunpack.c.l.b16 %v182
  %v407 = vunpack.c.l.b16 %v183
  %v408 = vunpack.c.l.b16 %v184
  %v409 = vunpack.c.l.b16 %v185
  %v410 = vunpack.c.l.b16 %v186
  %v411 = vunpack.c.l.b16 %v187
  %v412 = vunpack.c.l.b16 %v188
  %v413 = vunpack.c.l.b16 %v189
  %v414 = vunpack.c.l.b16 %v190
  %v415 = vunpack.c.l.b16 %v191
  %v416 = vunpack.c.l.b16 %v192
  %v417 = vunpack.c.l.b16 %v193
  %v418 = vunpack.c.l.b16 %v194
  %v419 = vunpack.c.l.b16 %v195
  %v420 = vunpack.c.l.b16 %v196
  %v421 = vunpack.c.l.b16 %v197
  %v422 = vpack.c.b16 %v327, %v326
  %v423 = vpack.c.b16 %v329, %v328
  %v424 = vpack.c.b16 %v331, %v330
  %v425 = vpack.c.b16 %v333, %v332
  %v426 = vpack.c.b16 %v335, %v334
  %v427 = vpack.c.b16 %v337, %v336
  %v428 = vpack.c.b16 %v339, %v338
  %v429 = vpack.c.b16 %v341, %v340
  %v430 = vpack.c.b16 %v343, %v342
  %v431 = vpack.c.b16 %v345, %v344
  %v432 = vpack.c.b16 %v347, %v346
  %v433 = vpack.c.b16 %v349, %v348
  %v434 = vpack.c.b16 %v351, %v350
  %v435 = vpack.c.b16 %v353, %v352
  %v436 = vpack.c.b16 %v355, %v354
  %v437 = vpack.c.b16 %v357, %v356
  %v438 = vpack.c.b16 %v359, %v358
  %v439 = vpack.c.b16 %v361, %v360
  %v440 = vpack.c.b16 %v363, %v362
  %v441 = vpack.c.b16 %v365, %v364
  %v442 = vpack.c.b16 %v367, %v366
  %v443 = vpack.c.b16 %v369, %v368
  %v444 = vpack.c.b16 %v371, %v370
  %v445 = vpack.c.b16 %v373, %v372
  %v446 = vpack.c.b16 %v375, %v374
  %v447 = vpack.c.b16 %v377, %v376
  %v448 = vpack.c.b16 %v379, %v378
  %v449 = vpack.c.b16 %v381, %v380
  %v450 = vpack.c.b16 %v383, %v382
  %v451 = vpack.c.b16 %v385, %v384
  %v452 = vpack.c.b16 %v387, %v386
  %v453 = vpack.c.b16 %v389, %v388
  %v454 = vpack.c.b16 %v391, %v390
  %v455 = vpack.c.b16 %v393, %v392
  %v456 = vpack.c.b16 %v395, %v394
  %v457 = vpack.c.b16 %v397, %v396
  %v458 = vpack.c.b16 %v399, %v398
  %v459 = vpack.c.b16 %v401, %v400
  %v460 = vpack.c.b16 %v403, %v402
  %v461 = vpack.c.b16 %v405, %v404
  %v462 = vpack.c.b16 %v407, %v406
  %v463 = vpack.c.b16 %v409, %v408
  %v464 = vpack.c.b16 %v411, %v410
  %v465 = vpack.c.b16 %v413, %v412
  %v466 = vpack.c.b16 %v415, %v414
  %v467 = vpack.c.b16 %v417, %v416
  %v468 = vpack.c.b16 %v419, %v418
  %v469 = vpack.c.b16 %v421, %v420
  %518 = vmatprep.subr.bf16.mxu0 0
  %519 = vmatpush1.bf16.msra.mxu0 %v429
  %520 = vmatprep.subr.bf16.mxu0 0
  %521 = vmatpush1.bf16.msra.mxu0 %v428
  %522 = vmatprep.subr.bf16.mxu0 0
  %523 = vmatpush1.bf16.msra.mxu0 %v427
  %524 = vmatprep.subr.bf16.mxu0 0
  %525 = vmatpush1.bf16.msra.mxu0 %v426
  %526 = vmatprep.subr.bf16.mxu0 0
  %527 = vmatpush1.bf16.msra.mxu0 %v425
  %528 = vmatprep.subr.bf16.mxu0 0
  %529 = vmatpush1.bf16.msra.mxu0 %v424
  %530 = vmatprep.subr.bf16.mxu0 0
  %531 = vmatpush1.bf16.msra.mxu0 %v423
  %532 = vmatprep.subr.bf16.mxu0 0
  %533 = vmatpush1.bf16.msra.mxu0 %v422
  %534 = vmatprep.subr.bf16.mxu0 0
  %535 = vmatpush2.bf16.msra.mxu0 %v437
  %536 = vmatprep.subr.bf16.mxu0 0
  %537 = vmatpush2.bf16.msra.mxu0 %v436
  %538 = vmatprep.subr.bf16.mxu0 0
  %539 = vmatpush2.bf16.msra.mxu0 %v435
  %540 = vmatprep.subr.bf16.mxu0 0
  %541 = vmatpush2.bf16.msra.mxu0 %v434
  %542 = vmatprep.subr.bf16.mxu0 0
  %543 = vmatpush2.bf16.msra.mxu0 %v433
  %544 = vmatprep.subr.bf16.mxu0 0
  %545 = vmatpush2.bf16.msra.mxu0 %v432
  %546 = vmatprep.subr.bf16.mxu0 0
  %547 = vmatpush2.bf16.msra.mxu0 %v431
  %548 = vmatprep.subr.bf16.mxu0 0
  %549 = vmatpush2.bf16.msra.mxu0 %v430
  %550 = vmatprep.mubr.bf16.mxu0 %v219
  %551 = vmatmul.mubr.bf16.gmra.mxu0 %v218
  %v552 = vpop.f32.mrf.mxu0
  %v553 = vadd.f32 %v198, %v552
  %v554 = vpop.f32.mrf.mxu0
  %v555 = vpop.f32.mrf.mxu0
  %v556 = vadd.f32 %v199, %v555
  %v557 = vpop.f32.mrf.mxu0
  %558 = vdwg.mxu0
  %559 = vmatprep.subr.bf16.mxu0 0
  %560 = vmatpush1.bf16.msra.mxu0 %v445
  %561 = vmatprep.subr.bf16.mxu0 0
  %562 = vmatpush1.bf16.msra.mxu0 %v444
  %563 = vmatprep.subr.bf16.mxu0 0
  %564 = vmatpush1.bf16.msra.mxu0 %v443
  %565 = vmatprep.subr.bf16.mxu0 0
  %566 = vmatpush1.bf16.msra.mxu0 %v442
  %567 = vmatprep.subr.bf16.mxu0 0
  %568 = vmatpush1.bf16.msra.mxu0 %v441
  %569 = vmatprep.subr.bf16.mxu0 0
  %570 = vmatpush1.bf16.msra.mxu0 %v440
  %571 = vmatprep.subr.bf16.mxu0 0
  %572 = vmatpush1.bf16.msra.mxu0 %v439
  %573 = vmatprep.subr.bf16.mxu0 0
  %574 = vmatpush1.bf16.msra.mxu0 %v438
  %575 = vmatprep.subr.bf16.mxu0 0
  %576 = vmatpush2.bf16.msra.mxu0 %v453
  %577 = vmatprep.subr.bf16.mxu0 0
  %578 = vmatpush2.bf16.msra.mxu0 %v452
  %579 = vmatprep.subr.bf16.mxu0 0
  %580 = vmatpush2.bf16.msra.mxu0 %v451
  %581 = vmatprep.subr.bf16.mxu0 0
  %582 = vmatpush2.bf16.msra.mxu0 %v450
  %583 = vmatprep.subr.bf16.mxu0 0
  %584 = vmatpush2.bf16.msra.mxu0 %v449
  %585 = vmatprep.subr.bf16.mxu0 0
  %586 = vmatpush2.bf16.msra.mxu0 %v448
  %587 = vmatprep.subr.bf16.mxu0 0
  %588 = vmatpush2.bf16.msra.mxu0 %v447
  %589 = vmatprep.subr.bf16.mxu0 0
  %590 = vmatpush2.bf16.msra.mxu0 %v446
  %591 = vmatprep.mubr.bf16.mxu0 %v221
  %592 = vmatmul.mubr.bf16.gmra.mxu0 %v220
  %v593 = vpop.f32.mrf.mxu0
  %v594 = vadd.f32 %v553, %v593
  %v595 = vpop.f32.mrf.mxu0
  %v596 = vpop.f32.mrf.mxu0
  %v597 = vadd.f32 %v556, %v596
  %v598 = vpop.f32.mrf.mxu0
  %599 = vdwg.mxu0
  %600 = vmatprep.subr.bf16.mxu0 0
  %601 = vmatpush1.bf16.msra.mxu0 %v461
  %602 = vmatprep.subr.bf16.mxu0 0
  %603 = vmatpush1.bf16.msra.mxu0 %v460
  %604 = vmatprep.subr.bf16.mxu0 0
  %605 = vmatpush1.bf16.msra.mxu0 %v459
  %606 = vmatprep.subr.bf16.mxu0 0
  %607 = vmatpush1.bf16.msra.mxu0 %v458
  %608 = vmatprep.subr.bf16.mxu0 0
  %609 = vmatpush1.bf16.msra.mxu0 %v457
  %610 = vmatprep.subr.bf16.mxu0 0
  %611 = vmatpush1.bf16.msra.mxu0 %v456
  %612 = vmatprep.subr.bf16.mxu0 0
  %613 = vmatpush1.bf16.msra.mxu0 %v455
  %614 = vmatprep.subr.bf16.mxu0 0
  %615 = vmatpush1.bf16.msra.mxu0 %v454
  %616 = vmatprep.subr.bf16.mxu0 0
  %617 = vmatpush2.bf16.msra.mxu0 %v469
  %618 = vmatprep.subr.bf16.mxu0 0
  %619 = vmatpush2.bf16.msra.mxu0 %v468
  %620 = vmatprep.subr.bf16.mxu0 0
  %621 = vmatpush2.bf16.msra.mxu0 %v467
  %622 = vmatprep.subr.bf16.mxu0 0
  %623 = vmatpush2.bf16.msra.mxu0 %v466
  %624 = vmatprep.subr.bf16.mxu0 0
  %625 = vmatpush2.bf16.msra.mxu0 %v465
  %626 = vmatprep.subr.bf16.mxu0 0
  %627 = vmatpush2.bf16.msra.mxu0 %v464
  %628 = vmatprep.subr.bf16.mxu0 0
  %629 = vmatpush2.bf16.msra.mxu0 %v463
  %630 = vmatprep.subr.bf16.mxu0 0
  %631 = vmatpush2.bf16.msra.mxu0 %v462
  %632 = vmatprep.mubr.bf16.mxu0 %v223
  %633 = vmatmul.mubr.bf16.gmra.mxu0 %v222
  %v634 = vpop.f32.mrf.mxu0
  %v635 = vadd.f32 %v594, %v634
  %v636 = vpop.f32.mrf.mxu0
  %v637 = vpop.f32.mrf.mxu0
  %v638 = vadd.f32 %v597, %v637
  %v639 = vpop.f32.mrf.mxu0
  %640 = vdwg.mxu0
  %v641 = vld [vmem:[%s3] sm:$0x3]
  %v642 = vld [vmem:[%s4] sm:$0x3]
  %v643 = vld [vmem:[%s12] sm:$0x3]
  %v644 = vld [vmem:[%s13] sm:$0x3]
  %v645 = vld [vmem:[%s14] sm:$0x3]
  %v646 = vld [vmem:[%s16] sm:$0x3]
  %v647 = vld [vmem:[%s18] sm:$0x3]
  %vm648 = vcmask 523264
  %v649 = vsel %vm648, %v635, 0.0
  %650 = vadd.xlane.f32.xlu0 %v649
  %v651 = vpop.xlane.xlu0 %650
  %vm652 = vcmask 517120
  %v653 = vsel %vm652, %v638, 0.0
  %654 = vadd.xlane.f32.xlu0 %v653
  %v655 = vpop.xlane.xlu0 %654
  %v656 = vrcp.pop 64.0
  %v657 = vmul.f32 %v651, %v656
  %v658 = vmul.f32 %v655, %v656
  %v659 = vsub.f32 %v635, %v657
  %v660 = vsub.f32 %v638, %v658
  %v661 = vmul.f32 %v659, %v659
  %v662 = vmul.f32 %v660, %v660
  %v663 = vsel %vm648, %v661, 0.0
  %664 = vadd.xlane.f32.xlu0 %v663
  %v665 = vpop.xlane.xlu0 %664
  %v666 = vsel %vm652, %v662, 0.0
  %667 = vadd.xlane.f32.xlu0 %v666
  %v668 = vpop.xlane.xlu0 %667
  %v669 = vmul.f32 %v665, %v656
  %v670 = vmul.f32 %v668, %v656
  %v671 = vadd.f32 %v669, 1e-06
  %v672 = vadd.f32 %v670, 1e-06
  %v673 = vrsqrt.pop %v671
  %v674 = vrsqrt.pop %v672
  %v675 = vmul.f32 %v659, %v673
  %v676 = vmul.f32 %v660, %v674
  %v677 = vlaneseq
  %v678 = vshrl.u32 %v677, 7
  %v679 = vsub.s32 0, %v678
  %v680 = vrot.slane %v641, %v679
  %v681 = vmul.f32 %v675, %v680
  %v682 = vmul.f32 %v676, %v680
  %v683 = vlaneseq
  %v684 = vshrl.u32 %v683, 7
  %v685 = vsub.s32 0, %v684
  %v686 = vrot.slane %v642, %v685
  %v687 = vadd.f32 %v681, %v686
  %v688 = vadd.f32 %v682, %v686
  %v689 = vld [vmem:[%s5] sm:$0xf]
  %v690 = vld [vmem:[%s5 + $0x4] sm:$0xf]
  %v691 = vld [vmem:[%s5 + $0x8] sm:$0xf]
  %v692 = vld [vmem:[%s5 + $0xc] sm:$0xf]
  %v693 = vld [vmem:[%s5 + $0x10] sm:$0xf]
  %v694 = vld [vmem:[%s5 + $0x14] sm:$0xf]
  %v695 = vld [vmem:[%s5 + $0x18] sm:$0xf]
  %v696 = vld [vmem:[%s5 + $0x1c] sm:$0xf]
  %v697 = vpack.c.bf16 %v688, %v687
  %v698 = vld [vmem:[%s8] sm:$0x1]
  %v700 = vlaneseq
  %v701 = vshrl.u32 %v700, 7
  %v702 = vsub.s32 0, %v701
  %v703 = vrot.slane %v698, %v702
  %v713 = vunpack.c.l.b16 %v689
  %v714 = vunpack.c.l.b16 %v690
  %v715 = vunpack.c.l.b16 %v691
  %v716 = vunpack.c.l.b16 %v692
  %v717 = vunpack.c.l.b16 %v693
  %v718 = vunpack.c.l.b16 %v694
  %v719 = vunpack.c.l.b16 %v695
  %v720 = vunpack.c.l.b16 %v696
  %v721 = vpack.c.b16 %v714, %v713
  %v722 = vpack.c.b16 %v716, %v715
  %v723 = vpack.c.b16 %v718, %v717
  %v724 = vpack.c.b16 %v720, %v719
  %v730 = vsel %vm648, %v697, 0
  %732 = vmatprep.subr.bf16.mxu0 0
  %733 = vmatpush1.bf16.msra.mxu0 0
  %734 = vmatprep.subr.bf16.mxu0 0
  %735 = vmatpush1.bf16.msra.mxu0 0
  %736 = vmatprep.subr.bf16.mxu0 0
  %737 = vmatpush1.bf16.msra.mxu0 0
  %738 = vmatprep.subr.bf16.mxu0 0
  %739 = vmatpush1.bf16.msra.mxu0 0
  %740 = vmatprep.subr.bf16.mxu0 0
  %741 = vmatpush1.bf16.msra.mxu0 %v724
  %742 = vmatprep.subr.bf16.mxu0 0
  %743 = vmatpush1.bf16.msra.mxu0 %v723
  %744 = vmatprep.subr.bf16.mxu0 0
  %745 = vmatpush1.bf16.msra.mxu0 %v722
  %746 = vmatprep.subr.bf16.mxu0 0
  %747 = vmatpush1.bf16.msra.mxu0 %v721
  %748 = vmatprep.subr.bf16.mxu0 0
  %749 = vmatpush2.bf16.msra.mxu0 0
  %750 = vmatprep.subr.bf16.mxu0 0
  %751 = vmatpush2.bf16.msra.mxu0 0
  %752 = vmatprep.subr.bf16.mxu0 0
  %753 = vmatpush2.bf16.msra.mxu0 0
  %754 = vmatprep.subr.bf16.mxu0 0
  %755 = vmatpush2.bf16.msra.mxu0 0
  %756 = vmatprep.subr.bf16.mxu0 0
  %757 = vmatpush2.bf16.msra.mxu0 0
  %758 = vmatprep.subr.bf16.mxu0 0
  %759 = vmatpush2.bf16.msra.mxu0 0
  %760 = vmatprep.subr.bf16.mxu0 0
  %761 = vmatpush2.bf16.msra.mxu0 0
  %762 = vmatprep.subr.bf16.mxu0 0
  %763 = vmatpush2.bf16.msra.mxu0 0
  %764 = vmatprep.mubr.bf16.mxu0 0
  %765 = vmatmul.mubr.bf16.gmra.mxu0 %v730
  %v766 = vpop.f32.mrf.mxu0
  %v767 = vadd.f32 %v703, %v766
  %v768 = vpop.f32.mrf.mxu0
  %v769 = vpop.f32.mrf.mxu0
  %v770 = vadd.f32 %v703, %v769
  %v771 = vpop.f32.mrf.mxu0
  %772 = vdwg.mxu0
  %v773 = vld [vmem:[%s6] sm:$0xf]
  %v774 = vld [vmem:[%s6 + $0x4] sm:$0xf]
  %v775 = vld [vmem:[%s6 + $0x8] sm:$0xf]
  %v776 = vld [vmem:[%s6 + $0xc] sm:$0xf]
  %v777 = vld [vmem:[%s6 + $0x10] sm:$0xf]
  %v778 = vld [vmem:[%s6 + $0x14] sm:$0xf]
  %v779 = vld [vmem:[%s6 + $0x18] sm:$0xf]
  %v780 = vld [vmem:[%s6 + $0x1c] sm:$0xf]
  %v781 = vld [vmem:[%s9] sm:$0x1]
  %v783 = vlaneseq
  %v784 = vshrl.u32 %v783, 7
  %v785 = vsub.s32 0, %v784
  %v786 = vrot.slane %v781, %v785
  %v796 = vunpack.c.l.b16 %v773
  %v797 = vunpack.c.l.b16 %v774
  %v798 = vunpack.c.l.b16 %v775
  %v799 = vunpack.c.l.b16 %v776
  %v800 = vunpack.c.l.b16 %v777
  %v801 = vunpack.c.l.b16 %v778
  %v802 = vunpack.c.l.b16 %v779
  %v803 = vunpack.c.l.b16 %v780
  %v804 = vpack.c.b16 %v797, %v796
  %v805 = vpack.c.b16 %v799, %v798
  %v806 = vpack.c.b16 %v801, %v800
  %v807 = vpack.c.b16 %v803, %v802
  %812 = vmatprep.subr.bf16.mxu0 0
  %813 = vmatpush1.bf16.msra.mxu0 0
  %814 = vmatprep.subr.bf16.mxu0 0
  %815 = vmatpush1.bf16.msra.mxu0 0
  %816 = vmatprep.subr.bf16.mxu0 0
  %817 = vmatpush1.bf16.msra.mxu0 0
  %818 = vmatprep.subr.bf16.mxu0 0
  %819 = vmatpush1.bf16.msra.mxu0 0
  %820 = vmatprep.subr.bf16.mxu0 0
  %821 = vmatpush1.bf16.msra.mxu0 %v807
  %822 = vmatprep.subr.bf16.mxu0 0
  %823 = vmatpush1.bf16.msra.mxu0 %v806
  %824 = vmatprep.subr.bf16.mxu0 0
  %825 = vmatpush1.bf16.msra.mxu0 %v805
  %826 = vmatprep.subr.bf16.mxu0 0
  %827 = vmatpush1.bf16.msra.mxu0 %v804
  %828 = vmatprep.subr.bf16.mxu0 0
  %829 = vmatpush2.bf16.msra.mxu0 0
  %830 = vmatprep.subr.bf16.mxu0 0
  %831 = vmatpush2.bf16.msra.mxu0 0
  %832 = vmatprep.subr.bf16.mxu0 0
  %833 = vmatpush2.bf16.msra.mxu0 0
  %834 = vmatprep.subr.bf16.mxu0 0
  %835 = vmatpush2.bf16.msra.mxu0 0
  %836 = vmatprep.subr.bf16.mxu0 0
  %837 = vmatpush2.bf16.msra.mxu0 0
  %838 = vmatprep.subr.bf16.mxu0 0
  %839 = vmatpush2.bf16.msra.mxu0 0
  %840 = vmatprep.subr.bf16.mxu0 0
  %841 = vmatpush2.bf16.msra.mxu0 0
  %842 = vmatprep.subr.bf16.mxu0 0
  %843 = vmatpush2.bf16.msra.mxu0 0
  %844 = vmatprep.mubr.bf16.mxu0 0
  %845 = vmatmul.mubr.bf16.gmra.mxu0 %v730
  %v846 = vpop.f32.mrf.mxu0
  %v847 = vadd.f32 %v786, %v846
  %v848 = vpop.f32.mrf.mxu0
  %v849 = vpop.f32.mrf.mxu0
  %v850 = vadd.f32 %v786, %v849
  %v851 = vpop.f32.mrf.mxu0
  %852 = vdwg.mxu0
  %v853 = vld [vmem:[%s7] sm:$0xf]
  %v854 = vld [vmem:[%s7 + $0x4] sm:$0xf]
  %v855 = vld [vmem:[%s7 + $0x8] sm:$0xf]
  %v856 = vld [vmem:[%s7 + $0xc] sm:$0xf]
  %v857 = vld [vmem:[%s7 + $0x10] sm:$0xf]
  %v858 = vld [vmem:[%s7 + $0x14] sm:$0xf]
  %v859 = vld [vmem:[%s7 + $0x18] sm:$0xf]
  %v860 = vld [vmem:[%s7 + $0x1c] sm:$0xf]
  %v861 = vld [vmem:[%s10] sm:$0x1]
  %v863 = vlaneseq
  %v864 = vshrl.u32 %v863, 7
  %v865 = vsub.s32 0, %v864
  %v866 = vrot.slane %v861, %v865
  %v876 = vunpack.c.l.b16 %v853
  %v877 = vunpack.c.l.b16 %v854
  %v878 = vunpack.c.l.b16 %v855
  %v879 = vunpack.c.l.b16 %v856
  %v880 = vunpack.c.l.b16 %v857
  %v881 = vunpack.c.l.b16 %v858
  %v882 = vunpack.c.l.b16 %v859
  %v883 = vunpack.c.l.b16 %v860
  %v884 = vpack.c.b16 %v877, %v876
  %v885 = vpack.c.b16 %v879, %v878
  %v886 = vpack.c.b16 %v881, %v880
  %v887 = vpack.c.b16 %v883, %v882
  %892 = vmatprep.subr.bf16.mxu0 0
  %893 = vmatpush1.bf16.msra.mxu0 0
  %894 = vmatprep.subr.bf16.mxu0 0
  %895 = vmatpush1.bf16.msra.mxu0 0
  %896 = vmatprep.subr.bf16.mxu0 0
  %897 = vmatpush1.bf16.msra.mxu0 0
  %898 = vmatprep.subr.bf16.mxu0 0
  %899 = vmatpush1.bf16.msra.mxu0 0
  %900 = vmatprep.subr.bf16.mxu0 0
  %901 = vmatpush1.bf16.msra.mxu0 %v887
  %902 = vmatprep.subr.bf16.mxu0 0
  %903 = vmatpush1.bf16.msra.mxu0 %v886
  %904 = vmatprep.subr.bf16.mxu0 0
  %905 = vmatpush1.bf16.msra.mxu0 %v885
  %906 = vmatprep.subr.bf16.mxu0 0
  %907 = vmatpush1.bf16.msra.mxu0 %v884
  %908 = vmatprep.subr.bf16.mxu0 0
  %909 = vmatpush2.bf16.msra.mxu0 0
  %910 = vmatprep.subr.bf16.mxu0 0
  %911 = vmatpush2.bf16.msra.mxu0 0
  %912 = vmatprep.subr.bf16.mxu0 0
  %913 = vmatpush2.bf16.msra.mxu0 0
  %914 = vmatprep.subr.bf16.mxu0 0
  %915 = vmatpush2.bf16.msra.mxu0 0
  %916 = vmatprep.subr.bf16.mxu0 0
  %917 = vmatpush2.bf16.msra.mxu0 0
  %918 = vmatprep.subr.bf16.mxu0 0
  %919 = vmatpush2.bf16.msra.mxu0 0
  %920 = vmatprep.subr.bf16.mxu0 0
  %921 = vmatpush2.bf16.msra.mxu0 0
  %922 = vmatprep.subr.bf16.mxu0 0
  %923 = vmatpush2.bf16.msra.mxu0 0
  %924 = vmatprep.mubr.bf16.mxu0 0
  %925 = vmatmul.mubr.bf16.gmra.mxu0 %v730
  %v926 = vpop.f32.mrf.mxu0
  %v927 = vadd.f32 %v866, %v926
  %v928 = vpop.f32.mrf.mxu0
  %v929 = vpop.f32.mrf.mxu0
  %v930 = vadd.f32 %v866, %v929
  %v931 = vpop.f32.mrf.mxu0
  %932 = vdwg.mxu0
  %v933 = vpack.c.bf16 %v770, %v767
  %v934 = vpack.c.bf16 %v850, %v847
  %vm935 = vcmask 130048
  %v937 = vsel %vm935, %v933, 0
  %v940 = vsel %vm935, %v934, 0
  %942 = vmatprep.subr.bf16.mxu0 0
  %943 = vmatpush1.bf16.xpose.msra.mxu0 0
  %944 = vmatprep.subr.bf16.mxu0 0
  %945 = vmatpush1.bf16.xpose.msra.mxu0 0
  %946 = vmatprep.subr.bf16.mxu0 0
  %947 = vmatpush1.bf16.xpose.msra.mxu0 0
  %948 = vmatprep.subr.bf16.mxu0 0
  %949 = vmatpush1.bf16.xpose.msra.mxu0 0
  %950 = vmatprep.subr.bf16.mxu0 0
  %951 = vmatpush1.bf16.xpose.msra.mxu0 0
  %952 = vmatprep.subr.bf16.mxu0 0
  %953 = vmatpush1.bf16.xpose.msra.mxu0 0
  %954 = vmatprep.subr.bf16.mxu0 0
  %955 = vmatpush1.bf16.xpose.msra.mxu0 0
  %956 = vmatprep.subr.bf16.mxu0 0
  %957 = vmatpush1.bf16.xpose.msra.mxu0 %v940
  %958 = vmatprep.subr.bf16.mxu0 0
  %959 = vmatpush2.bf16.xpose.msra.mxu0 0
  %960 = vmatprep.subr.bf16.mxu0 0
  %961 = vmatpush2.bf16.xpose.msra.mxu0 0
  %962 = vmatprep.subr.bf16.mxu0 0
  %963 = vmatpush2.bf16.xpose.msra.mxu0 0
  %964 = vmatprep.subr.bf16.mxu0 0
  %965 = vmatpush2.bf16.xpose.msra.mxu0 0
  %966 = vmatprep.subr.bf16.mxu0 0
  %967 = vmatpush2.bf16.xpose.msra.mxu0 0
  %968 = vmatprep.subr.bf16.mxu0 0
  %969 = vmatpush2.bf16.xpose.msra.mxu0 0
  %970 = vmatprep.subr.bf16.mxu0 0
  %971 = vmatpush2.bf16.xpose.msra.mxu0 0
  %972 = vmatprep.subr.bf16.mxu0 0
  %973 = vmatpush2.bf16.xpose.msra.mxu0 0
  %974 = vmatprep.mubr.bf16.mxu0 0
  %975 = vmatmul.mubr.bf16.gmra.mxu0 %v937
  %v976 = vpop.f32.mrf.mxu0
  %v977 = vadd.f32 0.0, %v976
  %v978 = vpop.f32.mrf.mxu0
  %v979 = vpop.f32.mrf.mxu0
  %v980 = vadd.f32 0.0, %v979
  %v981 = vpop.f32.mrf.mxu0
  %982 = vdwg.mxu0
  %v983 = vmul.f32 %v977, 0.25
  %v984 = vmul.f32 %v980, 0.25
  %v985 = vadd.f32 %v983, %v94
  %v986 = vadd.f32 %v984, %v95
  %vm987 = vcmask 80896
  %v988 = vsel %vm987, %v985, -inf
  %989 = vmax.xlane.f32.xlu0 %v988
  %v990 = vpop.xlane.xlu0 %989
  %vm991 = vcmask 74752
  %v992 = vsel %vm991, %v986, -inf
  %993 = vmax.xlane.f32.xlu0 %v992
  %v994 = vpop.xlane.xlu0 %993
  %v995 = vsub.f32 %v985, %v990
  %v996 = vsub.f32 %v986, %v994
  %v997 = vmul.f32 %v995, 1.442695
  %v998 = vpow.pop %v997
  %v999 = vmul.f32 %v996, 1.442695
  %v1000 = vpow.pop %v999
  %v1001 = vsel %vm987, %v998, 0.0
  %1002 = vadd.xlane.f32.xlu0 %v1001
  %v1003 = vpop.xlane.xlu0 %1002
  %v1004 = vsel %vm991, %v1000, 0.0
  %1005 = vadd.xlane.f32.xlu0 %v1004
  %v1006 = vpop.xlane.xlu0 %1005
  %v1007 = vrcp.pop %v1003
  %v1008 = vrcp.pop %v1006
  %v1009 = vmul.f32 %v998, %v1007
  %v1010 = vmul.f32 %v1000, %v1008
  %v1011 = vpack.c.bf16 %v1010, %v1009
  %v1012 = vpack.c.bf16 %v930, %v927
  %v1014 = vsel %vm987, %v1011, 0
  %vm1016 = vcmask 1044480
  %v1018 = vsel %vm1016, %v1012, 0
  %1020 = vmatprep.subr.bf16.mxu0 0
  %1021 = vmatpush1.bf16.msra.mxu0 0
  %1022 = vmatprep.subr.bf16.mxu0 0
  %1023 = vmatpush1.bf16.msra.mxu0 0
  %1024 = vmatprep.subr.bf16.mxu0 0
  %1025 = vmatpush1.bf16.msra.mxu0 0
  %1026 = vmatprep.subr.bf16.mxu0 0
  %1027 = vmatpush1.bf16.msra.mxu0 0
  %1028 = vmatprep.subr.bf16.mxu0 0
  %1029 = vmatpush1.bf16.msra.mxu0 0
  %1030 = vmatprep.subr.bf16.mxu0 0
  %1031 = vmatpush1.bf16.msra.mxu0 0
  %1032 = vmatprep.subr.bf16.mxu0 0
  %1033 = vmatpush1.bf16.msra.mxu0 0
  %1034 = vmatprep.subr.bf16.mxu0 0
  %1035 = vmatpush1.bf16.msra.mxu0 %v1018
  %1036 = vmatprep.subr.bf16.mxu0 0
  %1037 = vmatpush2.bf16.msra.mxu0 0
  %1038 = vmatprep.subr.bf16.mxu0 0
  %1039 = vmatpush2.bf16.msra.mxu0 0
  %1040 = vmatprep.subr.bf16.mxu0 0
  %1041 = vmatpush2.bf16.msra.mxu0 0
  %1042 = vmatprep.subr.bf16.mxu0 0
  %1043 = vmatpush2.bf16.msra.mxu0 0
  %1044 = vmatprep.subr.bf16.mxu0 0
  %1045 = vmatpush2.bf16.msra.mxu0 0
  %1046 = vmatprep.subr.bf16.mxu0 0
  %1047 = vmatpush2.bf16.msra.mxu0 0
  %1048 = vmatprep.subr.bf16.mxu0 0
  %1049 = vmatpush2.bf16.msra.mxu0 0
  %1050 = vmatprep.subr.bf16.mxu0 0
  %1051 = vmatpush2.bf16.msra.mxu0 0
  %1052 = vmatprep.mubr.bf16.mxu0 0
  %1053 = vmatmul.mubr.bf16.gmra.mxu0 %v1014
  %v1054 = vpop.f32.mrf.mxu0
  %v1055 = vadd.f32 0.0, %v1054
  %v1056 = vpop.f32.mrf.mxu0
  %v1057 = vpop.f32.mrf.mxu0
  %v1058 = vadd.f32 0.0, %v1057
  %v1059 = vpop.f32.mrf.mxu0
  %1060 = vdwg.mxu0
  %v1061 = vld [vmem:[%s11] sm:$0xf]
  %v1062 = vld [vmem:[%s11 + $0x4] sm:$0xf]
  %v1063 = vpack.c.bf16 %v1058, %v1055
  %s1064 = scalar_lea.vmem %s5, 32
  %v1065 = vld [vmem:[%s1064] sm:$0xf]
  %v1066 = vld [vmem:[%s1064 + $0x4] sm:$0xf]
  %v1067 = vld [vmem:[%s1064 + $0x8] sm:$0xf]
  %v1068 = vld [vmem:[%s1064 + $0xc] sm:$0xf]
  %v1069 = vld [vmem:[%s1064 + $0x10] sm:$0xf]
  %v1070 = vld [vmem:[%s1064 + $0x14] sm:$0xf]
  %v1071 = vld [vmem:[%s1064 + $0x18] sm:$0xf]
  %v1072 = vld [vmem:[%s1064 + $0x1c] sm:$0xf]
  %s1073 = scalar_lea.vmem %s8, 1
  %v1074 = vld [vmem:[%s1073] sm:$0x1]
  %v1076 = vlaneseq
  %v1077 = vshrl.u32 %v1076, 7
  %v1078 = vsub.s32 0, %v1077
  %v1079 = vrot.slane %v1074, %v1078
  %v1089 = vunpack.c.l.b16 %v1065
  %v1090 = vunpack.c.l.b16 %v1066
  %v1091 = vunpack.c.l.b16 %v1067
  %v1092 = vunpack.c.l.b16 %v1068
  %v1093 = vunpack.c.l.b16 %v1069
  %v1094 = vunpack.c.l.b16 %v1070
  %v1095 = vunpack.c.l.b16 %v1071
  %v1096 = vunpack.c.l.b16 %v1072
  %v1097 = vpack.c.b16 %v1090, %v1089
  %v1098 = vpack.c.b16 %v1092, %v1091
  %v1099 = vpack.c.b16 %v1094, %v1093
  %v1100 = vpack.c.b16 %v1096, %v1095
  %1105 = vmatprep.subr.bf16.mxu0 0
  %1106 = vmatpush1.bf16.msra.mxu0 0
  %1107 = vmatprep.subr.bf16.mxu0 0
  %1108 = vmatpush1.bf16.msra.mxu0 0
  %1109 = vmatprep.subr.bf16.mxu0 0
  %1110 = vmatpush1.bf16.msra.mxu0 0
  %1111 = vmatprep.subr.bf16.mxu0 0
  %1112 = vmatpush1.bf16.msra.mxu0 0
  %1113 = vmatprep.subr.bf16.mxu0 0
  %1114 = vmatpush1.bf16.msra.mxu0 %v1100
  %1115 = vmatprep.subr.bf16.mxu0 0
  %1116 = vmatpush1.bf16.msra.mxu0 %v1099
  %1117 = vmatprep.subr.bf16.mxu0 0
  %1118 = vmatpush1.bf16.msra.mxu0 %v1098
  %1119 = vmatprep.subr.bf16.mxu0 0
  %1120 = vmatpush1.bf16.msra.mxu0 %v1097
  %1121 = vmatprep.subr.bf16.mxu0 0
  %1122 = vmatpush2.bf16.msra.mxu0 0
  %1123 = vmatprep.subr.bf16.mxu0 0
  %1124 = vmatpush2.bf16.msra.mxu0 0
  %1125 = vmatprep.subr.bf16.mxu0 0
  %1126 = vmatpush2.bf16.msra.mxu0 0
  %1127 = vmatprep.subr.bf16.mxu0 0
  %1128 = vmatpush2.bf16.msra.mxu0 0
  %1129 = vmatprep.subr.bf16.mxu0 0
  %1130 = vmatpush2.bf16.msra.mxu0 0
  %1131 = vmatprep.subr.bf16.mxu0 0
  %1132 = vmatpush2.bf16.msra.mxu0 0
  %1133 = vmatprep.subr.bf16.mxu0 0
  %1134 = vmatpush2.bf16.msra.mxu0 0
  %1135 = vmatprep.subr.bf16.mxu0 0
  %1136 = vmatpush2.bf16.msra.mxu0 0
  %1137 = vmatprep.mubr.bf16.mxu0 0
  %1138 = vmatmul.mubr.bf16.gmra.mxu0 %v730
  %v1139 = vpop.f32.mrf.mxu0
  %v1140 = vadd.f32 %v1079, %v1139
  %v1141 = vpop.f32.mrf.mxu0
  %v1142 = vpop.f32.mrf.mxu0
  %v1143 = vadd.f32 %v1079, %v1142
  %v1144 = vpop.f32.mrf.mxu0
  %1145 = vdwg.mxu0
  %s1146 = scalar_lea.vmem %s6, 32
  %v1147 = vld [vmem:[%s1146] sm:$0xf]
  %v1148 = vld [vmem:[%s1146 + $0x4] sm:$0xf]
  %v1149 = vld [vmem:[%s1146 + $0x8] sm:$0xf]
  %v1150 = vld [vmem:[%s1146 + $0xc] sm:$0xf]
  %v1151 = vld [vmem:[%s1146 + $0x10] sm:$0xf]
  %v1152 = vld [vmem:[%s1146 + $0x14] sm:$0xf]
  %v1153 = vld [vmem:[%s1146 + $0x18] sm:$0xf]
  %v1154 = vld [vmem:[%s1146 + $0x1c] sm:$0xf]
  %s1155 = scalar_lea.vmem %s9, 1
  %v1156 = vld [vmem:[%s1155] sm:$0x1]
  %v1158 = vlaneseq
  %v1159 = vshrl.u32 %v1158, 7
  %v1160 = vsub.s32 0, %v1159
  %v1161 = vrot.slane %v1156, %v1160
  %v1171 = vunpack.c.l.b16 %v1147
  %v1172 = vunpack.c.l.b16 %v1148
  %v1173 = vunpack.c.l.b16 %v1149
  %v1174 = vunpack.c.l.b16 %v1150
  %v1175 = vunpack.c.l.b16 %v1151
  %v1176 = vunpack.c.l.b16 %v1152
  %v1177 = vunpack.c.l.b16 %v1153
  %v1178 = vunpack.c.l.b16 %v1154
  %v1179 = vpack.c.b16 %v1172, %v1171
  %v1180 = vpack.c.b16 %v1174, %v1173
  %v1181 = vpack.c.b16 %v1176, %v1175
  %v1182 = vpack.c.b16 %v1178, %v1177
  %1187 = vmatprep.subr.bf16.mxu0 0
  %1188 = vmatpush1.bf16.msra.mxu0 0
  %1189 = vmatprep.subr.bf16.mxu0 0
  %1190 = vmatpush1.bf16.msra.mxu0 0
  %1191 = vmatprep.subr.bf16.mxu0 0
  %1192 = vmatpush1.bf16.msra.mxu0 0
  %1193 = vmatprep.subr.bf16.mxu0 0
  %1194 = vmatpush1.bf16.msra.mxu0 0
  %1195 = vmatprep.subr.bf16.mxu0 0
  %1196 = vmatpush1.bf16.msra.mxu0 %v1182
  %1197 = vmatprep.subr.bf16.mxu0 0
  %1198 = vmatpush1.bf16.msra.mxu0 %v1181
  %1199 = vmatprep.subr.bf16.mxu0 0
  %1200 = vmatpush1.bf16.msra.mxu0 %v1180
  %1201 = vmatprep.subr.bf16.mxu0 0
  %1202 = vmatpush1.bf16.msra.mxu0 %v1179
  %1203 = vmatprep.subr.bf16.mxu0 0
  %1204 = vmatpush2.bf16.msra.mxu0 0
  %1205 = vmatprep.subr.bf16.mxu0 0
  %1206 = vmatpush2.bf16.msra.mxu0 0
  %1207 = vmatprep.subr.bf16.mxu0 0
  %1208 = vmatpush2.bf16.msra.mxu0 0
  %1209 = vmatprep.subr.bf16.mxu0 0
  %1210 = vmatpush2.bf16.msra.mxu0 0
  %1211 = vmatprep.subr.bf16.mxu0 0
  %1212 = vmatpush2.bf16.msra.mxu0 0
  %1213 = vmatprep.subr.bf16.mxu0 0
  %1214 = vmatpush2.bf16.msra.mxu0 0
  %1215 = vmatprep.subr.bf16.mxu0 0
  %1216 = vmatpush2.bf16.msra.mxu0 0
  %1217 = vmatprep.subr.bf16.mxu0 0
  %1218 = vmatpush2.bf16.msra.mxu0 0
  %1219 = vmatprep.mubr.bf16.mxu0 0
  %1220 = vmatmul.mubr.bf16.gmra.mxu0 %v730
  %v1221 = vpop.f32.mrf.mxu0
  %v1222 = vadd.f32 %v1161, %v1221
  %v1223 = vpop.f32.mrf.mxu0
  %v1224 = vpop.f32.mrf.mxu0
  %v1225 = vadd.f32 %v1161, %v1224
  %v1226 = vpop.f32.mrf.mxu0
  %1227 = vdwg.mxu0
  %s1228 = scalar_lea.vmem %s7, 32
  %v1229 = vld [vmem:[%s1228] sm:$0xf]
  %v1230 = vld [vmem:[%s1228 + $0x4] sm:$0xf]
  %v1231 = vld [vmem:[%s1228 + $0x8] sm:$0xf]
  %v1232 = vld [vmem:[%s1228 + $0xc] sm:$0xf]
  %v1233 = vld [vmem:[%s1228 + $0x10] sm:$0xf]
  %v1234 = vld [vmem:[%s1228 + $0x14] sm:$0xf]
  %v1235 = vld [vmem:[%s1228 + $0x18] sm:$0xf]
  %v1236 = vld [vmem:[%s1228 + $0x1c] sm:$0xf]
  %s1237 = scalar_lea.vmem %s10, 1
  %v1238 = vld [vmem:[%s1237] sm:$0x1]
  %v1240 = vlaneseq
  %v1241 = vshrl.u32 %v1240, 7
  %v1242 = vsub.s32 0, %v1241
  %v1243 = vrot.slane %v1238, %v1242
  %v1253 = vunpack.c.l.b16 %v1229
  %v1254 = vunpack.c.l.b16 %v1230
  %v1255 = vunpack.c.l.b16 %v1231
  %v1256 = vunpack.c.l.b16 %v1232
  %v1257 = vunpack.c.l.b16 %v1233
  %v1258 = vunpack.c.l.b16 %v1234
  %v1259 = vunpack.c.l.b16 %v1235
  %v1260 = vunpack.c.l.b16 %v1236
  %v1261 = vpack.c.b16 %v1254, %v1253
  %v1262 = vpack.c.b16 %v1256, %v1255
  %v1263 = vpack.c.b16 %v1258, %v1257
  %v1264 = vpack.c.b16 %v1260, %v1259
  %1269 = vmatprep.subr.bf16.mxu0 0
  %1270 = vmatpush1.bf16.msra.mxu0 0
  %1271 = vmatprep.subr.bf16.mxu0 0
  %1272 = vmatpush1.bf16.msra.mxu0 0
  %1273 = vmatprep.subr.bf16.mxu0 0
  %1274 = vmatpush1.bf16.msra.mxu0 0
  %1275 = vmatprep.subr.bf16.mxu0 0
  %1276 = vmatpush1.bf16.msra.mxu0 0
  %1277 = vmatprep.subr.bf16.mxu0 0
  %1278 = vmatpush1.bf16.msra.mxu0 %v1264
  %1279 = vmatprep.subr.bf16.mxu0 0
  %1280 = vmatpush1.bf16.msra.mxu0 %v1263
  %1281 = vmatprep.subr.bf16.mxu0 0
  %1282 = vmatpush1.bf16.msra.mxu0 %v1262
  %1283 = vmatprep.subr.bf16.mxu0 0
  %1284 = vmatpush1.bf16.msra.mxu0 %v1261
  %1285 = vmatprep.subr.bf16.mxu0 0
  %1286 = vmatpush2.bf16.msra.mxu0 0
  %1287 = vmatprep.subr.bf16.mxu0 0
  %1288 = vmatpush2.bf16.msra.mxu0 0
  %1289 = vmatprep.subr.bf16.mxu0 0
  %1290 = vmatpush2.bf16.msra.mxu0 0
  %1291 = vmatprep.subr.bf16.mxu0 0
  %1292 = vmatpush2.bf16.msra.mxu0 0
  %1293 = vmatprep.subr.bf16.mxu0 0
  %1294 = vmatpush2.bf16.msra.mxu0 0
  %1295 = vmatprep.subr.bf16.mxu0 0
  %1296 = vmatpush2.bf16.msra.mxu0 0
  %1297 = vmatprep.subr.bf16.mxu0 0
  %1298 = vmatpush2.bf16.msra.mxu0 0
  %1299 = vmatprep.subr.bf16.mxu0 0
  %1300 = vmatpush2.bf16.msra.mxu0 0
  %1301 = vmatprep.mubr.bf16.mxu0 0
  %1302 = vmatmul.mubr.bf16.gmra.mxu0 %v730
  %v1303 = vpop.f32.mrf.mxu0
  %v1304 = vadd.f32 %v1243, %v1303
  %v1305 = vpop.f32.mrf.mxu0
  %v1306 = vpop.f32.mrf.mxu0
  %v1307 = vadd.f32 %v1243, %v1306
  %v1308 = vpop.f32.mrf.mxu0
  %1309 = vdwg.mxu0
  %v1310 = vpack.c.bf16 %v1143, %v1140
  %v1311 = vpack.c.bf16 %v1225, %v1222
  %v1313 = vsel %vm935, %v1310, 0
  %v1316 = vsel %vm935, %v1311, 0
  %1318 = vmatprep.subr.bf16.mxu0 0
  %1319 = vmatpush1.bf16.xpose.msra.mxu0 0
  %1320 = vmatprep.subr.bf16.mxu0 0
  %1321 = vmatpush1.bf16.xpose.msra.mxu0 0
  %1322 = vmatprep.subr.bf16.mxu0 0
  %1323 = vmatpush1.bf16.xpose.msra.mxu0 0
  %1324 = vmatprep.subr.bf16.mxu0 0
  %1325 = vmatpush1.bf16.xpose.msra.mxu0 0
  %1326 = vmatprep.subr.bf16.mxu0 0
  %1327 = vmatpush1.bf16.xpose.msra.mxu0 0
  %1328 = vmatprep.subr.bf16.mxu0 0
  %1329 = vmatpush1.bf16.xpose.msra.mxu0 0
  %1330 = vmatprep.subr.bf16.mxu0 0
  %1331 = vmatpush1.bf16.xpose.msra.mxu0 0
  %1332 = vmatprep.subr.bf16.mxu0 0
  %1333 = vmatpush1.bf16.xpose.msra.mxu0 %v1316
  %1334 = vmatprep.subr.bf16.mxu0 0
  %1335 = vmatpush2.bf16.xpose.msra.mxu0 0
  %1336 = vmatprep.subr.bf16.mxu0 0
  %1337 = vmatpush2.bf16.xpose.msra.mxu0 0
  %1338 = vmatprep.subr.bf16.mxu0 0
  %1339 = vmatpush2.bf16.xpose.msra.mxu0 0
  %1340 = vmatprep.subr.bf16.mxu0 0
  %1341 = vmatpush2.bf16.xpose.msra.mxu0 0
  %1342 = vmatprep.subr.bf16.mxu0 0
  %1343 = vmatpush2.bf16.xpose.msra.mxu0 0
  %1344 = vmatprep.subr.bf16.mxu0 0
  %1345 = vmatpush2.bf16.xpose.msra.mxu0 0
  %1346 = vmatprep.subr.bf16.mxu0 0
  %1347 = vmatpush2.bf16.xpose.msra.mxu0 0
  %1348 = vmatprep.subr.bf16.mxu0 0
  %1349 = vmatpush2.bf16.xpose.msra.mxu0 0
  %1350 = vmatprep.mubr.bf16.mxu0 0
  %1351 = vmatmul.mubr.bf16.gmra.mxu0 %v1313
  %v1352 = vpop.f32.mrf.mxu0
  %v1353 = vadd.f32 0.0, %v1352
  %v1354 = vpop.f32.mrf.mxu0
  %v1355 = vpop.f32.mrf.mxu0
  %v1356 = vadd.f32 0.0, %v1355
  %v1357 = vpop.f32.mrf.mxu0
  %1358 = vdwg.mxu0
  %v1359 = vmul.f32 %v1353, 0.25
  %v1360 = vmul.f32 %v1356, 0.25
  %v1361 = vadd.f32 %v1359, %v94
  %v1362 = vadd.f32 %v1360, %v95
  %v1363 = vsel %vm987, %v1361, -inf
  %1364 = vmax.xlane.f32.xlu0 %v1363
  %v1365 = vpop.xlane.xlu0 %1364
  %v1366 = vsel %vm991, %v1362, -inf
  %1367 = vmax.xlane.f32.xlu0 %v1366
  %v1368 = vpop.xlane.xlu0 %1367
  %v1369 = vsub.f32 %v1361, %v1365
  %v1370 = vsub.f32 %v1362, %v1368
  %v1371 = vmul.f32 %v1369, 1.442695
  %v1372 = vpow.pop %v1371
  %v1373 = vmul.f32 %v1370, 1.442695
  %v1374 = vpow.pop %v1373
  %v1375 = vsel %vm987, %v1372, 0.0
  %1376 = vadd.xlane.f32.xlu0 %v1375
  %v1377 = vpop.xlane.xlu0 %1376
  %v1378 = vsel %vm991, %v1374, 0.0
  %1379 = vadd.xlane.f32.xlu0 %v1378
  %v1380 = vpop.xlane.xlu0 %1379
  %v1381 = vrcp.pop %v1377
  %v1382 = vrcp.pop %v1380
  %v1383 = vmul.f32 %v1372, %v1381
  %v1384 = vmul.f32 %v1374, %v1382
  %v1385 = vpack.c.bf16 %v1384, %v1383
  %v1386 = vpack.c.bf16 %v1307, %v1304
  %v1388 = vsel %vm987, %v1385, 0
  %v1391 = vsel %vm1016, %v1386, 0
  %1393 = vmatprep.subr.bf16.mxu0 0
  %1394 = vmatpush1.bf16.msra.mxu0 0
  %1395 = vmatprep.subr.bf16.mxu0 0
  %1396 = vmatpush1.bf16.msra.mxu0 0
  %1397 = vmatprep.subr.bf16.mxu0 0
  %1398 = vmatpush1.bf16.msra.mxu0 0
  %1399 = vmatprep.subr.bf16.mxu0 0
  %1400 = vmatpush1.bf16.msra.mxu0 0
  %1401 = vmatprep.subr.bf16.mxu0 0
  %1402 = vmatpush1.bf16.msra.mxu0 0
  %1403 = vmatprep.subr.bf16.mxu0 0
  %1404 = vmatpush1.bf16.msra.mxu0 0
  %1405 = vmatprep.subr.bf16.mxu0 0
  %1406 = vmatpush1.bf16.msra.mxu0 0
  %1407 = vmatprep.subr.bf16.mxu0 0
  %1408 = vmatpush1.bf16.msra.mxu0 %v1391
  %1409 = vmatprep.subr.bf16.mxu0 0
  %1410 = vmatpush2.bf16.msra.mxu0 0
  %1411 = vmatprep.subr.bf16.mxu0 0
  %1412 = vmatpush2.bf16.msra.mxu0 0
  %1413 = vmatprep.subr.bf16.mxu0 0
  %1414 = vmatpush2.bf16.msra.mxu0 0
  %1415 = vmatprep.subr.bf16.mxu0 0
  %1416 = vmatpush2.bf16.msra.mxu0 0
  %1417 = vmatprep.subr.bf16.mxu0 0
  %1418 = vmatpush2.bf16.msra.mxu0 0
  %1419 = vmatprep.subr.bf16.mxu0 0
  %1420 = vmatpush2.bf16.msra.mxu0 0
  %1421 = vmatprep.subr.bf16.mxu0 0
  %1422 = vmatpush2.bf16.msra.mxu0 0
  %1423 = vmatprep.subr.bf16.mxu0 0
  %1424 = vmatpush2.bf16.msra.mxu0 0
  %1425 = vmatprep.mubr.bf16.mxu0 0
  %1426 = vmatmul.mubr.bf16.gmra.mxu0 %v1388
  %v1427 = vpop.f32.mrf.mxu0
  %v1428 = vadd.f32 0.0, %v1427
  %v1429 = vpop.f32.mrf.mxu0
  %v1430 = vpop.f32.mrf.mxu0
  %v1431 = vadd.f32 0.0, %v1430
  %v1432 = vpop.f32.mrf.mxu0
  %1433 = vdwg.mxu0
  %s1434 = scalar_lea.vmem %s11, 8
  %v1435 = vld [vmem:[%s1434] sm:$0xf]
  %v1436 = vld [vmem:[%s1434 + $0x4] sm:$0xf]
  %v1437 = vpack.c.bf16 %v1431, %v1428
  %v1440 = vunpack.c.l.b16 %v1435
  %v1441 = vunpack.c.l.b16 %v1436
  %v1442 = vpack.c.b16 %v1441, %v1440
  %v1445 = vsel %vm935, %v1437, 0
  %1447 = vmatprep.subr.bf16.mxu0 0
  %1448 = vmatpush1.bf16.msra.mxu0 0
  %1449 = vmatprep.subr.bf16.mxu0 0
  %1450 = vmatpush1.bf16.msra.mxu0 0
  %1451 = vmatprep.subr.bf16.mxu0 0
  %1452 = vmatpush1.bf16.msra.mxu0 0
  %1453 = vmatprep.subr.bf16.mxu0 0
  %1454 = vmatpush1.bf16.msra.mxu0 0
  %1455 = vmatprep.subr.bf16.mxu0 0
  %1456 = vmatpush1.bf16.msra.mxu0 0
  %1457 = vmatprep.subr.bf16.mxu0 0
  %1458 = vmatpush1.bf16.msra.mxu0 0
  %1459 = vmatprep.subr.bf16.mxu0 0
  %1460 = vmatpush1.bf16.msra.mxu0 0
  %1461 = vmatprep.subr.bf16.mxu0 0
  %1462 = vmatpush1.bf16.msra.mxu0 %v1442
  %1463 = vmatprep.subr.bf16.mxu0 0
  %1464 = vmatpush2.bf16.msra.mxu0 0
  %1465 = vmatprep.subr.bf16.mxu0 0
  %1466 = vmatpush2.bf16.msra.mxu0 0
  %1467 = vmatprep.subr.bf16.mxu0 0
  %1468 = vmatpush2.bf16.msra.mxu0 0
  %1469 = vmatprep.subr.bf16.mxu0 0
  %1470 = vmatpush2.bf16.msra.mxu0 0
  %1471 = vmatprep.subr.bf16.mxu0 0
  %1472 = vmatpush2.bf16.msra.mxu0 0
  %1473 = vmatprep.subr.bf16.mxu0 0
  %1474 = vmatpush2.bf16.msra.mxu0 0
  %1475 = vmatprep.subr.bf16.mxu0 0
  %1476 = vmatpush2.bf16.msra.mxu0 0
  %1477 = vmatprep.subr.bf16.mxu0 0
  %1478 = vmatpush2.bf16.msra.mxu0 0
  %1479 = vmatprep.mubr.bf16.mxu0 0
  %1480 = vmatmul.mubr.bf16.gmra.mxu0 %v1445
  %v1481 = vpop.f32.mrf.mxu0
  %v1482 = vadd.f32 0.0, %v1481
  %v1483 = vpop.f32.mrf.mxu0
  %v1484 = vpop.f32.mrf.mxu0
  %v1485 = vadd.f32 0.0, %v1484
  %v1486 = vpop.f32.mrf.mxu0
  %1487 = vdwg.mxu0
  %s1488 = scalar_lea.vmem %s5, 64
  %v1489 = vld [vmem:[%s1488] sm:$0xf]
  %v1490 = vld [vmem:[%s1488 + $0x4] sm:$0xf]
  %v1491 = vld [vmem:[%s1488 + $0x8] sm:$0xf]
  %v1492 = vld [vmem:[%s1488 + $0xc] sm:$0xf]
  %v1493 = vld [vmem:[%s1488 + $0x10] sm:$0xf]
  %v1494 = vld [vmem:[%s1488 + $0x14] sm:$0xf]
  %v1495 = vld [vmem:[%s1488 + $0x18] sm:$0xf]
  %v1496 = vld [vmem:[%s1488 + $0x1c] sm:$0xf]
  %s1497 = scalar_lea.vmem %s8, 2
  %v1498 = vld [vmem:[%s1497] sm:$0x1]
  %v1500 = vlaneseq
  %v1501 = vshrl.u32 %v1500, 7
  %v1502 = vsub.s32 0, %v1501
  %v1503 = vrot.slane %v1498, %v1502
  %v1513 = vunpack.c.l.b16 %v1489
  %v1514 = vunpack.c.l.b16 %v1490
  %v1515 = vunpack.c.l.b16 %v1491
  %v1516 = vunpack.c.l.b16 %v1492
  %v1517 = vunpack.c.l.b16 %v1493
  %v1518 = vunpack.c.l.b16 %v1494
  %v1519 = vunpack.c.l.b16 %v1495
  %v1520 = vunpack.c.l.b16 %v1496
  %v1521 = vpack.c.b16 %v1514, %v1513
  %v1522 = vpack.c.b16 %v1516, %v1515
  %v1523 = vpack.c.b16 %v1518, %v1517
  %v1524 = vpack.c.b16 %v1520, %v1519
  %1529 = vmatprep.subr.bf16.mxu0 0
  %1530 = vmatpush1.bf16.msra.mxu0 0
  %1531 = vmatprep.subr.bf16.mxu0 0
  %1532 = vmatpush1.bf16.msra.mxu0 0
  %1533 = vmatprep.subr.bf16.mxu0 0
  %1534 = vmatpush1.bf16.msra.mxu0 0
  %1535 = vmatprep.subr.bf16.mxu0 0
  %1536 = vmatpush1.bf16.msra.mxu0 0
  %1537 = vmatprep.subr.bf16.mxu0 0
  %1538 = vmatpush1.bf16.msra.mxu0 %v1524
  %1539 = vmatprep.subr.bf16.mxu0 0
  %1540 = vmatpush1.bf16.msra.mxu0 %v1523
  %1541 = vmatprep.subr.bf16.mxu0 0
  %1542 = vmatpush1.bf16.msra.mxu0 %v1522
  %1543 = vmatprep.subr.bf16.mxu0 0
  %1544 = vmatpush1.bf16.msra.mxu0 %v1521
  %1545 = vmatprep.subr.bf16.mxu0 0
  %1546 = vmatpush2.bf16.msra.mxu0 0
  %1547 = vmatprep.subr.bf16.mxu0 0
  %1548 = vmatpush2.bf16.msra.mxu0 0
  %1549 = vmatprep.subr.bf16.mxu0 0
  %1550 = vmatpush2.bf16.msra.mxu0 0
  %1551 = vmatprep.subr.bf16.mxu0 0
  %1552 = vmatpush2.bf16.msra.mxu0 0
  %1553 = vmatprep.subr.bf16.mxu0 0
  %1554 = vmatpush2.bf16.msra.mxu0 0
  %1555 = vmatprep.subr.bf16.mxu0 0
  %1556 = vmatpush2.bf16.msra.mxu0 0
  %1557 = vmatprep.subr.bf16.mxu0 0
  %1558 = vmatpush2.bf16.msra.mxu0 0
  %1559 = vmatprep.subr.bf16.mxu0 0
  %1560 = vmatpush2.bf16.msra.mxu0 0
  %1561 = vmatprep.mubr.bf16.mxu0 0
  %1562 = vmatmul.mubr.bf16.gmra.mxu0 %v730
  %v1563 = vpop.f32.mrf.mxu0
  %v1564 = vadd.f32 %v1503, %v1563
  %v1565 = vpop.f32.mrf.mxu0
  %v1566 = vpop.f32.mrf.mxu0
  %v1567 = vadd.f32 %v1503, %v1566
  %v1568 = vpop.f32.mrf.mxu0
  %1569 = vdwg.mxu0
  %s1570 = scalar_lea.vmem %s6, 64
  %v1571 = vld [vmem:[%s1570] sm:$0xf]
  %v1572 = vld [vmem:[%s1570 + $0x4] sm:$0xf]
  %v1573 = vld [vmem:[%s1570 + $0x8] sm:$0xf]
  %v1574 = vld [vmem:[%s1570 + $0xc] sm:$0xf]
  %v1575 = vld [vmem:[%s1570 + $0x10] sm:$0xf]
  %v1576 = vld [vmem:[%s1570 + $0x14] sm:$0xf]
  %v1577 = vld [vmem:[%s1570 + $0x18] sm:$0xf]
  %v1578 = vld [vmem:[%s1570 + $0x1c] sm:$0xf]
  %s1579 = scalar_lea.vmem %s9, 2
  %v1580 = vld [vmem:[%s1579] sm:$0x1]
  %v1582 = vlaneseq
  %v1583 = vshrl.u32 %v1582, 7
  %v1584 = vsub.s32 0, %v1583
  %v1585 = vrot.slane %v1580, %v1584
  %v1595 = vunpack.c.l.b16 %v1571
  %v1596 = vunpack.c.l.b16 %v1572
  %v1597 = vunpack.c.l.b16 %v1573
  %v1598 = vunpack.c.l.b16 %v1574
  %v1599 = vunpack.c.l.b16 %v1575
  %v1600 = vunpack.c.l.b16 %v1576
  %v1601 = vunpack.c.l.b16 %v1577
  %v1602 = vunpack.c.l.b16 %v1578
  %v1603 = vpack.c.b16 %v1596, %v1595
  %v1604 = vpack.c.b16 %v1598, %v1597
  %v1605 = vpack.c.b16 %v1600, %v1599
  %v1606 = vpack.c.b16 %v1602, %v1601
  %1611 = vmatprep.subr.bf16.mxu0 0
  %1612 = vmatpush1.bf16.msra.mxu0 0
  %1613 = vmatprep.subr.bf16.mxu0 0
  %1614 = vmatpush1.bf16.msra.mxu0 0
  %1615 = vmatprep.subr.bf16.mxu0 0
  %1616 = vmatpush1.bf16.msra.mxu0 0
  %1617 = vmatprep.subr.bf16.mxu0 0
  %1618 = vmatpush1.bf16.msra.mxu0 0
  %1619 = vmatprep.subr.bf16.mxu0 0
  %1620 = vmatpush1.bf16.msra.mxu0 %v1606
  %1621 = vmatprep.subr.bf16.mxu0 0
  %1622 = vmatpush1.bf16.msra.mxu0 %v1605
  %1623 = vmatprep.subr.bf16.mxu0 0
  %1624 = vmatpush1.bf16.msra.mxu0 %v1604
  %1625 = vmatprep.subr.bf16.mxu0 0
  %1626 = vmatpush1.bf16.msra.mxu0 %v1603
  %1627 = vmatprep.subr.bf16.mxu0 0
  %1628 = vmatpush2.bf16.msra.mxu0 0
  %1629 = vmatprep.subr.bf16.mxu0 0
  %1630 = vmatpush2.bf16.msra.mxu0 0
  %1631 = vmatprep.subr.bf16.mxu0 0
  %1632 = vmatpush2.bf16.msra.mxu0 0
  %1633 = vmatprep.subr.bf16.mxu0 0
  %1634 = vmatpush2.bf16.msra.mxu0 0
  %1635 = vmatprep.subr.bf16.mxu0 0
  %1636 = vmatpush2.bf16.msra.mxu0 0
  %1637 = vmatprep.subr.bf16.mxu0 0
  %1638 = vmatpush2.bf16.msra.mxu0 0
  %1639 = vmatprep.subr.bf16.mxu0 0
  %1640 = vmatpush2.bf16.msra.mxu0 0
  %1641 = vmatprep.subr.bf16.mxu0 0
  %1642 = vmatpush2.bf16.msra.mxu0 0
  %1643 = vmatprep.mubr.bf16.mxu0 0
  %1644 = vmatmul.mubr.bf16.gmra.mxu0 %v730
  %v1645 = vpop.f32.mrf.mxu0
  %v1646 = vadd.f32 %v1585, %v1645
  %v1647 = vpop.f32.mrf.mxu0
  %v1648 = vpop.f32.mrf.mxu0
  %v1649 = vadd.f32 %v1585, %v1648
  %v1650 = vpop.f32.mrf.mxu0
  %1651 = vdwg.mxu0
  %s1652 = scalar_lea.vmem %s7, 64
  %v1653 = vld [vmem:[%s1652] sm:$0xf]
  %v1654 = vld [vmem:[%s1652 + $0x4] sm:$0xf]
  %v1655 = vld [vmem:[%s1652 + $0x8] sm:$0xf]
  %v1656 = vld [vmem:[%s1652 + $0xc] sm:$0xf]
  %v1657 = vld [vmem:[%s1652 + $0x10] sm:$0xf]
  %v1658 = vld [vmem:[%s1652 + $0x14] sm:$0xf]
  %v1659 = vld [vmem:[%s1652 + $0x18] sm:$0xf]
  %v1660 = vld [vmem:[%s1652 + $0x1c] sm:$0xf]
  %s1661 = scalar_lea.vmem %s10, 2
  %v1662 = vld [vmem:[%s1661] sm:$0x1]
  %v1664 = vlaneseq
  %v1665 = vshrl.u32 %v1664, 7
  %v1666 = vsub.s32 0, %v1665
  %v1667 = vrot.slane %v1662, %v1666
  %v1677 = vunpack.c.l.b16 %v1653
  %v1678 = vunpack.c.l.b16 %v1654
  %v1679 = vunpack.c.l.b16 %v1655
  %v1680 = vunpack.c.l.b16 %v1656
  %v1681 = vunpack.c.l.b16 %v1657
  %v1682 = vunpack.c.l.b16 %v1658
  %v1683 = vunpack.c.l.b16 %v1659
  %v1684 = vunpack.c.l.b16 %v1660
  %v1685 = vpack.c.b16 %v1678, %v1677
  %v1686 = vpack.c.b16 %v1680, %v1679
  %v1687 = vpack.c.b16 %v1682, %v1681
  %v1688 = vpack.c.b16 %v1684, %v1683
  %1693 = vmatprep.subr.bf16.mxu0 0
  %1694 = vmatpush1.bf16.msra.mxu0 0
  %1695 = vmatprep.subr.bf16.mxu0 0
  %1696 = vmatpush1.bf16.msra.mxu0 0
  %1697 = vmatprep.subr.bf16.mxu0 0
  %1698 = vmatpush1.bf16.msra.mxu0 0
  %1699 = vmatprep.subr.bf16.mxu0 0
  %1700 = vmatpush1.bf16.msra.mxu0 0
  %1701 = vmatprep.subr.bf16.mxu0 0
  %1702 = vmatpush1.bf16.msra.mxu0 %v1688
  %1703 = vmatprep.subr.bf16.mxu0 0
  %1704 = vmatpush1.bf16.msra.mxu0 %v1687
  %1705 = vmatprep.subr.bf16.mxu0 0
  %1706 = vmatpush1.bf16.msra.mxu0 %v1686
  %1707 = vmatprep.subr.bf16.mxu0 0
  %1708 = vmatpush1.bf16.msra.mxu0 %v1685
  %1709 = vmatprep.subr.bf16.mxu0 0
  %1710 = vmatpush2.bf16.msra.mxu0 0
  %1711 = vmatprep.subr.bf16.mxu0 0
  %1712 = vmatpush2.bf16.msra.mxu0 0
  %1713 = vmatprep.subr.bf16.mxu0 0
  %1714 = vmatpush2.bf16.msra.mxu0 0
  %1715 = vmatprep.subr.bf16.mxu0 0
  %1716 = vmatpush2.bf16.msra.mxu0 0
  %1717 = vmatprep.subr.bf16.mxu0 0
  %1718 = vmatpush2.bf16.msra.mxu0 0
  %1719 = vmatprep.subr.bf16.mxu0 0
  %1720 = vmatpush2.bf16.msra.mxu0 0
  %1721 = vmatprep.subr.bf16.mxu0 0
  %1722 = vmatpush2.bf16.msra.mxu0 0
  %1723 = vmatprep.subr.bf16.mxu0 0
  %1724 = vmatpush2.bf16.msra.mxu0 0
  %1725 = vmatprep.mubr.bf16.mxu0 0
  %1726 = vmatmul.mubr.bf16.gmra.mxu0 %v730
  %v1727 = vpop.f32.mrf.mxu0
  %v1728 = vadd.f32 %v1667, %v1727
  %v1729 = vpop.f32.mrf.mxu0
  %v1730 = vpop.f32.mrf.mxu0
  %v1731 = vadd.f32 %v1667, %v1730
  %v1732 = vpop.f32.mrf.mxu0
  %1733 = vdwg.mxu0
  %v1734 = vpack.c.bf16 %v1567, %v1564
  %v1735 = vpack.c.bf16 %v1649, %v1646
  %v1737 = vsel %vm935, %v1734, 0
  %v1740 = vsel %vm935, %v1735, 0
  %1742 = vmatprep.subr.bf16.mxu0 0
  %1743 = vmatpush1.bf16.xpose.msra.mxu0 0
  %1744 = vmatprep.subr.bf16.mxu0 0
  %1745 = vmatpush1.bf16.xpose.msra.mxu0 0
  %1746 = vmatprep.subr.bf16.mxu0 0
  %1747 = vmatpush1.bf16.xpose.msra.mxu0 0
  %1748 = vmatprep.subr.bf16.mxu0 0
  %1749 = vmatpush1.bf16.xpose.msra.mxu0 0
  %1750 = vmatprep.subr.bf16.mxu0 0
  %1751 = vmatpush1.bf16.xpose.msra.mxu0 0
  %1752 = vmatprep.subr.bf16.mxu0 0
  %1753 = vmatpush1.bf16.xpose.msra.mxu0 0
  %1754 = vmatprep.subr.bf16.mxu0 0
  %1755 = vmatpush1.bf16.xpose.msra.mxu0 0
  %1756 = vmatprep.subr.bf16.mxu0 0
  %1757 = vmatpush1.bf16.xpose.msra.mxu0 %v1740
  %1758 = vmatprep.subr.bf16.mxu0 0
  %1759 = vmatpush2.bf16.xpose.msra.mxu0 0
  %1760 = vmatprep.subr.bf16.mxu0 0
  %1761 = vmatpush2.bf16.xpose.msra.mxu0 0
  %1762 = vmatprep.subr.bf16.mxu0 0
  %1763 = vmatpush2.bf16.xpose.msra.mxu0 0
  %1764 = vmatprep.subr.bf16.mxu0 0
  %1765 = vmatpush2.bf16.xpose.msra.mxu0 0
  %1766 = vmatprep.subr.bf16.mxu0 0
  %1767 = vmatpush2.bf16.xpose.msra.mxu0 0
  %1768 = vmatprep.subr.bf16.mxu0 0
  %1769 = vmatpush2.bf16.xpose.msra.mxu0 0
  %1770 = vmatprep.subr.bf16.mxu0 0
  %1771 = vmatpush2.bf16.xpose.msra.mxu0 0
  %1772 = vmatprep.subr.bf16.mxu0 0
  %1773 = vmatpush2.bf16.xpose.msra.mxu0 0
  %1774 = vmatprep.mubr.bf16.mxu0 0
  %1775 = vmatmul.mubr.bf16.gmra.mxu0 %v1737
  %v1776 = vpop.f32.mrf.mxu0
  %v1777 = vadd.f32 0.0, %v1776
  %v1778 = vpop.f32.mrf.mxu0
  %v1779 = vpop.f32.mrf.mxu0
  %v1780 = vadd.f32 0.0, %v1779
  %v1781 = vpop.f32.mrf.mxu0
  %1782 = vdwg.mxu0
  %v1783 = vmul.f32 %v1777, 0.25
  %v1784 = vmul.f32 %v1780, 0.25
  %v1785 = vadd.f32 %v1783, %v94
  %v1786 = vadd.f32 %v1784, %v95
  %v1787 = vsel %vm987, %v1785, -inf
  %1788 = vmax.xlane.f32.xlu0 %v1787
  %v1789 = vpop.xlane.xlu0 %1788
  %v1790 = vsel %vm991, %v1786, -inf
  %1791 = vmax.xlane.f32.xlu0 %v1790
  %v1792 = vpop.xlane.xlu0 %1791
  %v1793 = vsub.f32 %v1785, %v1789
  %v1794 = vsub.f32 %v1786, %v1792
  %v1795 = vmul.f32 %v1793, 1.442695
  %v1796 = vpow.pop %v1795
  %v1797 = vmul.f32 %v1794, 1.442695
  %v1798 = vpow.pop %v1797
  %v1799 = vsel %vm987, %v1796, 0.0
  %1800 = vadd.xlane.f32.xlu0 %v1799
  %v1801 = vpop.xlane.xlu0 %1800
  %v1802 = vsel %vm991, %v1798, 0.0
  %1803 = vadd.xlane.f32.xlu0 %v1802
  %v1804 = vpop.xlane.xlu0 %1803
  %v1805 = vrcp.pop %v1801
  %v1806 = vrcp.pop %v1804
  %v1807 = vmul.f32 %v1796, %v1805
  %v1808 = vmul.f32 %v1798, %v1806
  %v1809 = vpack.c.bf16 %v1808, %v1807
  %v1810 = vpack.c.bf16 %v1731, %v1728
  %v1812 = vsel %vm987, %v1809, 0
  %v1815 = vsel %vm1016, %v1810, 0
  %1817 = vmatprep.subr.bf16.mxu0 0
  %1818 = vmatpush1.bf16.msra.mxu0 0
  %1819 = vmatprep.subr.bf16.mxu0 0
  %1820 = vmatpush1.bf16.msra.mxu0 0
  %1821 = vmatprep.subr.bf16.mxu0 0
  %1822 = vmatpush1.bf16.msra.mxu0 0
  %1823 = vmatprep.subr.bf16.mxu0 0
  %1824 = vmatpush1.bf16.msra.mxu0 0
  %1825 = vmatprep.subr.bf16.mxu0 0
  %1826 = vmatpush1.bf16.msra.mxu0 0
  %1827 = vmatprep.subr.bf16.mxu0 0
  %1828 = vmatpush1.bf16.msra.mxu0 0
  %1829 = vmatprep.subr.bf16.mxu0 0
  %1830 = vmatpush1.bf16.msra.mxu0 0
  %1831 = vmatprep.subr.bf16.mxu0 0
  %1832 = vmatpush1.bf16.msra.mxu0 %v1815
  %1833 = vmatprep.subr.bf16.mxu0 0
  %1834 = vmatpush2.bf16.msra.mxu0 0
  %1835 = vmatprep.subr.bf16.mxu0 0
  %1836 = vmatpush2.bf16.msra.mxu0 0
  %1837 = vmatprep.subr.bf16.mxu0 0
  %1838 = vmatpush2.bf16.msra.mxu0 0
  %1839 = vmatprep.subr.bf16.mxu0 0
  %1840 = vmatpush2.bf16.msra.mxu0 0
  %1841 = vmatprep.subr.bf16.mxu0 0
  %1842 = vmatpush2.bf16.msra.mxu0 0
  %1843 = vmatprep.subr.bf16.mxu0 0
  %1844 = vmatpush2.bf16.msra.mxu0 0
  %1845 = vmatprep.subr.bf16.mxu0 0
  %1846 = vmatpush2.bf16.msra.mxu0 0
  %1847 = vmatprep.subr.bf16.mxu0 0
  %1848 = vmatpush2.bf16.msra.mxu0 0
  %1849 = vmatprep.mubr.bf16.mxu0 0
  %1850 = vmatmul.mubr.bf16.gmra.mxu0 %v1812
  %v1851 = vpop.f32.mrf.mxu0
  %v1852 = vadd.f32 0.0, %v1851
  %v1853 = vpop.f32.mrf.mxu0
  %v1854 = vpop.f32.mrf.mxu0
  %v1855 = vadd.f32 0.0, %v1854
  %v1856 = vpop.f32.mrf.mxu0
  %1857 = vdwg.mxu0
  %s1858 = scalar_lea.vmem %s11, 16
  %v1859 = vld [vmem:[%s1858] sm:$0xf]
  %v1860 = vld [vmem:[%s1858 + $0x4] sm:$0xf]
  %v1861 = vpack.c.bf16 %v1855, %v1852
  %s1862 = scalar_lea.vmem %s5, 96
  %v1863 = vld [vmem:[%s1862] sm:$0xf]
  %v1864 = vld [vmem:[%s1862 + $0x4] sm:$0xf]
  %v1865 = vld [vmem:[%s1862 + $0x8] sm:$0xf]
  %v1866 = vld [vmem:[%s1862 + $0xc] sm:$0xf]
  %v1867 = vld [vmem:[%s1862 + $0x10] sm:$0xf]
  %v1868 = vld [vmem:[%s1862 + $0x14] sm:$0xf]
  %v1869 = vld [vmem:[%s1862 + $0x18] sm:$0xf]
  %v1870 = vld [vmem:[%s1862 + $0x1c] sm:$0xf]
  %s1871 = scalar_lea.vmem %s8, 3
  %v1872 = vld [vmem:[%s1871] sm:$0x1]
  %v1874 = vlaneseq
  %v1875 = vshrl.u32 %v1874, 7
  %v1876 = vsub.s32 0, %v1875
  %v1877 = vrot.slane %v1872, %v1876
  %v1887 = vunpack.c.l.b16 %v1863
  %v1888 = vunpack.c.l.b16 %v1864
  %v1889 = vunpack.c.l.b16 %v1865
  %v1890 = vunpack.c.l.b16 %v1866
  %v1891 = vunpack.c.l.b16 %v1867
  %v1892 = vunpack.c.l.b16 %v1868
  %v1893 = vunpack.c.l.b16 %v1869
  %v1894 = vunpack.c.l.b16 %v1870
  %v1895 = vpack.c.b16 %v1888, %v1887
  %v1896 = vpack.c.b16 %v1890, %v1889
  %v1897 = vpack.c.b16 %v1892, %v1891
  %v1898 = vpack.c.b16 %v1894, %v1893
  %1903 = vmatprep.subr.bf16.mxu0 0
  %1904 = vmatpush1.bf16.msra.mxu0 0
  %1905 = vmatprep.subr.bf16.mxu0 0
  %1906 = vmatpush1.bf16.msra.mxu0 0
  %1907 = vmatprep.subr.bf16.mxu0 0
  %1908 = vmatpush1.bf16.msra.mxu0 0
  %1909 = vmatprep.subr.bf16.mxu0 0
  %1910 = vmatpush1.bf16.msra.mxu0 0
  %1911 = vmatprep.subr.bf16.mxu0 0
  %1912 = vmatpush1.bf16.msra.mxu0 %v1898
  %1913 = vmatprep.subr.bf16.mxu0 0
  %1914 = vmatpush1.bf16.msra.mxu0 %v1897
  %1915 = vmatprep.subr.bf16.mxu0 0
  %1916 = vmatpush1.bf16.msra.mxu0 %v1896
  %1917 = vmatprep.subr.bf16.mxu0 0
  %1918 = vmatpush1.bf16.msra.mxu0 %v1895
  %1919 = vmatprep.subr.bf16.mxu0 0
  %1920 = vmatpush2.bf16.msra.mxu0 0
  %1921 = vmatprep.subr.bf16.mxu0 0
  %1922 = vmatpush2.bf16.msra.mxu0 0
  %1923 = vmatprep.subr.bf16.mxu0 0
  %1924 = vmatpush2.bf16.msra.mxu0 0
  %1925 = vmatprep.subr.bf16.mxu0 0
  %1926 = vmatpush2.bf16.msra.mxu0 0
  %1927 = vmatprep.subr.bf16.mxu0 0
  %1928 = vmatpush2.bf16.msra.mxu0 0
  %1929 = vmatprep.subr.bf16.mxu0 0
  %1930 = vmatpush2.bf16.msra.mxu0 0
  %1931 = vmatprep.subr.bf16.mxu0 0
  %1932 = vmatpush2.bf16.msra.mxu0 0
  %1933 = vmatprep.subr.bf16.mxu0 0
  %1934 = vmatpush2.bf16.msra.mxu0 0
  %1935 = vmatprep.mubr.bf16.mxu0 0
  %1936 = vmatmul.mubr.bf16.gmra.mxu0 %v730
  %v1937 = vpop.f32.mrf.mxu0
  %v1938 = vadd.f32 %v1877, %v1937
  %v1939 = vpop.f32.mrf.mxu0
  %v1940 = vpop.f32.mrf.mxu0
  %v1941 = vadd.f32 %v1877, %v1940
  %v1942 = vpop.f32.mrf.mxu0
  %1943 = vdwg.mxu0
  %s1944 = scalar_lea.vmem %s6, 96
  %v1945 = vld [vmem:[%s1944] sm:$0xf]
  %v1946 = vld [vmem:[%s1944 + $0x4] sm:$0xf]
  %v1947 = vld [vmem:[%s1944 + $0x8] sm:$0xf]
  %v1948 = vld [vmem:[%s1944 + $0xc] sm:$0xf]
  %v1949 = vld [vmem:[%s1944 + $0x10] sm:$0xf]
  %v1950 = vld [vmem:[%s1944 + $0x14] sm:$0xf]
  %v1951 = vld [vmem:[%s1944 + $0x18] sm:$0xf]
  %v1952 = vld [vmem:[%s1944 + $0x1c] sm:$0xf]
  %s1953 = scalar_lea.vmem %s9, 3
  %v1954 = vld [vmem:[%s1953] sm:$0x1]
  %v1956 = vlaneseq
  %v1957 = vshrl.u32 %v1956, 7
  %v1958 = vsub.s32 0, %v1957
  %v1959 = vrot.slane %v1954, %v1958
  %v1969 = vunpack.c.l.b16 %v1945
  %v1970 = vunpack.c.l.b16 %v1946
  %v1971 = vunpack.c.l.b16 %v1947
  %v1972 = vunpack.c.l.b16 %v1948
  %v1973 = vunpack.c.l.b16 %v1949
  %v1974 = vunpack.c.l.b16 %v1950
  %v1975 = vunpack.c.l.b16 %v1951
  %v1976 = vunpack.c.l.b16 %v1952
  %v1977 = vpack.c.b16 %v1970, %v1969
  %v1978 = vpack.c.b16 %v1972, %v1971
  %v1979 = vpack.c.b16 %v1974, %v1973
  %v1980 = vpack.c.b16 %v1976, %v1975
  %1985 = vmatprep.subr.bf16.mxu0 0
  %1986 = vmatpush1.bf16.msra.mxu0 0
  %1987 = vmatprep.subr.bf16.mxu0 0
  %1988 = vmatpush1.bf16.msra.mxu0 0
  %1989 = vmatprep.subr.bf16.mxu0 0
  %1990 = vmatpush1.bf16.msra.mxu0 0
  %1991 = vmatprep.subr.bf16.mxu0 0
  %1992 = vmatpush1.bf16.msra.mxu0 0
  %1993 = vmatprep.subr.bf16.mxu0 0
  %1994 = vmatpush1.bf16.msra.mxu0 %v1980
  %1995 = vmatprep.subr.bf16.mxu0 0
  %1996 = vmatpush1.bf16.msra.mxu0 %v1979
  %1997 = vmatprep.subr.bf16.mxu0 0
  %1998 = vmatpush1.bf16.msra.mxu0 %v1978
  %1999 = vmatprep.subr.bf16.mxu0 0
  %2000 = vmatpush1.bf16.msra.mxu0 %v1977
  %2001 = vmatprep.subr.bf16.mxu0 0
  %2002 = vmatpush2.bf16.msra.mxu0 0
  %2003 = vmatprep.subr.bf16.mxu0 0
  %2004 = vmatpush2.bf16.msra.mxu0 0
  %2005 = vmatprep.subr.bf16.mxu0 0
  %2006 = vmatpush2.bf16.msra.mxu0 0
  %2007 = vmatprep.subr.bf16.mxu0 0
  %2008 = vmatpush2.bf16.msra.mxu0 0
  %2009 = vmatprep.subr.bf16.mxu0 0
  %2010 = vmatpush2.bf16.msra.mxu0 0
  %2011 = vmatprep.subr.bf16.mxu0 0
  %2012 = vmatpush2.bf16.msra.mxu0 0
  %2013 = vmatprep.subr.bf16.mxu0 0
  %2014 = vmatpush2.bf16.msra.mxu0 0
  %2015 = vmatprep.subr.bf16.mxu0 0
  %2016 = vmatpush2.bf16.msra.mxu0 0
  %2017 = vmatprep.mubr.bf16.mxu0 0
  %2018 = vmatmul.mubr.bf16.gmra.mxu0 %v730
  %v2019 = vpop.f32.mrf.mxu0
  %v2020 = vadd.f32 %v1959, %v2019
  %v2021 = vpop.f32.mrf.mxu0
  %v2022 = vpop.f32.mrf.mxu0
  %v2023 = vadd.f32 %v1959, %v2022
  %v2024 = vpop.f32.mrf.mxu0
  %2025 = vdwg.mxu0
  %s2026 = scalar_lea.vmem %s7, 96
  %v2027 = vld [vmem:[%s2026] sm:$0xf]
  %v2028 = vld [vmem:[%s2026 + $0x4] sm:$0xf]
  %v2029 = vld [vmem:[%s2026 + $0x8] sm:$0xf]
  %v2030 = vld [vmem:[%s2026 + $0xc] sm:$0xf]
  %v2031 = vld [vmem:[%s2026 + $0x10] sm:$0xf]
  %v2032 = vld [vmem:[%s2026 + $0x14] sm:$0xf]
  %v2033 = vld [vmem:[%s2026 + $0x18] sm:$0xf]
  %v2034 = vld [vmem:[%s2026 + $0x1c] sm:$0xf]
  %s2035 = scalar_lea.vmem %s10, 3
  %v2036 = vld [vmem:[%s2035] sm:$0x1]
  %v2038 = vlaneseq
  %v2039 = vshrl.u32 %v2038, 7
  %v2040 = vsub.s32 0, %v2039
  %v2041 = vrot.slane %v2036, %v2040
  %v2051 = vunpack.c.l.b16 %v2027
  %v2052 = vunpack.c.l.b16 %v2028
  %v2053 = vunpack.c.l.b16 %v2029
  %v2054 = vunpack.c.l.b16 %v2030
  %v2055 = vunpack.c.l.b16 %v2031
  %v2056 = vunpack.c.l.b16 %v2032
  %v2057 = vunpack.c.l.b16 %v2033
  %v2058 = vunpack.c.l.b16 %v2034
  %v2059 = vpack.c.b16 %v2052, %v2051
  %v2060 = vpack.c.b16 %v2054, %v2053
  %v2061 = vpack.c.b16 %v2056, %v2055
  %v2062 = vpack.c.b16 %v2058, %v2057
  %2067 = vmatprep.subr.bf16.mxu0 0
  %2068 = vmatpush1.bf16.msra.mxu0 0
  %2069 = vmatprep.subr.bf16.mxu0 0
  %2070 = vmatpush1.bf16.msra.mxu0 0
  %2071 = vmatprep.subr.bf16.mxu0 0
  %2072 = vmatpush1.bf16.msra.mxu0 0
  %2073 = vmatprep.subr.bf16.mxu0 0
  %2074 = vmatpush1.bf16.msra.mxu0 0
  %2075 = vmatprep.subr.bf16.mxu0 0
  %2076 = vmatpush1.bf16.msra.mxu0 %v2062
  %2077 = vmatprep.subr.bf16.mxu0 0
  %2078 = vmatpush1.bf16.msra.mxu0 %v2061
  %2079 = vmatprep.subr.bf16.mxu0 0
  %2080 = vmatpush1.bf16.msra.mxu0 %v2060
  %2081 = vmatprep.subr.bf16.mxu0 0
  %2082 = vmatpush1.bf16.msra.mxu0 %v2059
  %2083 = vmatprep.subr.bf16.mxu0 0
  %2084 = vmatpush2.bf16.msra.mxu0 0
  %2085 = vmatprep.subr.bf16.mxu0 0
  %2086 = vmatpush2.bf16.msra.mxu0 0
  %2087 = vmatprep.subr.bf16.mxu0 0
  %2088 = vmatpush2.bf16.msra.mxu0 0
  %2089 = vmatprep.subr.bf16.mxu0 0
  %2090 = vmatpush2.bf16.msra.mxu0 0
  %2091 = vmatprep.subr.bf16.mxu0 0
  %2092 = vmatpush2.bf16.msra.mxu0 0
  %2093 = vmatprep.subr.bf16.mxu0 0
  %2094 = vmatpush2.bf16.msra.mxu0 0
  %2095 = vmatprep.subr.bf16.mxu0 0
  %2096 = vmatpush2.bf16.msra.mxu0 0
  %2097 = vmatprep.subr.bf16.mxu0 0
  %2098 = vmatpush2.bf16.msra.mxu0 0
  %2099 = vmatprep.mubr.bf16.mxu0 0
  %2100 = vmatmul.mubr.bf16.gmra.mxu0 %v730
  %v2101 = vpop.f32.mrf.mxu0
  %v2102 = vadd.f32 %v2041, %v2101
  %v2103 = vpop.f32.mrf.mxu0
  %v2104 = vpop.f32.mrf.mxu0
  %v2105 = vadd.f32 %v2041, %v2104
  %v2106 = vpop.f32.mrf.mxu0
  %2107 = vdwg.mxu0
  %v2108 = vpack.c.bf16 %v1941, %v1938
  %v2109 = vpack.c.bf16 %v2023, %v2020
  %v2111 = vsel %vm935, %v2108, 0
  %v2114 = vsel %vm935, %v2109, 0
  %2116 = vmatprep.subr.bf16.mxu0 0
  %2117 = vmatpush1.bf16.xpose.msra.mxu0 0
  %2118 = vmatprep.subr.bf16.mxu0 0
  %2119 = vmatpush1.bf16.xpose.msra.mxu0 0
  %2120 = vmatprep.subr.bf16.mxu0 0
  %2121 = vmatpush1.bf16.xpose.msra.mxu0 0
  %2122 = vmatprep.subr.bf16.mxu0 0
  %2123 = vmatpush1.bf16.xpose.msra.mxu0 0
  %2124 = vmatprep.subr.bf16.mxu0 0
  %2125 = vmatpush1.bf16.xpose.msra.mxu0 0
  %2126 = vmatprep.subr.bf16.mxu0 0
  %2127 = vmatpush1.bf16.xpose.msra.mxu0 0
  %2128 = vmatprep.subr.bf16.mxu0 0
  %2129 = vmatpush1.bf16.xpose.msra.mxu0 0
  %2130 = vmatprep.subr.bf16.mxu0 0
  %2131 = vmatpush1.bf16.xpose.msra.mxu0 %v2114
  %2132 = vmatprep.subr.bf16.mxu0 0
  %2133 = vmatpush2.bf16.xpose.msra.mxu0 0
  %2134 = vmatprep.subr.bf16.mxu0 0
  %2135 = vmatpush2.bf16.xpose.msra.mxu0 0
  %2136 = vmatprep.subr.bf16.mxu0 0
  %2137 = vmatpush2.bf16.xpose.msra.mxu0 0
  %2138 = vmatprep.subr.bf16.mxu0 0
  %2139 = vmatpush2.bf16.xpose.msra.mxu0 0
  %2140 = vmatprep.subr.bf16.mxu0 0
  %2141 = vmatpush2.bf16.xpose.msra.mxu0 0
  %2142 = vmatprep.subr.bf16.mxu0 0
  %2143 = vmatpush2.bf16.xpose.msra.mxu0 0
  %2144 = vmatprep.subr.bf16.mxu0 0
  %2145 = vmatpush2.bf16.xpose.msra.mxu0 0
  %2146 = vmatprep.subr.bf16.mxu0 0
  %2147 = vmatpush2.bf16.xpose.msra.mxu0 0
  %2148 = vmatprep.mubr.bf16.mxu0 0
  %2149 = vmatmul.mubr.bf16.gmra.mxu0 %v2111
  %v2150 = vpop.f32.mrf.mxu0
  %v2151 = vadd.f32 0.0, %v2150
  %v2152 = vpop.f32.mrf.mxu0
  %v2153 = vpop.f32.mrf.mxu0
  %v2154 = vadd.f32 0.0, %v2153
  %v2155 = vpop.f32.mrf.mxu0
  %2156 = vdwg.mxu0
  %v2157 = vmul.f32 %v2151, 0.25
  %v2158 = vmul.f32 %v2154, 0.25
  %v2159 = vadd.f32 %v2157, %v94
  %v2160 = vadd.f32 %v2158, %v95
  %v2161 = vsel %vm987, %v2159, -inf
  %2162 = vmax.xlane.f32.xlu0 %v2161
  %v2163 = vpop.xlane.xlu0 %2162
  %v2164 = vsel %vm991, %v2160, -inf
  %2165 = vmax.xlane.f32.xlu0 %v2164
  %v2166 = vpop.xlane.xlu0 %2165
  %v2167 = vsub.f32 %v2159, %v2163
  %v2168 = vsub.f32 %v2160, %v2166
  %v2169 = vmul.f32 %v2167, 1.442695
  %v2170 = vpow.pop %v2169
  %v2171 = vmul.f32 %v2168, 1.442695
  %v2172 = vpow.pop %v2171
  %v2173 = vsel %vm987, %v2170, 0.0
  %2174 = vadd.xlane.f32.xlu0 %v2173
  %v2175 = vpop.xlane.xlu0 %2174
  %v2176 = vsel %vm991, %v2172, 0.0
  %2177 = vadd.xlane.f32.xlu0 %v2176
  %v2178 = vpop.xlane.xlu0 %2177
  %v2179 = vrcp.pop %v2175
  %v2180 = vrcp.pop %v2178
  %v2181 = vmul.f32 %v2170, %v2179
  %v2182 = vmul.f32 %v2172, %v2180
  %v2183 = vpack.c.bf16 %v2182, %v2181
  %v2184 = vpack.c.bf16 %v2105, %v2102
  %v2186 = vsel %vm987, %v2183, 0
  %v2189 = vsel %vm1016, %v2184, 0
  %2191 = vmatprep.subr.bf16.mxu0 0
  %2192 = vmatpush1.bf16.msra.mxu0 0
  %2193 = vmatprep.subr.bf16.mxu0 0
  %2194 = vmatpush1.bf16.msra.mxu0 0
  %2195 = vmatprep.subr.bf16.mxu0 0
  %2196 = vmatpush1.bf16.msra.mxu0 0
  %2197 = vmatprep.subr.bf16.mxu0 0
  %2198 = vmatpush1.bf16.msra.mxu0 0
  %2199 = vmatprep.subr.bf16.mxu0 0
  %2200 = vmatpush1.bf16.msra.mxu0 0
  %2201 = vmatprep.subr.bf16.mxu0 0
  %2202 = vmatpush1.bf16.msra.mxu0 0
  %2203 = vmatprep.subr.bf16.mxu0 0
  %2204 = vmatpush1.bf16.msra.mxu0 0
  %2205 = vmatprep.subr.bf16.mxu0 0
  %2206 = vmatpush1.bf16.msra.mxu0 %v2189
  %2207 = vmatprep.subr.bf16.mxu0 0
  %2208 = vmatpush2.bf16.msra.mxu0 0
  %2209 = vmatprep.subr.bf16.mxu0 0
  %2210 = vmatpush2.bf16.msra.mxu0 0
  %2211 = vmatprep.subr.bf16.mxu0 0
  %2212 = vmatpush2.bf16.msra.mxu0 0
  %2213 = vmatprep.subr.bf16.mxu0 0
  %2214 = vmatpush2.bf16.msra.mxu0 0
  %2215 = vmatprep.subr.bf16.mxu0 0
  %2216 = vmatpush2.bf16.msra.mxu0 0
  %2217 = vmatprep.subr.bf16.mxu0 0
  %2218 = vmatpush2.bf16.msra.mxu0 0
  %2219 = vmatprep.subr.bf16.mxu0 0
  %2220 = vmatpush2.bf16.msra.mxu0 0
  %2221 = vmatprep.subr.bf16.mxu0 0
  %2222 = vmatpush2.bf16.msra.mxu0 0
  %2223 = vmatprep.mubr.bf16.mxu0 0
  %2224 = vmatmul.mubr.bf16.gmra.mxu0 %v2186
  %v2225 = vpop.f32.mrf.mxu0
  %v2226 = vadd.f32 0.0, %v2225
  %v2227 = vpop.f32.mrf.mxu0
  %v2228 = vpop.f32.mrf.mxu0
  %v2229 = vadd.f32 0.0, %v2228
  %v2230 = vpop.f32.mrf.mxu0
  %2231 = vdwg.mxu0
  %s2232 = scalar_lea.vmem %s11, 24
  %v2233 = vld [vmem:[%s2232] sm:$0xf]
  %v2234 = vld [vmem:[%s2232 + $0x4] sm:$0xf]
  %v2235 = vpack.c.bf16 %v2229, %v2226
  %v2238 = vunpack.c.l.b16 %v2233
  %v2239 = vunpack.c.l.b16 %v2234
  %v2240 = vpack.c.b16 %v2239, %v2238
  %v2243 = vsel %vm935, %v2235, 0
  %2245 = vmatprep.subr.bf16.mxu0 0
  %2246 = vmatpush1.bf16.msra.mxu0 0
  %2247 = vmatprep.subr.bf16.mxu0 0
  %2248 = vmatpush1.bf16.msra.mxu0 0
  %2249 = vmatprep.subr.bf16.mxu0 0
  %2250 = vmatpush1.bf16.msra.mxu0 0
  %2251 = vmatprep.subr.bf16.mxu0 0
  %2252 = vmatpush1.bf16.msra.mxu0 0
  %2253 = vmatprep.subr.bf16.mxu0 0
  %2254 = vmatpush1.bf16.msra.mxu0 0
  %2255 = vmatprep.subr.bf16.mxu0 0
  %2256 = vmatpush1.bf16.msra.mxu0 0
  %2257 = vmatprep.subr.bf16.mxu0 0
  %2258 = vmatpush1.bf16.msra.mxu0 0
  %2259 = vmatprep.subr.bf16.mxu0 0
  %2260 = vmatpush1.bf16.msra.mxu0 %v2240
  %2261 = vmatprep.subr.bf16.mxu0 0
  %2262 = vmatpush2.bf16.msra.mxu0 0
  %2263 = vmatprep.subr.bf16.mxu0 0
  %2264 = vmatpush2.bf16.msra.mxu0 0
  %2265 = vmatprep.subr.bf16.mxu0 0
  %2266 = vmatpush2.bf16.msra.mxu0 0
  %2267 = vmatprep.subr.bf16.mxu0 0
  %2268 = vmatpush2.bf16.msra.mxu0 0
  %2269 = vmatprep.subr.bf16.mxu0 0
  %2270 = vmatpush2.bf16.msra.mxu0 0
  %2271 = vmatprep.subr.bf16.mxu0 0
  %2272 = vmatpush2.bf16.msra.mxu0 0
  %2273 = vmatprep.subr.bf16.mxu0 0
  %2274 = vmatpush2.bf16.msra.mxu0 0
  %2275 = vmatprep.subr.bf16.mxu0 0
  %2276 = vmatpush2.bf16.msra.mxu0 0
  %2277 = vmatprep.mubr.bf16.mxu0 0
  %2278 = vmatmul.mubr.bf16.gmra.mxu0 %v2243
  %v2279 = vpop.f32.mrf.mxu0
  %v2280 = vadd.f32 0.0, %v2279
  %v2281 = vpop.f32.mrf.mxu0
  %v2282 = vpop.f32.mrf.mxu0
  %v2283 = vadd.f32 0.0, %v2282
  %v2284 = vpop.f32.mrf.mxu0
  %2285 = vdwg.mxu0
  %v2288 = vunpack.c.l.b16 %v1061
  %v2289 = vunpack.c.l.b16 %v1062
  %v2290 = vpack.c.b16 %v2289, %v2288
  %v2293 = vsel %vm935, %v1063, 0
  %2295 = vmatprep.subr.bf16.mxu0 0
  %2296 = vmatpush1.bf16.msra.mxu0 0
  %2297 = vmatprep.subr.bf16.mxu0 0
  %2298 = vmatpush1.bf16.msra.mxu0 0
  %2299 = vmatprep.subr.bf16.mxu0 0
  %2300 = vmatpush1.bf16.msra.mxu0 0
  %2301 = vmatprep.subr.bf16.mxu0 0
  %2302 = vmatpush1.bf16.msra.mxu0 0
  %2303 = vmatprep.subr.bf16.mxu0 0
  %2304 = vmatpush1.bf16.msra.mxu0 0
  %2305 = vmatprep.subr.bf16.mxu0 0
  %2306 = vmatpush1.bf16.msra.mxu0 0
  %2307 = vmatprep.subr.bf16.mxu0 0
  %2308 = vmatpush1.bf16.msra.mxu0 0
  %2309 = vmatprep.subr.bf16.mxu0 0
  %2310 = vmatpush1.bf16.msra.mxu0 %v2290
  %2311 = vmatprep.subr.bf16.mxu0 0
  %2312 = vmatpush2.bf16.msra.mxu0 0
  %2313 = vmatprep.subr.bf16.mxu0 0
  %2314 = vmatpush2.bf16.msra.mxu0 0
  %2315 = vmatprep.subr.bf16.mxu0 0
  %2316 = vmatpush2.bf16.msra.mxu0 0
  %2317 = vmatprep.subr.bf16.mxu0 0
  %2318 = vmatpush2.bf16.msra.mxu0 0
  %2319 = vmatprep.subr.bf16.mxu0 0
  %2320 = vmatpush2.bf16.msra.mxu0 0
  %2321 = vmatprep.subr.bf16.mxu0 0
  %2322 = vmatpush2.bf16.msra.mxu0 0
  %2323 = vmatprep.subr.bf16.mxu0 0
  %2324 = vmatpush2.bf16.msra.mxu0 0
  %2325 = vmatprep.subr.bf16.mxu0 0
  %2326 = vmatpush2.bf16.msra.mxu0 0
  %2327 = vmatprep.mubr.bf16.mxu0 0
  %2328 = vmatmul.mubr.bf16.gmra.mxu0 %v2293
  %v2329 = vpop.f32.mrf.mxu0
  %v2330 = vadd.f32 %v1482, %v2329
  %v2331 = vpop.f32.mrf.mxu0
  %v2332 = vpop.f32.mrf.mxu0
  %v2333 = vadd.f32 %v1485, %v2332
  %v2334 = vpop.f32.mrf.mxu0
  %2335 = vdwg.mxu0
  %v2338 = vunpack.c.l.b16 %v1859
  %v2339 = vunpack.c.l.b16 %v1860
  %v2340 = vpack.c.b16 %v2339, %v2338
  %v2343 = vsel %vm935, %v1861, 0
  %2345 = vmatprep.subr.bf16.mxu0 0
  %2346 = vmatpush1.bf16.msra.mxu0 0
  %2347 = vmatprep.subr.bf16.mxu0 0
  %2348 = vmatpush1.bf16.msra.mxu0 0
  %2349 = vmatprep.subr.bf16.mxu0 0
  %2350 = vmatpush1.bf16.msra.mxu0 0
  %2351 = vmatprep.subr.bf16.mxu0 0
  %2352 = vmatpush1.bf16.msra.mxu0 0
  %2353 = vmatprep.subr.bf16.mxu0 0
  %2354 = vmatpush1.bf16.msra.mxu0 0
  %2355 = vmatprep.subr.bf16.mxu0 0
  %2356 = vmatpush1.bf16.msra.mxu0 0
  %2357 = vmatprep.subr.bf16.mxu0 0
  %2358 = vmatpush1.bf16.msra.mxu0 0
  %2359 = vmatprep.subr.bf16.mxu0 0
  %2360 = vmatpush1.bf16.msra.mxu0 %v2340
  %2361 = vmatprep.subr.bf16.mxu0 0
  %2362 = vmatpush2.bf16.msra.mxu0 0
  %2363 = vmatprep.subr.bf16.mxu0 0
  %2364 = vmatpush2.bf16.msra.mxu0 0
  %2365 = vmatprep.subr.bf16.mxu0 0
  %2366 = vmatpush2.bf16.msra.mxu0 0
  %2367 = vmatprep.subr.bf16.mxu0 0
  %2368 = vmatpush2.bf16.msra.mxu0 0
  %2369 = vmatprep.subr.bf16.mxu0 0
  %2370 = vmatpush2.bf16.msra.mxu0 0
  %2371 = vmatprep.subr.bf16.mxu0 0
  %2372 = vmatpush2.bf16.msra.mxu0 0
  %2373 = vmatprep.subr.bf16.mxu0 0
  %2374 = vmatpush2.bf16.msra.mxu0 0
  %2375 = vmatprep.subr.bf16.mxu0 0
  %2376 = vmatpush2.bf16.msra.mxu0 0
  %2377 = vmatprep.mubr.bf16.mxu0 0
  %2378 = vmatmul.mubr.bf16.gmra.mxu0 %v2343
  %v2379 = vpop.f32.mrf.mxu0
  %v2380 = vadd.f32 %v2280, %v2379
  %v2381 = vpop.f32.mrf.mxu0
  %v2382 = vpop.f32.mrf.mxu0
  %v2383 = vadd.f32 %v2283, %v2382
  %v2384 = vpop.f32.mrf.mxu0
  %2385 = vdwg.mxu0
  %v2386 = vadd.f32 %v2330, %v2380
  %v2387 = vadd.f32 %v2333, %v2383
  %v2388 = vadd.f32 %v635, %v2386
  %v2389 = vadd.f32 %v638, %v2387
  %v2390 = vlaneseq
  %v2391 = vshrl.u32 %v2390, 7
  %v2392 = vsub.s32 0, %v2391
  %v2393 = vrot.slane %v643, %v2392
  %v2394 = vadd.f32 %v2388, %v2393
  %v2395 = vadd.f32 %v2389, %v2393
  %v2396 = vsel %vm648, %v2394, 0.0
  %2397 = vadd.xlane.f32.xlu0 %v2396
  %v2398 = vpop.xlane.xlu0 %2397
  %v2399 = vsel %vm652, %v2395, 0.0
  %2400 = vadd.xlane.f32.xlu0 %v2399
  %v2401 = vpop.xlane.xlu0 %2400
  %v2402 = vmul.f32 %v2398, %v656
  %v2403 = vmul.f32 %v2401, %v656
  %v2404 = vsub.f32 %v2394, %v2402
  %v2405 = vsub.f32 %v2395, %v2403
  %v2406 = vmul.f32 %v2404, %v2404
  %v2407 = vmul.f32 %v2405, %v2405
  %v2408 = vsel %vm648, %v2406, 0.0
  %2409 = vadd.xlane.f32.xlu0 %v2408
  %v2410 = vpop.xlane.xlu0 %2409
  %v2411 = vsel %vm652, %v2407, 0.0
  %2412 = vadd.xlane.f32.xlu0 %v2411
  %v2413 = vpop.xlane.xlu0 %2412
  %v2414 = vmul.f32 %v2410, %v656
  %v2415 = vmul.f32 %v2413, %v656
  %v2416 = vadd.f32 %v2414, 1e-06
  %v2417 = vadd.f32 %v2415, 1e-06
  %v2418 = vrsqrt.pop %v2416
  %v2419 = vrsqrt.pop %v2417
  %v2420 = vmul.f32 %v2404, %v2418
  %v2421 = vmul.f32 %v2405, %v2419
  %v2422 = vlaneseq
  %v2423 = vshrl.u32 %v2422, 7
  %v2424 = vsub.s32 0, %v2423
  %v2425 = vrot.slane %v644, %v2424
  %v2426 = vmul.f32 %v2420, %v2425
  %v2427 = vmul.f32 %v2421, %v2425
  %v2428 = vlaneseq
  %v2429 = vshrl.u32 %v2428, 7
  %v2430 = vsub.s32 0, %v2429
  %v2431 = vrot.slane %v645, %v2430
  %v2432 = vadd.f32 %v2426, %v2431
  %v2433 = vadd.f32 %v2427, %v2431
  %v2434 = vld [vmem:[%s15] sm:$0xf]
  %v2435 = vld [vmem:[%s15 + $0x4] sm:$0xf]
  %v2436 = vld [vmem:[%s15 + $0x8] sm:$0xf]
  %v2437 = vld [vmem:[%s15 + $0xc] sm:$0xf]
  %v2438 = vld [vmem:[%s15 + $0x10] sm:$0xf]
  %v2439 = vld [vmem:[%s15 + $0x14] sm:$0xf]
  %v2440 = vld [vmem:[%s15 + $0x18] sm:$0xf]
  %v2441 = vld [vmem:[%s15 + $0x1c] sm:$0xf]
  %v2442 = vpack.c.bf16 %v2433, %v2432
  %v2443 = vlaneseq
  %v2444 = vshrl.u32 %v2443, 7
  %v2445 = vsub.s32 0, %v2444
  %v2446 = vrot.slane %v646, %v2445
  %v2455 = vunpack.c.l.b16 %v2434
  %v2456 = vunpack.c.l.b16 %v2435
  %v2457 = vunpack.c.l.b16 %v2436
  %v2458 = vunpack.c.l.b16 %v2437
  %v2459 = vunpack.c.l.b16 %v2438
  %v2460 = vunpack.c.l.b16 %v2439
  %v2461 = vunpack.c.l.b16 %v2440
  %v2462 = vunpack.c.l.b16 %v2441
  %v2463 = vpack.c.b16 %v2456, %v2455
  %v2464 = vpack.c.b16 %v2458, %v2457
  %v2465 = vpack.c.b16 %v2460, %v2459
  %v2466 = vpack.c.b16 %v2462, %v2461
  %v2472 = vsel %vm648, %v2442, 0
  %2474 = vmatprep.subr.bf16.mxu0 0
  %2475 = vmatpush1.bf16.msra.mxu0 0
  %2476 = vmatprep.subr.bf16.mxu0 0
  %2477 = vmatpush1.bf16.msra.mxu0 0
  %2478 = vmatprep.subr.bf16.mxu0 0
  %2479 = vmatpush1.bf16.msra.mxu0 0
  %2480 = vmatprep.subr.bf16.mxu0 0
  %2481 = vmatpush1.bf16.msra.mxu0 0
  %2482 = vmatprep.subr.bf16.mxu0 0
  %2483 = vmatpush1.bf16.msra.mxu0 %v2466
  %2484 = vmatprep.subr.bf16.mxu0 0
  %2485 = vmatpush1.bf16.msra.mxu0 %v2465
  %2486 = vmatprep.subr.bf16.mxu0 0
  %2487 = vmatpush1.bf16.msra.mxu0 %v2464
  %2488 = vmatprep.subr.bf16.mxu0 0
  %2489 = vmatpush1.bf16.msra.mxu0 %v2463
  %2490 = vmatprep.subr.bf16.mxu0 0
  %2491 = vmatpush2.bf16.msra.mxu0 0
  %2492 = vmatprep.subr.bf16.mxu0 0
  %2493 = vmatpush2.bf16.msra.mxu0 0
  %2494 = vmatprep.subr.bf16.mxu0 0
  %2495 = vmatpush2.bf16.msra.mxu0 0
  %2496 = vmatprep.subr.bf16.mxu0 0
  %2497 = vmatpush2.bf16.msra.mxu0 0
  %2498 = vmatprep.subr.bf16.mxu0 0
  %2499 = vmatpush2.bf16.msra.mxu0 0
  %2500 = vmatprep.subr.bf16.mxu0 0
  %2501 = vmatpush2.bf16.msra.mxu0 0
  %2502 = vmatprep.subr.bf16.mxu0 0
  %2503 = vmatpush2.bf16.msra.mxu0 0
  %2504 = vmatprep.subr.bf16.mxu0 0
  %2505 = vmatpush2.bf16.msra.mxu0 0
  %2506 = vmatprep.mubr.bf16.mxu0 0
  %2507 = vmatmul.mubr.bf16.gmra.mxu0 %v2472
  %v2508 = vpop.f32.mrf.mxu0
  %v2509 = vadd.f32 %v2446, %v2508
  %v2510 = vpop.f32.mrf.mxu0
  %v2511 = vpop.f32.mrf.mxu0
  %v2512 = vadd.f32 %v2446, %v2511
  %v2513 = vpop.f32.mrf.mxu0
  %2514 = vdwg.mxu0
  %v2515 = vmul.f32 %v2509, 0.5
  %v2516 = vmul.f32 %v2512, 0.5
  %v2517 = vmul.f32 %v2509, 0.70710677
  %v2518 = vmul.f32 %v2512, 0.70710677
  %v2519 = verf.f32.pop %v2517
  %v2520 = verf.f32.pop %v2518
  %v2521 = vadd.f32 %v2519, 1.0
  %v2522 = vadd.f32 %v2520, 1.0
  %v2523 = vmul.f32 %v2515, %v2521
  %v2524 = vmul.f32 %v2516, %v2522
  %v2525 = vld [vmem:[%s17] sm:$0xf]
  %v2526 = vld [vmem:[%s17 + $0x4] sm:$0xf]
  %v2527 = vld [vmem:[%s17 + $0x8] sm:$0xf]
  %v2528 = vld [vmem:[%s17 + $0xc] sm:$0xf]
  %v2529 = vld [vmem:[%s17 + $0x10] sm:$0xf]
  %v2530 = vld [vmem:[%s17 + $0x14] sm:$0xf]
  %v2531 = vld [vmem:[%s17 + $0x18] sm:$0xf]
  %v2532 = vld [vmem:[%s17 + $0x1c] sm:$0xf]
  %v2533 = vld [vmem:[%s17 + $0x20] sm:$0xf]
  %v2534 = vld [vmem:[%s17 + $0x24] sm:$0xf]
  %v2535 = vld [vmem:[%s17 + $0x28] sm:$0xf]
  %v2536 = vld [vmem:[%s17 + $0x2c] sm:$0xf]
  %v2537 = vld [vmem:[%s17 + $0x30] sm:$0xf]
  %v2538 = vld [vmem:[%s17 + $0x34] sm:$0xf]
  %v2539 = vld [vmem:[%s17 + $0x38] sm:$0xf]
  %v2540 = vld [vmem:[%s17 + $0x3c] sm:$0xf]
  %v2541 = vpack.c.bf16 %v2524, %v2523
  %v2542 = vlaneseq
  %v2543 = vshrl.u32 %v2542, 7
  %v2544 = vsub.s32 0, %v2543
  %v2545 = vrot.slane %v647, %v2544
  %v2562 = vunpack.c.l.b16 %v2525
  %v2563 = vunpack.c.l.b16 %v2526
  %v2564 = vunpack.c.l.b16 %v2527
  %v2565 = vunpack.c.l.b16 %v2528
  %v2566 = vunpack.c.l.b16 %v2529
  %v2567 = vunpack.c.l.b16 %v2530
  %v2568 = vunpack.c.l.b16 %v2531
  %v2569 = vunpack.c.l.b16 %v2532
  %v2570 = vunpack.c.l.b16 %v2533
  %v2571 = vunpack.c.l.b16 %v2534
  %v2572 = vunpack.c.l.b16 %v2535
  %v2573 = vunpack.c.l.b16 %v2536
  %v2574 = vunpack.c.l.b16 %v2537
  %v2575 = vunpack.c.l.b16 %v2538
  %v2576 = vunpack.c.l.b16 %v2539
  %v2577 = vunpack.c.l.b16 %v2540
  %v2578 = vpack.c.b16 %v2563, %v2562
  %v2579 = vpack.c.b16 %v2565, %v2564
  %v2580 = vpack.c.b16 %v2567, %v2566
  %v2581 = vpack.c.b16 %v2569, %v2568
  %v2582 = vpack.c.b16 %v2571, %v2570
  %v2583 = vpack.c.b16 %v2573, %v2572
  %v2584 = vpack.c.b16 %v2575, %v2574
  %v2585 = vpack.c.b16 %v2577, %v2576
  %2594 = vmatprep.subr.bf16.mxu0 0
  %2595 = vmatpush1.bf16.msra.mxu0 %v2585
  %2596 = vmatprep.subr.bf16.mxu0 0
  %2597 = vmatpush1.bf16.msra.mxu0 %v2584
  %2598 = vmatprep.subr.bf16.mxu0 0
  %2599 = vmatpush1.bf16.msra.mxu0 %v2583
  %2600 = vmatprep.subr.bf16.mxu0 0
  %2601 = vmatpush1.bf16.msra.mxu0 %v2582
  %2602 = vmatprep.subr.bf16.mxu0 0
  %2603 = vmatpush1.bf16.msra.mxu0 %v2581
  %2604 = vmatprep.subr.bf16.mxu0 0
  %2605 = vmatpush1.bf16.msra.mxu0 %v2580
  %2606 = vmatprep.subr.bf16.mxu0 0
  %2607 = vmatpush1.bf16.msra.mxu0 %v2579
  %2608 = vmatprep.subr.bf16.mxu0 0
  %2609 = vmatpush1.bf16.msra.mxu0 %v2578
  %2610 = vmatprep.subr.bf16.mxu0 0
  %2611 = vmatpush2.bf16.msra.mxu0 0
  %2612 = vmatprep.subr.bf16.mxu0 0
  %2613 = vmatpush2.bf16.msra.mxu0 0
  %2614 = vmatprep.subr.bf16.mxu0 0
  %2615 = vmatpush2.bf16.msra.mxu0 0
  %2616 = vmatprep.subr.bf16.mxu0 0
  %2617 = vmatpush2.bf16.msra.mxu0 0
  %2618 = vmatprep.subr.bf16.mxu0 0
  %2619 = vmatpush2.bf16.msra.mxu0 0
  %2620 = vmatprep.subr.bf16.mxu0 0
  %2621 = vmatpush2.bf16.msra.mxu0 0
  %2622 = vmatprep.subr.bf16.mxu0 0
  %2623 = vmatpush2.bf16.msra.mxu0 0
  %2624 = vmatprep.subr.bf16.mxu0 0
  %2625 = vmatpush2.bf16.msra.mxu0 0
  %2626 = vmatprep.mubr.bf16.mxu0 0
  %2627 = vmatmul.mubr.bf16.gmra.mxu0 %v2541
  %v2628 = vpop.f32.mrf.mxu0
  %v2629 = vadd.f32 %v2545, %v2628
  %v2630 = vpop.f32.mrf.mxu0
  %v2631 = vpop.f32.mrf.mxu0
  %v2632 = vadd.f32 %v2545, %v2631
  %v2633 = vpop.f32.mrf.mxu0
  %2634 = vdwg.mxu0
  %v2635 = vadd.f32 %v2394, %v2629
  %v2636 = vadd.f32 %v2395, %v2632
  %v2637 = vsel %vm648, %v2635, 0.0
  %2638 = vadd.xlane.f32.xlu0 %v2637
  %v2639 = vpop.xlane.xlu0 %2638
  %v2640 = vsel %vm652, %v2636, 0.0
  %2641 = vadd.xlane.f32.xlu0 %v2640
  %v2642 = vpop.xlane.xlu0 %2641
  %v2643 = vmul.f32 %v2639, %v656
  %v2644 = vmul.f32 %v2642, %v656
  %v2645 = vsub.f32 %v2635, %v2643
  %v2646 = vsub.f32 %v2636, %v2644
  %v2647 = vmul.f32 %v2645, %v2645
  %v2648 = vmul.f32 %v2646, %v2646
  %v2649 = vsel %vm648, %v2647, 0.0
  %2650 = vadd.xlane.f32.xlu0 %v2649
  %v2651 = vpop.xlane.xlu0 %2650
  %v2652 = vsel %vm652, %v2648, 0.0
  %2653 = vadd.xlane.f32.xlu0 %v2652
  %v2654 = vpop.xlane.xlu0 %2653
  %v2655 = vmul.f32 %v2651, %v656
  %v2656 = vmul.f32 %v2654, %v656
  %v2657 = vadd.f32 %v2655, 1e-06
  %v2658 = vadd.f32 %v2656, 1e-06
  %v2659 = vrsqrt.pop %v2657
  %v2660 = vrsqrt.pop %v2658
  %v2661 = vmul.f32 %v2645, %v2659
  %v2662 = vmul.f32 %v2646, %v2660
  %v2663 = vlaneseq
  %v2664 = vshrl.u32 %v2663, 7
  %v2665 = vsub.s32 1, %v2664
  %v2666 = vrot.slane %v641, %v2665
  %v2667 = vmul.f32 %v2661, %v2666
  %v2668 = vmul.f32 %v2662, %v2666
  %v2669 = vlaneseq
  %v2670 = vshrl.u32 %v2669, 7
  %v2671 = vsub.s32 1, %v2670
  %v2672 = vrot.slane %v642, %v2671
  %v2673 = vadd.f32 %v2667, %v2672
  %v2674 = vadd.f32 %v2668, %v2672
  %s2675 = scalar_lea.vmem %s5, 128
  %v2676 = vld [vmem:[%s2675] sm:$0xf]
  %v2677 = vld [vmem:[%s2675 + $0x4] sm:$0xf]
  %v2678 = vld [vmem:[%s2675 + $0x8] sm:$0xf]
  %v2679 = vld [vmem:[%s2675 + $0xc] sm:$0xf]
  %v2680 = vld [vmem:[%s2675 + $0x10] sm:$0xf]
  %v2681 = vld [vmem:[%s2675 + $0x14] sm:$0xf]
  %v2682 = vld [vmem:[%s2675 + $0x18] sm:$0xf]
  %v2683 = vld [vmem:[%s2675 + $0x1c] sm:$0xf]
  %v2684 = vpack.c.bf16 %v2674, %v2673
  %s2685 = scalar_lea.vmem %s8, 4
  %v2686 = vld [vmem:[%s2685] sm:$0x1]
  %v2688 = vlaneseq
  %v2689 = vshrl.u32 %v2688, 7
  %v2690 = vsub.s32 0, %v2689
  %v2691 = vrot.slane %v2686, %v2690
  %v2701 = vunpack.c.l.b16 %v2676
  %v2702 = vunpack.c.l.b16 %v2677
  %v2703 = vunpack.c.l.b16 %v2678
  %v2704 = vunpack.c.l.b16 %v2679
  %v2705 = vunpack.c.l.b16 %v2680
  %v2706 = vunpack.c.l.b16 %v2681
  %v2707 = vunpack.c.l.b16 %v2682
  %v2708 = vunpack.c.l.b16 %v2683
  %v2709 = vpack.c.b16 %v2702, %v2701
  %v2710 = vpack.c.b16 %v2704, %v2703
  %v2711 = vpack.c.b16 %v2706, %v2705
  %v2712 = vpack.c.b16 %v2708, %v2707
  %v2718 = vsel %vm648, %v2684, 0
  %2720 = vmatprep.subr.bf16.mxu0 0
  %2721 = vmatpush1.bf16.msra.mxu0 0
  %2722 = vmatprep.subr.bf16.mxu0 0
  %2723 = vmatpush1.bf16.msra.mxu0 0
  %2724 = vmatprep.subr.bf16.mxu0 0
  %2725 = vmatpush1.bf16.msra.mxu0 0
  %2726 = vmatprep.subr.bf16.mxu0 0
  %2727 = vmatpush1.bf16.msra.mxu0 0
  %2728 = vmatprep.subr.bf16.mxu0 0
  %2729 = vmatpush1.bf16.msra.mxu0 %v2712
  %2730 = vmatprep.subr.bf16.mxu0 0
  %2731 = vmatpush1.bf16.msra.mxu0 %v2711
  %2732 = vmatprep.subr.bf16.mxu0 0
  %2733 = vmatpush1.bf16.msra.mxu0 %v2710
  %2734 = vmatprep.subr.bf16.mxu0 0
  %2735 = vmatpush1.bf16.msra.mxu0 %v2709
  %2736 = vmatprep.subr.bf16.mxu0 0
  %2737 = vmatpush2.bf16.msra.mxu0 0
  %2738 = vmatprep.subr.bf16.mxu0 0
  %2739 = vmatpush2.bf16.msra.mxu0 0
  %2740 = vmatprep.subr.bf16.mxu0 0
  %2741 = vmatpush2.bf16.msra.mxu0 0
  %2742 = vmatprep.subr.bf16.mxu0 0
  %2743 = vmatpush2.bf16.msra.mxu0 0
  %2744 = vmatprep.subr.bf16.mxu0 0
  %2745 = vmatpush2.bf16.msra.mxu0 0
  %2746 = vmatprep.subr.bf16.mxu0 0
  %2747 = vmatpush2.bf16.msra.mxu0 0
  %2748 = vmatprep.subr.bf16.mxu0 0
  %2749 = vmatpush2.bf16.msra.mxu0 0
  %2750 = vmatprep.subr.bf16.mxu0 0
  %2751 = vmatpush2.bf16.msra.mxu0 0
  %2752 = vmatprep.mubr.bf16.mxu0 0
  %2753 = vmatmul.mubr.bf16.gmra.mxu0 %v2718
  %v2754 = vpop.f32.mrf.mxu0
  %v2755 = vadd.f32 %v2691, %v2754
  %v2756 = vpop.f32.mrf.mxu0
  %v2757 = vpop.f32.mrf.mxu0
  %v2758 = vadd.f32 %v2691, %v2757
  %v2759 = vpop.f32.mrf.mxu0
  %2760 = vdwg.mxu0
  %s2761 = scalar_lea.vmem %s6, 128
  %v2762 = vld [vmem:[%s2761] sm:$0xf]
  %v2763 = vld [vmem:[%s2761 + $0x4] sm:$0xf]
  %v2764 = vld [vmem:[%s2761 + $0x8] sm:$0xf]
  %v2765 = vld [vmem:[%s2761 + $0xc] sm:$0xf]
  %v2766 = vld [vmem:[%s2761 + $0x10] sm:$0xf]
  %v2767 = vld [vmem:[%s2761 + $0x14] sm:$0xf]
  %v2768 = vld [vmem:[%s2761 + $0x18] sm:$0xf]
  %v2769 = vld [vmem:[%s2761 + $0x1c] sm:$0xf]
  %s2770 = scalar_lea.vmem %s9, 4
  %v2771 = vld [vmem:[%s2770] sm:$0x1]
  %v2773 = vlaneseq
  %v2774 = vshrl.u32 %v2773, 7
  %v2775 = vsub.s32 0, %v2774
  %v2776 = vrot.slane %v2771, %v2775
  %v2786 = vunpack.c.l.b16 %v2762
  %v2787 = vunpack.c.l.b16 %v2763
  %v2788 = vunpack.c.l.b16 %v2764
  %v2789 = vunpack.c.l.b16 %v2765
  %v2790 = vunpack.c.l.b16 %v2766
  %v2791 = vunpack.c.l.b16 %v2767
  %v2792 = vunpack.c.l.b16 %v2768
  %v2793 = vunpack.c.l.b16 %v2769
  %v2794 = vpack.c.b16 %v2787, %v2786
  %v2795 = vpack.c.b16 %v2789, %v2788
  %v2796 = vpack.c.b16 %v2791, %v2790
  %v2797 = vpack.c.b16 %v2793, %v2792
  %2802 = vmatprep.subr.bf16.mxu0 0
  %2803 = vmatpush1.bf16.msra.mxu0 0
  %2804 = vmatprep.subr.bf16.mxu0 0
  %2805 = vmatpush1.bf16.msra.mxu0 0
  %2806 = vmatprep.subr.bf16.mxu0 0
  %2807 = vmatpush1.bf16.msra.mxu0 0
  %2808 = vmatprep.subr.bf16.mxu0 0
  %2809 = vmatpush1.bf16.msra.mxu0 0
  %2810 = vmatprep.subr.bf16.mxu0 0
  %2811 = vmatpush1.bf16.msra.mxu0 %v2797
  %2812 = vmatprep.subr.bf16.mxu0 0
  %2813 = vmatpush1.bf16.msra.mxu0 %v2796
  %2814 = vmatprep.subr.bf16.mxu0 0
  %2815 = vmatpush1.bf16.msra.mxu0 %v2795
  %2816 = vmatprep.subr.bf16.mxu0 0
  %2817 = vmatpush1.bf16.msra.mxu0 %v2794
  %2818 = vmatprep.subr.bf16.mxu0 0
  %2819 = vmatpush2.bf16.msra.mxu0 0
  %2820 = vmatprep.subr.bf16.mxu0 0
  %2821 = vmatpush2.bf16.msra.mxu0 0
  %2822 = vmatprep.subr.bf16.mxu0 0
  %2823 = vmatpush2.bf16.msra.mxu0 0
  %2824 = vmatprep.subr.bf16.mxu0 0
  %2825 = vmatpush2.bf16.msra.mxu0 0
  %2826 = vmatprep.subr.bf16.mxu0 0
  %2827 = vmatpush2.bf16.msra.mxu0 0
  %2828 = vmatprep.subr.bf16.mxu0 0
  %2829 = vmatpush2.bf16.msra.mxu0 0
  %2830 = vmatprep.subr.bf16.mxu0 0
  %2831 = vmatpush2.bf16.msra.mxu0 0
  %2832 = vmatprep.subr.bf16.mxu0 0
  %2833 = vmatpush2.bf16.msra.mxu0 0
  %2834 = vmatprep.mubr.bf16.mxu0 0
  %2835 = vmatmul.mubr.bf16.gmra.mxu0 %v2718
  %v2836 = vpop.f32.mrf.mxu0
  %v2837 = vadd.f32 %v2776, %v2836
  %v2838 = vpop.f32.mrf.mxu0
  %v2839 = vpop.f32.mrf.mxu0
  %v2840 = vadd.f32 %v2776, %v2839
  %v2841 = vpop.f32.mrf.mxu0
  %2842 = vdwg.mxu0
  %s2843 = scalar_lea.vmem %s7, 128
  %v2844 = vld [vmem:[%s2843] sm:$0xf]
  %v2845 = vld [vmem:[%s2843 + $0x4] sm:$0xf]
  %v2846 = vld [vmem:[%s2843 + $0x8] sm:$0xf]
  %v2847 = vld [vmem:[%s2843 + $0xc] sm:$0xf]
  %v2848 = vld [vmem:[%s2843 + $0x10] sm:$0xf]
  %v2849 = vld [vmem:[%s2843 + $0x14] sm:$0xf]
  %v2850 = vld [vmem:[%s2843 + $0x18] sm:$0xf]
  %v2851 = vld [vmem:[%s2843 + $0x1c] sm:$0xf]
  %s2852 = scalar_lea.vmem %s10, 4
  %v2853 = vld [vmem:[%s2852] sm:$0x1]
  %v2855 = vlaneseq
  %v2856 = vshrl.u32 %v2855, 7
  %v2857 = vsub.s32 0, %v2856
  %v2858 = vrot.slane %v2853, %v2857
  %v2868 = vunpack.c.l.b16 %v2844
  %v2869 = vunpack.c.l.b16 %v2845
  %v2870 = vunpack.c.l.b16 %v2846
  %v2871 = vunpack.c.l.b16 %v2847
  %v2872 = vunpack.c.l.b16 %v2848
  %v2873 = vunpack.c.l.b16 %v2849
  %v2874 = vunpack.c.l.b16 %v2850
  %v2875 = vunpack.c.l.b16 %v2851
  %v2876 = vpack.c.b16 %v2869, %v2868
  %v2877 = vpack.c.b16 %v2871, %v2870
  %v2878 = vpack.c.b16 %v2873, %v2872
  %v2879 = vpack.c.b16 %v2875, %v2874
  %2884 = vmatprep.subr.bf16.mxu0 0
  %2885 = vmatpush1.bf16.msra.mxu0 0
  %2886 = vmatprep.subr.bf16.mxu0 0
  %2887 = vmatpush1.bf16.msra.mxu0 0
  %2888 = vmatprep.subr.bf16.mxu0 0
  %2889 = vmatpush1.bf16.msra.mxu0 0
  %2890 = vmatprep.subr.bf16.mxu0 0
  %2891 = vmatpush1.bf16.msra.mxu0 0
  %2892 = vmatprep.subr.bf16.mxu0 0
  %2893 = vmatpush1.bf16.msra.mxu0 %v2879
  %2894 = vmatprep.subr.bf16.mxu0 0
  %2895 = vmatpush1.bf16.msra.mxu0 %v2878
  %2896 = vmatprep.subr.bf16.mxu0 0
  %2897 = vmatpush1.bf16.msra.mxu0 %v2877
  %2898 = vmatprep.subr.bf16.mxu0 0
  %2899 = vmatpush1.bf16.msra.mxu0 %v2876
  %2900 = vmatprep.subr.bf16.mxu0 0
  %2901 = vmatpush2.bf16.msra.mxu0 0
  %2902 = vmatprep.subr.bf16.mxu0 0
  %2903 = vmatpush2.bf16.msra.mxu0 0
  %2904 = vmatprep.subr.bf16.mxu0 0
  %2905 = vmatpush2.bf16.msra.mxu0 0
  %2906 = vmatprep.subr.bf16.mxu0 0
  %2907 = vmatpush2.bf16.msra.mxu0 0
  %2908 = vmatprep.subr.bf16.mxu0 0
  %2909 = vmatpush2.bf16.msra.mxu0 0
  %2910 = vmatprep.subr.bf16.mxu0 0
  %2911 = vmatpush2.bf16.msra.mxu0 0
  %2912 = vmatprep.subr.bf16.mxu0 0
  %2913 = vmatpush2.bf16.msra.mxu0 0
  %2914 = vmatprep.subr.bf16.mxu0 0
  %2915 = vmatpush2.bf16.msra.mxu0 0
  %2916 = vmatprep.mubr.bf16.mxu0 0
  %2917 = vmatmul.mubr.bf16.gmra.mxu0 %v2718
  %v2918 = vpop.f32.mrf.mxu0
  %v2919 = vadd.f32 %v2858, %v2918
  %v2920 = vpop.f32.mrf.mxu0
  %v2921 = vpop.f32.mrf.mxu0
  %v2922 = vadd.f32 %v2858, %v2921
  %v2923 = vpop.f32.mrf.mxu0
  %2924 = vdwg.mxu0
  %v2925 = vpack.c.bf16 %v2758, %v2755
  %v2926 = vpack.c.bf16 %v2840, %v2837
  %v2928 = vsel %vm935, %v2925, 0
  %v2931 = vsel %vm935, %v2926, 0
  %2933 = vmatprep.subr.bf16.mxu0 0
  %2934 = vmatpush1.bf16.xpose.msra.mxu0 0
  %2935 = vmatprep.subr.bf16.mxu0 0
  %2936 = vmatpush1.bf16.xpose.msra.mxu0 0
  %2937 = vmatprep.subr.bf16.mxu0 0
  %2938 = vmatpush1.bf16.xpose.msra.mxu0 0
  %2939 = vmatprep.subr.bf16.mxu0 0
  %2940 = vmatpush1.bf16.xpose.msra.mxu0 0
  %2941 = vmatprep.subr.bf16.mxu0 0
  %2942 = vmatpush1.bf16.xpose.msra.mxu0 0
  %2943 = vmatprep.subr.bf16.mxu0 0
  %2944 = vmatpush1.bf16.xpose.msra.mxu0 0
  %2945 = vmatprep.subr.bf16.mxu0 0
  %2946 = vmatpush1.bf16.xpose.msra.mxu0 0
  %2947 = vmatprep.subr.bf16.mxu0 0
  %2948 = vmatpush1.bf16.xpose.msra.mxu0 %v2931
  %2949 = vmatprep.subr.bf16.mxu0 0
  %2950 = vmatpush2.bf16.xpose.msra.mxu0 0
  %2951 = vmatprep.subr.bf16.mxu0 0
  %2952 = vmatpush2.bf16.xpose.msra.mxu0 0
  %2953 = vmatprep.subr.bf16.mxu0 0
  %2954 = vmatpush2.bf16.xpose.msra.mxu0 0
  %2955 = vmatprep.subr.bf16.mxu0 0
  %2956 = vmatpush2.bf16.xpose.msra.mxu0 0
  %2957 = vmatprep.subr.bf16.mxu0 0
  %2958 = vmatpush2.bf16.xpose.msra.mxu0 0
  %2959 = vmatprep.subr.bf16.mxu0 0
  %2960 = vmatpush2.bf16.xpose.msra.mxu0 0
  %2961 = vmatprep.subr.bf16.mxu0 0
  %2962 = vmatpush2.bf16.xpose.msra.mxu0 0
  %2963 = vmatprep.subr.bf16.mxu0 0
  %2964 = vmatpush2.bf16.xpose.msra.mxu0 0
  %2965 = vmatprep.mubr.bf16.mxu0 0
  %2966 = vmatmul.mubr.bf16.gmra.mxu0 %v2928
  %v2967 = vpop.f32.mrf.mxu0
  %v2968 = vadd.f32 0.0, %v2967
  %v2969 = vpop.f32.mrf.mxu0
  %v2970 = vpop.f32.mrf.mxu0
  %v2971 = vadd.f32 0.0, %v2970
  %v2972 = vpop.f32.mrf.mxu0
  %2973 = vdwg.mxu0
  %v2974 = vmul.f32 %v2968, 0.25
  %v2975 = vmul.f32 %v2971, 0.25
  %v2976 = vadd.f32 %v2974, %v94
  %v2977 = vadd.f32 %v2975, %v95
  %v2978 = vsel %vm987, %v2976, -inf
  %2979 = vmax.xlane.f32.xlu0 %v2978
  %v2980 = vpop.xlane.xlu0 %2979
  %v2981 = vsel %vm991, %v2977, -inf
  %2982 = vmax.xlane.f32.xlu0 %v2981
  %v2983 = vpop.xlane.xlu0 %2982
  %v2984 = vsub.f32 %v2976, %v2980
  %v2985 = vsub.f32 %v2977, %v2983
  %v2986 = vmul.f32 %v2984, 1.442695
  %v2987 = vpow.pop %v2986
  %v2988 = vmul.f32 %v2985, 1.442695
  %v2989 = vpow.pop %v2988
  %v2990 = vsel %vm987, %v2987, 0.0
  %2991 = vadd.xlane.f32.xlu0 %v2990
  %v2992 = vpop.xlane.xlu0 %2991
  %v2993 = vsel %vm991, %v2989, 0.0
  %2994 = vadd.xlane.f32.xlu0 %v2993
  %v2995 = vpop.xlane.xlu0 %2994
  %v2996 = vrcp.pop %v2992
  %v2997 = vrcp.pop %v2995
  %v2998 = vmul.f32 %v2987, %v2996
  %v2999 = vmul.f32 %v2989, %v2997
  %v3000 = vpack.c.bf16 %v2999, %v2998
  %v3001 = vpack.c.bf16 %v2922, %v2919
  %v3003 = vsel %vm987, %v3000, 0
  %v3006 = vsel %vm1016, %v3001, 0
  %3008 = vmatprep.subr.bf16.mxu0 0
  %3009 = vmatpush1.bf16.msra.mxu0 0
  %3010 = vmatprep.subr.bf16.mxu0 0
  %3011 = vmatpush1.bf16.msra.mxu0 0
  %3012 = vmatprep.subr.bf16.mxu0 0
  %3013 = vmatpush1.bf16.msra.mxu0 0
  %3014 = vmatprep.subr.bf16.mxu0 0
  %3015 = vmatpush1.bf16.msra.mxu0 0
  %3016 = vmatprep.subr.bf16.mxu0 0
  %3017 = vmatpush1.bf16.msra.mxu0 0
  %3018 = vmatprep.subr.bf16.mxu0 0
  %3019 = vmatpush1.bf16.msra.mxu0 0
  %3020 = vmatprep.subr.bf16.mxu0 0
  %3021 = vmatpush1.bf16.msra.mxu0 0
  %3022 = vmatprep.subr.bf16.mxu0 0
  %3023 = vmatpush1.bf16.msra.mxu0 %v3006
  %3024 = vmatprep.subr.bf16.mxu0 0
  %3025 = vmatpush2.bf16.msra.mxu0 0
  %3026 = vmatprep.subr.bf16.mxu0 0
  %3027 = vmatpush2.bf16.msra.mxu0 0
  %3028 = vmatprep.subr.bf16.mxu0 0
  %3029 = vmatpush2.bf16.msra.mxu0 0
  %3030 = vmatprep.subr.bf16.mxu0 0
  %3031 = vmatpush2.bf16.msra.mxu0 0
  %3032 = vmatprep.subr.bf16.mxu0 0
  %3033 = vmatpush2.bf16.msra.mxu0 0
  %3034 = vmatprep.subr.bf16.mxu0 0
  %3035 = vmatpush2.bf16.msra.mxu0 0
  %3036 = vmatprep.subr.bf16.mxu0 0
  %3037 = vmatpush2.bf16.msra.mxu0 0
  %3038 = vmatprep.subr.bf16.mxu0 0
  %3039 = vmatpush2.bf16.msra.mxu0 0
  %3040 = vmatprep.mubr.bf16.mxu0 0
  %3041 = vmatmul.mubr.bf16.gmra.mxu0 %v3003
  %v3042 = vpop.f32.mrf.mxu0
  %v3043 = vadd.f32 0.0, %v3042
  %v3044 = vpop.f32.mrf.mxu0
  %v3045 = vpop.f32.mrf.mxu0
  %v3046 = vadd.f32 0.0, %v3045
  %v3047 = vpop.f32.mrf.mxu0
  %3048 = vdwg.mxu0
  %s3049 = scalar_lea.vmem %s11, 32
  %v3050 = vld [vmem:[%s3049] sm:$0xf]
  %v3051 = vld [vmem:[%s3049 + $0x4] sm:$0xf]
  %v3052 = vpack.c.bf16 %v3046, %v3043
  %s3053 = scalar_lea.vmem %s5, 160
  %v3054 = vld [vmem:[%s3053] sm:$0xf]
  %v3055 = vld [vmem:[%s3053 + $0x4] sm:$0xf]
  %v3056 = vld [vmem:[%s3053 + $0x8] sm:$0xf]
  %v3057 = vld [vmem:[%s3053 + $0xc] sm:$0xf]
  %v3058 = vld [vmem:[%s3053 + $0x10] sm:$0xf]
  %v3059 = vld [vmem:[%s3053 + $0x14] sm:$0xf]
  %v3060 = vld [vmem:[%s3053 + $0x18] sm:$0xf]
  %v3061 = vld [vmem:[%s3053 + $0x1c] sm:$0xf]
  %s3062 = scalar_lea.vmem %s8, 5
  %v3063 = vld [vmem:[%s3062] sm:$0x1]
  %v3065 = vlaneseq
  %v3066 = vshrl.u32 %v3065, 7
  %v3067 = vsub.s32 0, %v3066
  %v3068 = vrot.slane %v3063, %v3067
  %v3078 = vunpack.c.l.b16 %v3054
  %v3079 = vunpack.c.l.b16 %v3055
  %v3080 = vunpack.c.l.b16 %v3056
  %v3081 = vunpack.c.l.b16 %v3057
  %v3082 = vunpack.c.l.b16 %v3058
  %v3083 = vunpack.c.l.b16 %v3059
  %v3084 = vunpack.c.l.b16 %v3060
  %v3085 = vunpack.c.l.b16 %v3061
  %v3086 = vpack.c.b16 %v3079, %v3078
  %v3087 = vpack.c.b16 %v3081, %v3080
  %v3088 = vpack.c.b16 %v3083, %v3082
  %v3089 = vpack.c.b16 %v3085, %v3084
  %3094 = vmatprep.subr.bf16.mxu0 0
  %3095 = vmatpush1.bf16.msra.mxu0 0
  %3096 = vmatprep.subr.bf16.mxu0 0
  %3097 = vmatpush1.bf16.msra.mxu0 0
  %3098 = vmatprep.subr.bf16.mxu0 0
  %3099 = vmatpush1.bf16.msra.mxu0 0
  %3100 = vmatprep.subr.bf16.mxu0 0
  %3101 = vmatpush1.bf16.msra.mxu0 0
  %3102 = vmatprep.subr.bf16.mxu0 0
  %3103 = vmatpush1.bf16.msra.mxu0 %v3089
  %3104 = vmatprep.subr.bf16.mxu0 0
  %3105 = vmatpush1.bf16.msra.mxu0 %v3088
  %3106 = vmatprep.subr.bf16.mxu0 0
  %3107 = vmatpush1.bf16.msra.mxu0 %v3087
  %3108 = vmatprep.subr.bf16.mxu0 0
  %3109 = vmatpush1.bf16.msra.mxu0 %v3086
  %3110 = vmatprep.subr.bf16.mxu0 0
  %3111 = vmatpush2.bf16.msra.mxu0 0
  %3112 = vmatprep.subr.bf16.mxu0 0
  %3113 = vmatpush2.bf16.msra.mxu0 0
  %3114 = vmatprep.subr.bf16.mxu0 0
  %3115 = vmatpush2.bf16.msra.mxu0 0
  %3116 = vmatprep.subr.bf16.mxu0 0
  %3117 = vmatpush2.bf16.msra.mxu0 0
  %3118 = vmatprep.subr.bf16.mxu0 0
  %3119 = vmatpush2.bf16.msra.mxu0 0
  %3120 = vmatprep.subr.bf16.mxu0 0
  %3121 = vmatpush2.bf16.msra.mxu0 0
  %3122 = vmatprep.subr.bf16.mxu0 0
  %3123 = vmatpush2.bf16.msra.mxu0 0
  %3124 = vmatprep.subr.bf16.mxu0 0
  %3125 = vmatpush2.bf16.msra.mxu0 0
  %3126 = vmatprep.mubr.bf16.mxu0 0
  %3127 = vmatmul.mubr.bf16.gmra.mxu0 %v2718
  %v3128 = vpop.f32.mrf.mxu0
  %v3129 = vadd.f32 %v3068, %v3128
  %v3130 = vpop.f32.mrf.mxu0
  %v3131 = vpop.f32.mrf.mxu0
  %v3132 = vadd.f32 %v3068, %v3131
  %v3133 = vpop.f32.mrf.mxu0
  %3134 = vdwg.mxu0
  %s3135 = scalar_lea.vmem %s6, 160
  %v3136 = vld [vmem:[%s3135] sm:$0xf]
  %v3137 = vld [vmem:[%s3135 + $0x4] sm:$0xf]
  %v3138 = vld [vmem:[%s3135 + $0x8] sm:$0xf]
  %v3139 = vld [vmem:[%s3135 + $0xc] sm:$0xf]
  %v3140 = vld [vmem:[%s3135 + $0x10] sm:$0xf]
  %v3141 = vld [vmem:[%s3135 + $0x14] sm:$0xf]
  %v3142 = vld [vmem:[%s3135 + $0x18] sm:$0xf]
  %v3143 = vld [vmem:[%s3135 + $0x1c] sm:$0xf]
  %s3144 = scalar_lea.vmem %s9, 5
  %v3145 = vld [vmem:[%s3144] sm:$0x1]
  %v3147 = vlaneseq
  %v3148 = vshrl.u32 %v3147, 7
  %v3149 = vsub.s32 0, %v3148
  %v3150 = vrot.slane %v3145, %v3149
  %v3160 = vunpack.c.l.b16 %v3136
  %v3161 = vunpack.c.l.b16 %v3137
  %v3162 = vunpack.c.l.b16 %v3138
  %v3163 = vunpack.c.l.b16 %v3139
  %v3164 = vunpack.c.l.b16 %v3140
  %v3165 = vunpack.c.l.b16 %v3141
  %v3166 = vunpack.c.l.b16 %v3142
  %v3167 = vunpack.c.l.b16 %v3143
  %v3168 = vpack.c.b16 %v3161, %v3160
  %v3169 = vpack.c.b16 %v3163, %v3162
  %v3170 = vpack.c.b16 %v3165, %v3164
  %v3171 = vpack.c.b16 %v3167, %v3166
  %3176 = vmatprep.subr.bf16.mxu0 0
  %3177 = vmatpush1.bf16.msra.mxu0 0
  %3178 = vmatprep.subr.bf16.mxu0 0
  %3179 = vmatpush1.bf16.msra.mxu0 0
  %3180 = vmatprep.subr.bf16.mxu0 0
  %3181 = vmatpush1.bf16.msra.mxu0 0
  %3182 = vmatprep.subr.bf16.mxu0 0
  %3183 = vmatpush1.bf16.msra.mxu0 0
  %3184 = vmatprep.subr.bf16.mxu0 0
  %3185 = vmatpush1.bf16.msra.mxu0 %v3171
  %3186 = vmatprep.subr.bf16.mxu0 0
  %3187 = vmatpush1.bf16.msra.mxu0 %v3170
  %3188 = vmatprep.subr.bf16.mxu0 0
  %3189 = vmatpush1.bf16.msra.mxu0 %v3169
  %3190 = vmatprep.subr.bf16.mxu0 0
  %3191 = vmatpush1.bf16.msra.mxu0 %v3168
  %3192 = vmatprep.subr.bf16.mxu0 0
  %3193 = vmatpush2.bf16.msra.mxu0 0
  %3194 = vmatprep.subr.bf16.mxu0 0
  %3195 = vmatpush2.bf16.msra.mxu0 0
  %3196 = vmatprep.subr.bf16.mxu0 0
  %3197 = vmatpush2.bf16.msra.mxu0 0
  %3198 = vmatprep.subr.bf16.mxu0 0
  %3199 = vmatpush2.bf16.msra.mxu0 0
  %3200 = vmatprep.subr.bf16.mxu0 0
  %3201 = vmatpush2.bf16.msra.mxu0 0
  %3202 = vmatprep.subr.bf16.mxu0 0
  %3203 = vmatpush2.bf16.msra.mxu0 0
  %3204 = vmatprep.subr.bf16.mxu0 0
  %3205 = vmatpush2.bf16.msra.mxu0 0
  %3206 = vmatprep.subr.bf16.mxu0 0
  %3207 = vmatpush2.bf16.msra.mxu0 0
  %3208 = vmatprep.mubr.bf16.mxu0 0
  %3209 = vmatmul.mubr.bf16.gmra.mxu0 %v2718
  %v3210 = vpop.f32.mrf.mxu0
  %v3211 = vadd.f32 %v3150, %v3210
  %v3212 = vpop.f32.mrf.mxu0
  %v3213 = vpop.f32.mrf.mxu0
  %v3214 = vadd.f32 %v3150, %v3213
  %v3215 = vpop.f32.mrf.mxu0
  %3216 = vdwg.mxu0
  %s3217 = scalar_lea.vmem %s7, 160
  %v3218 = vld [vmem:[%s3217] sm:$0xf]
  %v3219 = vld [vmem:[%s3217 + $0x4] sm:$0xf]
  %v3220 = vld [vmem:[%s3217 + $0x8] sm:$0xf]
  %v3221 = vld [vmem:[%s3217 + $0xc] sm:$0xf]
  %v3222 = vld [vmem:[%s3217 + $0x10] sm:$0xf]
  %v3223 = vld [vmem:[%s3217 + $0x14] sm:$0xf]
  %v3224 = vld [vmem:[%s3217 + $0x18] sm:$0xf]
  %v3225 = vld [vmem:[%s3217 + $0x1c] sm:$0xf]
  %s3226 = scalar_lea.vmem %s10, 5
  %v3227 = vld [vmem:[%s3226] sm:$0x1]
  %v3229 = vlaneseq
  %v3230 = vshrl.u32 %v3229, 7
  %v3231 = vsub.s32 0, %v3230
  %v3232 = vrot.slane %v3227, %v3231
  %v3242 = vunpack.c.l.b16 %v3218
  %v3243 = vunpack.c.l.b16 %v3219
  %v3244 = vunpack.c.l.b16 %v3220
  %v3245 = vunpack.c.l.b16 %v3221
  %v3246 = vunpack.c.l.b16 %v3222
  %v3247 = vunpack.c.l.b16 %v3223
  %v3248 = vunpack.c.l.b16 %v3224
  %v3249 = vunpack.c.l.b16 %v3225
  %v3250 = vpack.c.b16 %v3243, %v3242
  %v3251 = vpack.c.b16 %v3245, %v3244
  %v3252 = vpack.c.b16 %v3247, %v3246
  %v3253 = vpack.c.b16 %v3249, %v3248
  %3258 = vmatprep.subr.bf16.mxu0 0
  %3259 = vmatpush1.bf16.msra.mxu0 0
  %3260 = vmatprep.subr.bf16.mxu0 0
  %3261 = vmatpush1.bf16.msra.mxu0 0
  %3262 = vmatprep.subr.bf16.mxu0 0
  %3263 = vmatpush1.bf16.msra.mxu0 0
  %3264 = vmatprep.subr.bf16.mxu0 0
  %3265 = vmatpush1.bf16.msra.mxu0 0
  %3266 = vmatprep.subr.bf16.mxu0 0
  %3267 = vmatpush1.bf16.msra.mxu0 %v3253
  %3268 = vmatprep.subr.bf16.mxu0 0
  %3269 = vmatpush1.bf16.msra.mxu0 %v3252
  %3270 = vmatprep.subr.bf16.mxu0 0
  %3271 = vmatpush1.bf16.msra.mxu0 %v3251
  %3272 = vmatprep.subr.bf16.mxu0 0
  %3273 = vmatpush1.bf16.msra.mxu0 %v3250
  %3274 = vmatprep.subr.bf16.mxu0 0
  %3275 = vmatpush2.bf16.msra.mxu0 0
  %3276 = vmatprep.subr.bf16.mxu0 0
  %3277 = vmatpush2.bf16.msra.mxu0 0
  %3278 = vmatprep.subr.bf16.mxu0 0
  %3279 = vmatpush2.bf16.msra.mxu0 0
  %3280 = vmatprep.subr.bf16.mxu0 0
  %3281 = vmatpush2.bf16.msra.mxu0 0
  %3282 = vmatprep.subr.bf16.mxu0 0
  %3283 = vmatpush2.bf16.msra.mxu0 0
  %3284 = vmatprep.subr.bf16.mxu0 0
  %3285 = vmatpush2.bf16.msra.mxu0 0
  %3286 = vmatprep.subr.bf16.mxu0 0
  %3287 = vmatpush2.bf16.msra.mxu0 0
  %3288 = vmatprep.subr.bf16.mxu0 0
  %3289 = vmatpush2.bf16.msra.mxu0 0
  %3290 = vmatprep.mubr.bf16.mxu0 0
  %3291 = vmatmul.mubr.bf16.gmra.mxu0 %v2718
  %v3292 = vpop.f32.mrf.mxu0
  %v3293 = vadd.f32 %v3232, %v3292
  %v3294 = vpop.f32.mrf.mxu0
  %v3295 = vpop.f32.mrf.mxu0
  %v3296 = vadd.f32 %v3232, %v3295
  %v3297 = vpop.f32.mrf.mxu0
  %3298 = vdwg.mxu0
  %v3299 = vpack.c.bf16 %v3132, %v3129
  %v3300 = vpack.c.bf16 %v3214, %v3211
  %v3302 = vsel %vm935, %v3299, 0
  %v3305 = vsel %vm935, %v3300, 0
  %3307 = vmatprep.subr.bf16.mxu0 0
  %3308 = vmatpush1.bf16.xpose.msra.mxu0 0
  %3309 = vmatprep.subr.bf16.mxu0 0
  %3310 = vmatpush1.bf16.xpose.msra.mxu0 0
  %3311 = vmatprep.subr.bf16.mxu0 0
  %3312 = vmatpush1.bf16.xpose.msra.mxu0 0
  %3313 = vmatprep.subr.bf16.mxu0 0
  %3314 = vmatpush1.bf16.xpose.msra.mxu0 0
  %3315 = vmatprep.subr.bf16.mxu0 0
  %3316 = vmatpush1.bf16.xpose.msra.mxu0 0
  %3317 = vmatprep.subr.bf16.mxu0 0
  %3318 = vmatpush1.bf16.xpose.msra.mxu0 0
  %3319 = vmatprep.subr.bf16.mxu0 0
  %3320 = vmatpush1.bf16.xpose.msra.mxu0 0
  %3321 = vmatprep.subr.bf16.mxu0 0
  %3322 = vmatpush1.bf16.xpose.msra.mxu0 %v3305
  %3323 = vmatprep.subr.bf16.mxu0 0
  %3324 = vmatpush2.bf16.xpose.msra.mxu0 0
  %3325 = vmatprep.subr.bf16.mxu0 0
  %3326 = vmatpush2.bf16.xpose.msra.mxu0 0
  %3327 = vmatprep.subr.bf16.mxu0 0
  %3328 = vmatpush2.bf16.xpose.msra.mxu0 0
  %3329 = vmatprep.subr.bf16.mxu0 0
  %3330 = vmatpush2.bf16.xpose.msra.mxu0 0
  %3331 = vmatprep.subr.bf16.mxu0 0
  %3332 = vmatpush2.bf16.xpose.msra.mxu0 0
  %3333 = vmatprep.subr.bf16.mxu0 0
  %3334 = vmatpush2.bf16.xpose.msra.mxu0 0
  %3335 = vmatprep.subr.bf16.mxu0 0
  %3336 = vmatpush2.bf16.xpose.msra.mxu0 0
  %3337 = vmatprep.subr.bf16.mxu0 0
  %3338 = vmatpush2.bf16.xpose.msra.mxu0 0
  %3339 = vmatprep.mubr.bf16.mxu0 0
  %3340 = vmatmul.mubr.bf16.gmra.mxu0 %v3302
  %v3341 = vpop.f32.mrf.mxu0
  %v3342 = vadd.f32 0.0, %v3341
  %v3343 = vpop.f32.mrf.mxu0
  %v3344 = vpop.f32.mrf.mxu0
  %v3345 = vadd.f32 0.0, %v3344
  %v3346 = vpop.f32.mrf.mxu0
  %3347 = vdwg.mxu0
  %v3348 = vmul.f32 %v3342, 0.25
  %v3349 = vmul.f32 %v3345, 0.25
  %v3350 = vadd.f32 %v3348, %v94
  %v3351 = vadd.f32 %v3349, %v95
  %v3352 = vsel %vm987, %v3350, -inf
  %3353 = vmax.xlane.f32.xlu0 %v3352
  %v3354 = vpop.xlane.xlu0 %3353
  %v3355 = vsel %vm991, %v3351, -inf
  %3356 = vmax.xlane.f32.xlu0 %v3355
  %v3357 = vpop.xlane.xlu0 %3356
  %v3358 = vsub.f32 %v3350, %v3354
  %v3359 = vsub.f32 %v3351, %v3357
  %v3360 = vmul.f32 %v3358, 1.442695
  %v3361 = vpow.pop %v3360
  %v3362 = vmul.f32 %v3359, 1.442695
  %v3363 = vpow.pop %v3362
  %v3364 = vsel %vm987, %v3361, 0.0
  %3365 = vadd.xlane.f32.xlu0 %v3364
  %v3366 = vpop.xlane.xlu0 %3365
  %v3367 = vsel %vm991, %v3363, 0.0
  %3368 = vadd.xlane.f32.xlu0 %v3367
  %v3369 = vpop.xlane.xlu0 %3368
  %v3370 = vrcp.pop %v3366
  %v3371 = vrcp.pop %v3369
  %v3372 = vmul.f32 %v3361, %v3370
  %v3373 = vmul.f32 %v3363, %v3371
  %v3374 = vpack.c.bf16 %v3373, %v3372
  %v3375 = vpack.c.bf16 %v3296, %v3293
  %v3377 = vsel %vm987, %v3374, 0
  %v3380 = vsel %vm1016, %v3375, 0
  %3382 = vmatprep.subr.bf16.mxu0 0
  %3383 = vmatpush1.bf16.msra.mxu0 0
  %3384 = vmatprep.subr.bf16.mxu0 0
  %3385 = vmatpush1.bf16.msra.mxu0 0
  %3386 = vmatprep.subr.bf16.mxu0 0
  %3387 = vmatpush1.bf16.msra.mxu0 0
  %3388 = vmatprep.subr.bf16.mxu0 0
  %3389 = vmatpush1.bf16.msra.mxu0 0
  %3390 = vmatprep.subr.bf16.mxu0 0
  %3391 = vmatpush1.bf16.msra.mxu0 0
  %3392 = vmatprep.subr.bf16.mxu0 0
  %3393 = vmatpush1.bf16.msra.mxu0 0
  %3394 = vmatprep.subr.bf16.mxu0 0
  %3395 = vmatpush1.bf16.msra.mxu0 0
  %3396 = vmatprep.subr.bf16.mxu0 0
  %3397 = vmatpush1.bf16.msra.mxu0 %v3380
  %3398 = vmatprep.subr.bf16.mxu0 0
  %3399 = vmatpush2.bf16.msra.mxu0 0
  %3400 = vmatprep.subr.bf16.mxu0 0
  %3401 = vmatpush2.bf16.msra.mxu0 0
  %3402 = vmatprep.subr.bf16.mxu0 0
  %3403 = vmatpush2.bf16.msra.mxu0 0
  %3404 = vmatprep.subr.bf16.mxu0 0
  %3405 = vmatpush2.bf16.msra.mxu0 0
  %3406 = vmatprep.subr.bf16.mxu0 0
  %3407 = vmatpush2.bf16.msra.mxu0 0
  %3408 = vmatprep.subr.bf16.mxu0 0
  %3409 = vmatpush2.bf16.msra.mxu0 0
  %3410 = vmatprep.subr.bf16.mxu0 0
  %3411 = vmatpush2.bf16.msra.mxu0 0
  %3412 = vmatprep.subr.bf16.mxu0 0
  %3413 = vmatpush2.bf16.msra.mxu0 0
  %3414 = vmatprep.mubr.bf16.mxu0 0
  %3415 = vmatmul.mubr.bf16.gmra.mxu0 %v3377
  %v3416 = vpop.f32.mrf.mxu0
  %v3417 = vadd.f32 0.0, %v3416
  %v3418 = vpop.f32.mrf.mxu0
  %v3419 = vpop.f32.mrf.mxu0
  %v3420 = vadd.f32 0.0, %v3419
  %v3421 = vpop.f32.mrf.mxu0
  %3422 = vdwg.mxu0
  %s3423 = scalar_lea.vmem %s11, 40
  %v3424 = vld [vmem:[%s3423] sm:$0xf]
  %v3425 = vld [vmem:[%s3423 + $0x4] sm:$0xf]
  %v3426 = vpack.c.bf16 %v3420, %v3417
  %v3429 = vunpack.c.l.b16 %v3424
  %v3430 = vunpack.c.l.b16 %v3425
  %v3431 = vpack.c.b16 %v3430, %v3429
  %v3434 = vsel %vm935, %v3426, 0
  %3436 = vmatprep.subr.bf16.mxu0 0
  %3437 = vmatpush1.bf16.msra.mxu0 0
  %3438 = vmatprep.subr.bf16.mxu0 0
  %3439 = vmatpush1.bf16.msra.mxu0 0
  %3440 = vmatprep.subr.bf16.mxu0 0
  %3441 = vmatpush1.bf16.msra.mxu0 0
  %3442 = vmatprep.subr.bf16.mxu0 0
  %3443 = vmatpush1.bf16.msra.mxu0 0
  %3444 = vmatprep.subr.bf16.mxu0 0
  %3445 = vmatpush1.bf16.msra.mxu0 0
  %3446 = vmatprep.subr.bf16.mxu0 0
  %3447 = vmatpush1.bf16.msra.mxu0 0
  %3448 = vmatprep.subr.bf16.mxu0 0
  %3449 = vmatpush1.bf16.msra.mxu0 0
  %3450 = vmatprep.subr.bf16.mxu0 0
  %3451 = vmatpush1.bf16.msra.mxu0 %v3431
  %3452 = vmatprep.subr.bf16.mxu0 0
  %3453 = vmatpush2.bf16.msra.mxu0 0
  %3454 = vmatprep.subr.bf16.mxu0 0
  %3455 = vmatpush2.bf16.msra.mxu0 0
  %3456 = vmatprep.subr.bf16.mxu0 0
  %3457 = vmatpush2.bf16.msra.mxu0 0
  %3458 = vmatprep.subr.bf16.mxu0 0
  %3459 = vmatpush2.bf16.msra.mxu0 0
  %3460 = vmatprep.subr.bf16.mxu0 0
  %3461 = vmatpush2.bf16.msra.mxu0 0
  %3462 = vmatprep.subr.bf16.mxu0 0
  %3463 = vmatpush2.bf16.msra.mxu0 0
  %3464 = vmatprep.subr.bf16.mxu0 0
  %3465 = vmatpush2.bf16.msra.mxu0 0
  %3466 = vmatprep.subr.bf16.mxu0 0
  %3467 = vmatpush2.bf16.msra.mxu0 0
  %3468 = vmatprep.mubr.bf16.mxu0 0
  %3469 = vmatmul.mubr.bf16.gmra.mxu0 %v3434
  %v3470 = vpop.f32.mrf.mxu0
  %v3471 = vadd.f32 0.0, %v3470
  %v3472 = vpop.f32.mrf.mxu0
  %v3473 = vpop.f32.mrf.mxu0
  %v3474 = vadd.f32 0.0, %v3473
  %v3475 = vpop.f32.mrf.mxu0
  %3476 = vdwg.mxu0
  %s3477 = scalar_lea.vmem %s5, 192
  %v3478 = vld [vmem:[%s3477] sm:$0xf]
  %v3479 = vld [vmem:[%s3477 + $0x4] sm:$0xf]
  %v3480 = vld [vmem:[%s3477 + $0x8] sm:$0xf]
  %v3481 = vld [vmem:[%s3477 + $0xc] sm:$0xf]
  %v3482 = vld [vmem:[%s3477 + $0x10] sm:$0xf]
  %v3483 = vld [vmem:[%s3477 + $0x14] sm:$0xf]
  %v3484 = vld [vmem:[%s3477 + $0x18] sm:$0xf]
  %v3485 = vld [vmem:[%s3477 + $0x1c] sm:$0xf]
  %s3486 = scalar_lea.vmem %s8, 6
  %v3487 = vld [vmem:[%s3486] sm:$0x1]
  %v3489 = vlaneseq
  %v3490 = vshrl.u32 %v3489, 7
  %v3491 = vsub.s32 0, %v3490
  %v3492 = vrot.slane %v3487, %v3491
  %v3502 = vunpack.c.l.b16 %v3478
  %v3503 = vunpack.c.l.b16 %v3479
  %v3504 = vunpack.c.l.b16 %v3480
  %v3505 = vunpack.c.l.b16 %v3481
  %v3506 = vunpack.c.l.b16 %v3482
  %v3507 = vunpack.c.l.b16 %v3483
  %v3508 = vunpack.c.l.b16 %v3484
  %v3509 = vunpack.c.l.b16 %v3485
  %v3510 = vpack.c.b16 %v3503, %v3502
  %v3511 = vpack.c.b16 %v3505, %v3504
  %v3512 = vpack.c.b16 %v3507, %v3506
  %v3513 = vpack.c.b16 %v3509, %v3508
  %3518 = vmatprep.subr.bf16.mxu0 0
  %3519 = vmatpush1.bf16.msra.mxu0 0
  %3520 = vmatprep.subr.bf16.mxu0 0
  %3521 = vmatpush1.bf16.msra.mxu0 0
  %3522 = vmatprep.subr.bf16.mxu0 0
  %3523 = vmatpush1.bf16.msra.mxu0 0
  %3524 = vmatprep.subr.bf16.mxu0 0
  %3525 = vmatpush1.bf16.msra.mxu0 0
  %3526 = vmatprep.subr.bf16.mxu0 0
  %3527 = vmatpush1.bf16.msra.mxu0 %v3513
  %3528 = vmatprep.subr.bf16.mxu0 0
  %3529 = vmatpush1.bf16.msra.mxu0 %v3512
  %3530 = vmatprep.subr.bf16.mxu0 0
  %3531 = vmatpush1.bf16.msra.mxu0 %v3511
  %3532 = vmatprep.subr.bf16.mxu0 0
  %3533 = vmatpush1.bf16.msra.mxu0 %v3510
  %3534 = vmatprep.subr.bf16.mxu0 0
  %3535 = vmatpush2.bf16.msra.mxu0 0
  %3536 = vmatprep.subr.bf16.mxu0 0
  %3537 = vmatpush2.bf16.msra.mxu0 0
  %3538 = vmatprep.subr.bf16.mxu0 0
  %3539 = vmatpush2.bf16.msra.mxu0 0
  %3540 = vmatprep.subr.bf16.mxu0 0
  %3541 = vmatpush2.bf16.msra.mxu0 0
  %3542 = vmatprep.subr.bf16.mxu0 0
  %3543 = vmatpush2.bf16.msra.mxu0 0
  %3544 = vmatprep.subr.bf16.mxu0 0
  %3545 = vmatpush2.bf16.msra.mxu0 0
  %3546 = vmatprep.subr.bf16.mxu0 0
  %3547 = vmatpush2.bf16.msra.mxu0 0
  %3548 = vmatprep.subr.bf16.mxu0 0
  %3549 = vmatpush2.bf16.msra.mxu0 0
  %3550 = vmatprep.mubr.bf16.mxu0 0
  %3551 = vmatmul.mubr.bf16.gmra.mxu0 %v2718
  %v3552 = vpop.f32.mrf.mxu0
  %v3553 = vadd.f32 %v3492, %v3552
  %v3554 = vpop.f32.mrf.mxu0
  %v3555 = vpop.f32.mrf.mxu0
  %v3556 = vadd.f32 %v3492, %v3555
  %v3557 = vpop.f32.mrf.mxu0
  %3558 = vdwg.mxu0
  %s3559 = scalar_lea.vmem %s6, 192
  %v3560 = vld [vmem:[%s3559] sm:$0xf]
  %v3561 = vld [vmem:[%s3559 + $0x4] sm:$0xf]
  %v3562 = vld [vmem:[%s3559 + $0x8] sm:$0xf]
  %v3563 = vld [vmem:[%s3559 + $0xc] sm:$0xf]
  %v3564 = vld [vmem:[%s3559 + $0x10] sm:$0xf]
  %v3565 = vld [vmem:[%s3559 + $0x14] sm:$0xf]
  %v3566 = vld [vmem:[%s3559 + $0x18] sm:$0xf]
  %v3567 = vld [vmem:[%s3559 + $0x1c] sm:$0xf]
  %s3568 = scalar_lea.vmem %s9, 6
  %v3569 = vld [vmem:[%s3568] sm:$0x1]
  %v3571 = vlaneseq
  %v3572 = vshrl.u32 %v3571, 7
  %v3573 = vsub.s32 0, %v3572
  %v3574 = vrot.slane %v3569, %v3573
  %v3584 = vunpack.c.l.b16 %v3560
  %v3585 = vunpack.c.l.b16 %v3561
  %v3586 = vunpack.c.l.b16 %v3562
  %v3587 = vunpack.c.l.b16 %v3563
  %v3588 = vunpack.c.l.b16 %v3564
  %v3589 = vunpack.c.l.b16 %v3565
  %v3590 = vunpack.c.l.b16 %v3566
  %v3591 = vunpack.c.l.b16 %v3567
  %v3592 = vpack.c.b16 %v3585, %v3584
  %v3593 = vpack.c.b16 %v3587, %v3586
  %v3594 = vpack.c.b16 %v3589, %v3588
  %v3595 = vpack.c.b16 %v3591, %v3590
  %3600 = vmatprep.subr.bf16.mxu0 0
  %3601 = vmatpush1.bf16.msra.mxu0 0
  %3602 = vmatprep.subr.bf16.mxu0 0
  %3603 = vmatpush1.bf16.msra.mxu0 0
  %3604 = vmatprep.subr.bf16.mxu0 0
  %3605 = vmatpush1.bf16.msra.mxu0 0
  %3606 = vmatprep.subr.bf16.mxu0 0
  %3607 = vmatpush1.bf16.msra.mxu0 0
  %3608 = vmatprep.subr.bf16.mxu0 0
  %3609 = vmatpush1.bf16.msra.mxu0 %v3595
  %3610 = vmatprep.subr.bf16.mxu0 0
  %3611 = vmatpush1.bf16.msra.mxu0 %v3594
  %3612 = vmatprep.subr.bf16.mxu0 0
  %3613 = vmatpush1.bf16.msra.mxu0 %v3593
  %3614 = vmatprep.subr.bf16.mxu0 0
  %3615 = vmatpush1.bf16.msra.mxu0 %v3592
  %3616 = vmatprep.subr.bf16.mxu0 0
  %3617 = vmatpush2.bf16.msra.mxu0 0
  %3618 = vmatprep.subr.bf16.mxu0 0
  %3619 = vmatpush2.bf16.msra.mxu0 0
  %3620 = vmatprep.subr.bf16.mxu0 0
  %3621 = vmatpush2.bf16.msra.mxu0 0
  %3622 = vmatprep.subr.bf16.mxu0 0
  %3623 = vmatpush2.bf16.msra.mxu0 0
  %3624 = vmatprep.subr.bf16.mxu0 0
  %3625 = vmatpush2.bf16.msra.mxu0 0
  %3626 = vmatprep.subr.bf16.mxu0 0
  %3627 = vmatpush2.bf16.msra.mxu0 0
  %3628 = vmatprep.subr.bf16.mxu0 0
  %3629 = vmatpush2.bf16.msra.mxu0 0
  %3630 = vmatprep.subr.bf16.mxu0 0
  %3631 = vmatpush2.bf16.msra.mxu0 0
  %3632 = vmatprep.mubr.bf16.mxu0 0
  %3633 = vmatmul.mubr.bf16.gmra.mxu0 %v2718
  %v3634 = vpop.f32.mrf.mxu0
  %v3635 = vadd.f32 %v3574, %v3634
  %v3636 = vpop.f32.mrf.mxu0
  %v3637 = vpop.f32.mrf.mxu0
  %v3638 = vadd.f32 %v3574, %v3637
  %v3639 = vpop.f32.mrf.mxu0
  %3640 = vdwg.mxu0
  %s3641 = scalar_lea.vmem %s7, 192
  %v3642 = vld [vmem:[%s3641] sm:$0xf]
  %v3643 = vld [vmem:[%s3641 + $0x4] sm:$0xf]
  %v3644 = vld [vmem:[%s3641 + $0x8] sm:$0xf]
  %v3645 = vld [vmem:[%s3641 + $0xc] sm:$0xf]
  %v3646 = vld [vmem:[%s3641 + $0x10] sm:$0xf]
  %v3647 = vld [vmem:[%s3641 + $0x14] sm:$0xf]
  %v3648 = vld [vmem:[%s3641 + $0x18] sm:$0xf]
  %v3649 = vld [vmem:[%s3641 + $0x1c] sm:$0xf]
  %s3650 = scalar_lea.vmem %s10, 6
  %v3651 = vld [vmem:[%s3650] sm:$0x1]
  %v3653 = vlaneseq
  %v3654 = vshrl.u32 %v3653, 7
  %v3655 = vsub.s32 0, %v3654
  %v3656 = vrot.slane %v3651, %v3655
  %v3666 = vunpack.c.l.b16 %v3642
  %v3667 = vunpack.c.l.b16 %v3643
  %v3668 = vunpack.c.l.b16 %v3644
  %v3669 = vunpack.c.l.b16 %v3645
  %v3670 = vunpack.c.l.b16 %v3646
  %v3671 = vunpack.c.l.b16 %v3647
  %v3672 = vunpack.c.l.b16 %v3648
  %v3673 = vunpack.c.l.b16 %v3649
  %v3674 = vpack.c.b16 %v3667, %v3666
  %v3675 = vpack.c.b16 %v3669, %v3668
  %v3676 = vpack.c.b16 %v3671, %v3670
  %v3677 = vpack.c.b16 %v3673, %v3672
  %3682 = vmatprep.subr.bf16.mxu0 0
  %3683 = vmatpush1.bf16.msra.mxu0 0
  %3684 = vmatprep.subr.bf16.mxu0 0
  %3685 = vmatpush1.bf16.msra.mxu0 0
  %3686 = vmatprep.subr.bf16.mxu0 0
  %3687 = vmatpush1.bf16.msra.mxu0 0
  %3688 = vmatprep.subr.bf16.mxu0 0
  %3689 = vmatpush1.bf16.msra.mxu0 0
  %3690 = vmatprep.subr.bf16.mxu0 0
  %3691 = vmatpush1.bf16.msra.mxu0 %v3677
  %3692 = vmatprep.subr.bf16.mxu0 0
  %3693 = vmatpush1.bf16.msra.mxu0 %v3676
  %3694 = vmatprep.subr.bf16.mxu0 0
  %3695 = vmatpush1.bf16.msra.mxu0 %v3675
  %3696 = vmatprep.subr.bf16.mxu0 0
  %3697 = vmatpush1.bf16.msra.mxu0 %v3674
  %3698 = vmatprep.subr.bf16.mxu0 0
  %3699 = vmatpush2.bf16.msra.mxu0 0
  %3700 = vmatprep.subr.bf16.mxu0 0
  %3701 = vmatpush2.bf16.msra.mxu0 0
  %3702 = vmatprep.subr.bf16.mxu0 0
  %3703 = vmatpush2.bf16.msra.mxu0 0
  %3704 = vmatprep.subr.bf16.mxu0 0
  %3705 = vmatpush2.bf16.msra.mxu0 0
  %3706 = vmatprep.subr.bf16.mxu0 0
  %3707 = vmatpush2.bf16.msra.mxu0 0
  %3708 = vmatprep.subr.bf16.mxu0 0
  %3709 = vmatpush2.bf16.msra.mxu0 0
  %3710 = vmatprep.subr.bf16.mxu0 0
  %3711 = vmatpush2.bf16.msra.mxu0 0
  %3712 = vmatprep.subr.bf16.mxu0 0
  %3713 = vmatpush2.bf16.msra.mxu0 0
  %3714 = vmatprep.mubr.bf16.mxu0 0
  %3715 = vmatmul.mubr.bf16.gmra.mxu0 %v2718
  %v3716 = vpop.f32.mrf.mxu0
  %v3717 = vadd.f32 %v3656, %v3716
  %v3718 = vpop.f32.mrf.mxu0
  %v3719 = vpop.f32.mrf.mxu0
  %v3720 = vadd.f32 %v3656, %v3719
  %v3721 = vpop.f32.mrf.mxu0
  %3722 = vdwg.mxu0
  %v3723 = vpack.c.bf16 %v3556, %v3553
  %v3724 = vpack.c.bf16 %v3638, %v3635
  %v3726 = vsel %vm935, %v3723, 0
  %v3729 = vsel %vm935, %v3724, 0
  %3731 = vmatprep.subr.bf16.mxu0 0
  %3732 = vmatpush1.bf16.xpose.msra.mxu0 0
  %3733 = vmatprep.subr.bf16.mxu0 0
  %3734 = vmatpush1.bf16.xpose.msra.mxu0 0
  %3735 = vmatprep.subr.bf16.mxu0 0
  %3736 = vmatpush1.bf16.xpose.msra.mxu0 0
  %3737 = vmatprep.subr.bf16.mxu0 0
  %3738 = vmatpush1.bf16.xpose.msra.mxu0 0
  %3739 = vmatprep.subr.bf16.mxu0 0
  %3740 = vmatpush1.bf16.xpose.msra.mxu0 0
  %3741 = vmatprep.subr.bf16.mxu0 0
  %3742 = vmatpush1.bf16.xpose.msra.mxu0 0
  %3743 = vmatprep.subr.bf16.mxu0 0
  %3744 = vmatpush1.bf16.xpose.msra.mxu0 0
  %3745 = vmatprep.subr.bf16.mxu0 0
  %3746 = vmatpush1.bf16.xpose.msra.mxu0 %v3729
  %3747 = vmatprep.subr.bf16.mxu0 0
  %3748 = vmatpush2.bf16.xpose.msra.mxu0 0
  %3749 = vmatprep.subr.bf16.mxu0 0
  %3750 = vmatpush2.bf16.xpose.msra.mxu0 0
  %3751 = vmatprep.subr.bf16.mxu0 0
  %3752 = vmatpush2.bf16.xpose.msra.mxu0 0
  %3753 = vmatprep.subr.bf16.mxu0 0
  %3754 = vmatpush2.bf16.xpose.msra.mxu0 0
  %3755 = vmatprep.subr.bf16.mxu0 0
  %3756 = vmatpush2.bf16.xpose.msra.mxu0 0
  %3757 = vmatprep.subr.bf16.mxu0 0
  %3758 = vmatpush2.bf16.xpose.msra.mxu0 0
  %3759 = vmatprep.subr.bf16.mxu0 0
  %3760 = vmatpush2.bf16.xpose.msra.mxu0 0
  %3761 = vmatprep.subr.bf16.mxu0 0
  %3762 = vmatpush2.bf16.xpose.msra.mxu0 0
  %3763 = vmatprep.mubr.bf16.mxu0 0
  %3764 = vmatmul.mubr.bf16.gmra.mxu0 %v3726
  %v3765 = vpop.f32.mrf.mxu0
  %v3766 = vadd.f32 0.0, %v3765
  %v3767 = vpop.f32.mrf.mxu0
  %v3768 = vpop.f32.mrf.mxu0
  %v3769 = vadd.f32 0.0, %v3768
  %v3770 = vpop.f32.mrf.mxu0
  %3771 = vdwg.mxu0
  %v3772 = vmul.f32 %v3766, 0.25
  %v3773 = vmul.f32 %v3769, 0.25
  %v3774 = vadd.f32 %v3772, %v94
  %v3775 = vadd.f32 %v3773, %v95
  %v3776 = vsel %vm987, %v3774, -inf
  %3777 = vmax.xlane.f32.xlu0 %v3776
  %v3778 = vpop.xlane.xlu0 %3777
  %v3779 = vsel %vm991, %v3775, -inf
  %3780 = vmax.xlane.f32.xlu0 %v3779
  %v3781 = vpop.xlane.xlu0 %3780
  %v3782 = vsub.f32 %v3774, %v3778
  %v3783 = vsub.f32 %v3775, %v3781
  %v3784 = vmul.f32 %v3782, 1.442695
  %v3785 = vpow.pop %v3784
  %v3786 = vmul.f32 %v3783, 1.442695
  %v3787 = vpow.pop %v3786
  %v3788 = vsel %vm987, %v3785, 0.0
  %3789 = vadd.xlane.f32.xlu0 %v3788
  %v3790 = vpop.xlane.xlu0 %3789
  %v3791 = vsel %vm991, %v3787, 0.0
  %3792 = vadd.xlane.f32.xlu0 %v3791
  %v3793 = vpop.xlane.xlu0 %3792
  %v3794 = vrcp.pop %v3790
  %v3795 = vrcp.pop %v3793
  %v3796 = vmul.f32 %v3785, %v3794
  %v3797 = vmul.f32 %v3787, %v3795
  %v3798 = vpack.c.bf16 %v3797, %v3796
  %v3799 = vpack.c.bf16 %v3720, %v3717
  %v3801 = vsel %vm987, %v3798, 0
  %v3804 = vsel %vm1016, %v3799, 0
  %3806 = vmatprep.subr.bf16.mxu0 0
  %3807 = vmatpush1.bf16.msra.mxu0 0
  %3808 = vmatprep.subr.bf16.mxu0 0
  %3809 = vmatpush1.bf16.msra.mxu0 0
  %3810 = vmatprep.subr.bf16.mxu0 0
  %3811 = vmatpush1.bf16.msra.mxu0 0
  %3812 = vmatprep.subr.bf16.mxu0 0
  %3813 = vmatpush1.bf16.msra.mxu0 0
  %3814 = vmatprep.subr.bf16.mxu0 0
  %3815 = vmatpush1.bf16.msra.mxu0 0
  %3816 = vmatprep.subr.bf16.mxu0 0
  %3817 = vmatpush1.bf16.msra.mxu0 0
  %3818 = vmatprep.subr.bf16.mxu0 0
  %3819 = vmatpush1.bf16.msra.mxu0 0
  %3820 = vmatprep.subr.bf16.mxu0 0
  %3821 = vmatpush1.bf16.msra.mxu0 %v3804
  %3822 = vmatprep.subr.bf16.mxu0 0
  %3823 = vmatpush2.bf16.msra.mxu0 0
  %3824 = vmatprep.subr.bf16.mxu0 0
  %3825 = vmatpush2.bf16.msra.mxu0 0
  %3826 = vmatprep.subr.bf16.mxu0 0
  %3827 = vmatpush2.bf16.msra.mxu0 0
  %3828 = vmatprep.subr.bf16.mxu0 0
  %3829 = vmatpush2.bf16.msra.mxu0 0
  %3830 = vmatprep.subr.bf16.mxu0 0
  %3831 = vmatpush2.bf16.msra.mxu0 0
  %3832 = vmatprep.subr.bf16.mxu0 0
  %3833 = vmatpush2.bf16.msra.mxu0 0
  %3834 = vmatprep.subr.bf16.mxu0 0
  %3835 = vmatpush2.bf16.msra.mxu0 0
  %3836 = vmatprep.subr.bf16.mxu0 0
  %3837 = vmatpush2.bf16.msra.mxu0 0
  %3838 = vmatprep.mubr.bf16.mxu0 0
  %3839 = vmatmul.mubr.bf16.gmra.mxu0 %v3801
  %v3840 = vpop.f32.mrf.mxu0
  %v3841 = vadd.f32 0.0, %v3840
  %v3842 = vpop.f32.mrf.mxu0
  %v3843 = vpop.f32.mrf.mxu0
  %v3844 = vadd.f32 0.0, %v3843
  %v3845 = vpop.f32.mrf.mxu0
  %3846 = vdwg.mxu0
  %s3847 = scalar_lea.vmem %s11, 48
  %v3848 = vld [vmem:[%s3847] sm:$0xf]
  %v3849 = vld [vmem:[%s3847 + $0x4] sm:$0xf]
  %v3850 = vpack.c.bf16 %v3844, %v3841
  %s3851 = scalar_lea.vmem %s5, 224
  %v3852 = vld [vmem:[%s3851] sm:$0xf]
  %v3853 = vld [vmem:[%s3851 + $0x4] sm:$0xf]
  %v3854 = vld [vmem:[%s3851 + $0x8] sm:$0xf]
  %v3855 = vld [vmem:[%s3851 + $0xc] sm:$0xf]
  %v3856 = vld [vmem:[%s3851 + $0x10] sm:$0xf]
  %v3857 = vld [vmem:[%s3851 + $0x14] sm:$0xf]
  %v3858 = vld [vmem:[%s3851 + $0x18] sm:$0xf]
  %v3859 = vld [vmem:[%s3851 + $0x1c] sm:$0xf]
  %s3860 = scalar_lea.vmem %s8, 7
  %v3861 = vld [vmem:[%s3860] sm:$0x1]
  %v3863 = vlaneseq
  %v3864 = vshrl.u32 %v3863, 7
  %v3865 = vsub.s32 0, %v3864
  %v3866 = vrot.slane %v3861, %v3865
  %v3876 = vunpack.c.l.b16 %v3852
  %v3877 = vunpack.c.l.b16 %v3853
  %v3878 = vunpack.c.l.b16 %v3854
  %v3879 = vunpack.c.l.b16 %v3855
  %v3880 = vunpack.c.l.b16 %v3856
  %v3881 = vunpack.c.l.b16 %v3857
  %v3882 = vunpack.c.l.b16 %v3858
  %v3883 = vunpack.c.l.b16 %v3859
  %v3884 = vpack.c.b16 %v3877, %v3876
  %v3885 = vpack.c.b16 %v3879, %v3878
  %v3886 = vpack.c.b16 %v3881, %v3880
  %v3887 = vpack.c.b16 %v3883, %v3882
  %3892 = vmatprep.subr.bf16.mxu0 0
  %3893 = vmatpush1.bf16.msra.mxu0 0
  %3894 = vmatprep.subr.bf16.mxu0 0
  %3895 = vmatpush1.bf16.msra.mxu0 0
  %3896 = vmatprep.subr.bf16.mxu0 0
  %3897 = vmatpush1.bf16.msra.mxu0 0
  %3898 = vmatprep.subr.bf16.mxu0 0
  %3899 = vmatpush1.bf16.msra.mxu0 0
  %3900 = vmatprep.subr.bf16.mxu0 0
  %3901 = vmatpush1.bf16.msra.mxu0 %v3887
  %3902 = vmatprep.subr.bf16.mxu0 0
  %3903 = vmatpush1.bf16.msra.mxu0 %v3886
  %3904 = vmatprep.subr.bf16.mxu0 0
  %3905 = vmatpush1.bf16.msra.mxu0 %v3885
  %3906 = vmatprep.subr.bf16.mxu0 0
  %3907 = vmatpush1.bf16.msra.mxu0 %v3884
  %3908 = vmatprep.subr.bf16.mxu0 0
  %3909 = vmatpush2.bf16.msra.mxu0 0
  %3910 = vmatprep.subr.bf16.mxu0 0
  %3911 = vmatpush2.bf16.msra.mxu0 0
  %3912 = vmatprep.subr.bf16.mxu0 0
  %3913 = vmatpush2.bf16.msra.mxu0 0
  %3914 = vmatprep.subr.bf16.mxu0 0
  %3915 = vmatpush2.bf16.msra.mxu0 0
  %3916 = vmatprep.subr.bf16.mxu0 0
  %3917 = vmatpush2.bf16.msra.mxu0 0
  %3918 = vmatprep.subr.bf16.mxu0 0
  %3919 = vmatpush2.bf16.msra.mxu0 0
  %3920 = vmatprep.subr.bf16.mxu0 0
  %3921 = vmatpush2.bf16.msra.mxu0 0
  %3922 = vmatprep.subr.bf16.mxu0 0
  %3923 = vmatpush2.bf16.msra.mxu0 0
  %3924 = vmatprep.mubr.bf16.mxu0 0
  %3925 = vmatmul.mubr.bf16.gmra.mxu0 %v2718
  %v3926 = vpop.f32.mrf.mxu0
  %v3927 = vadd.f32 %v3866, %v3926
  %v3928 = vpop.f32.mrf.mxu0
  %v3929 = vpop.f32.mrf.mxu0
  %v3930 = vadd.f32 %v3866, %v3929
  %v3931 = vpop.f32.mrf.mxu0
  %3932 = vdwg.mxu0
  %s3933 = scalar_lea.vmem %s6, 224
  %v3934 = vld [vmem:[%s3933] sm:$0xf]
  %v3935 = vld [vmem:[%s3933 + $0x4] sm:$0xf]
  %v3936 = vld [vmem:[%s3933 + $0x8] sm:$0xf]
  %v3937 = vld [vmem:[%s3933 + $0xc] sm:$0xf]
  %v3938 = vld [vmem:[%s3933 + $0x10] sm:$0xf]
  %v3939 = vld [vmem:[%s3933 + $0x14] sm:$0xf]
  %v3940 = vld [vmem:[%s3933 + $0x18] sm:$0xf]
  %v3941 = vld [vmem:[%s3933 + $0x1c] sm:$0xf]
  %s3942 = scalar_lea.vmem %s9, 7
  %v3943 = vld [vmem:[%s3942] sm:$0x1]
  %v3945 = vlaneseq
  %v3946 = vshrl.u32 %v3945, 7
  %v3947 = vsub.s32 0, %v3946
  %v3948 = vrot.slane %v3943, %v3947
  %v3958 = vunpack.c.l.b16 %v3934
  %v3959 = vunpack.c.l.b16 %v3935
  %v3960 = vunpack.c.l.b16 %v3936
  %v3961 = vunpack.c.l.b16 %v3937
  %v3962 = vunpack.c.l.b16 %v3938
  %v3963 = vunpack.c.l.b16 %v3939
  %v3964 = vunpack.c.l.b16 %v3940
  %v3965 = vunpack.c.l.b16 %v3941
  %v3966 = vpack.c.b16 %v3959, %v3958
  %v3967 = vpack.c.b16 %v3961, %v3960
  %v3968 = vpack.c.b16 %v3963, %v3962
  %v3969 = vpack.c.b16 %v3965, %v3964
  %3974 = vmatprep.subr.bf16.mxu0 0
  %3975 = vmatpush1.bf16.msra.mxu0 0
  %3976 = vmatprep.subr.bf16.mxu0 0
  %3977 = vmatpush1.bf16.msra.mxu0 0
  %3978 = vmatprep.subr.bf16.mxu0 0
  %3979 = vmatpush1.bf16.msra.mxu0 0
  %3980 = vmatprep.subr.bf16.mxu0 0
  %3981 = vmatpush1.bf16.msra.mxu0 0
  %3982 = vmatprep.subr.bf16.mxu0 0
  %3983 = vmatpush1.bf16.msra.mxu0 %v3969
  %3984 = vmatprep.subr.bf16.mxu0 0
  %3985 = vmatpush1.bf16.msra.mxu0 %v3968
  %3986 = vmatprep.subr.bf16.mxu0 0
  %3987 = vmatpush1.bf16.msra.mxu0 %v3967
  %3988 = vmatprep.subr.bf16.mxu0 0
  %3989 = vmatpush1.bf16.msra.mxu0 %v3966
  %3990 = vmatprep.subr.bf16.mxu0 0
  %3991 = vmatpush2.bf16.msra.mxu0 0
  %3992 = vmatprep.subr.bf16.mxu0 0
  %3993 = vmatpush2.bf16.msra.mxu0 0
  %3994 = vmatprep.subr.bf16.mxu0 0
  %3995 = vmatpush2.bf16.msra.mxu0 0
  %3996 = vmatprep.subr.bf16.mxu0 0
  %3997 = vmatpush2.bf16.msra.mxu0 0
  %3998 = vmatprep.subr.bf16.mxu0 0
  %3999 = vmatpush2.bf16.msra.mxu0 0
  %4000 = vmatprep.subr.bf16.mxu0 0
  %4001 = vmatpush2.bf16.msra.mxu0 0
  %4002 = vmatprep.subr.bf16.mxu0 0
  %4003 = vmatpush2.bf16.msra.mxu0 0
  %4004 = vmatprep.subr.bf16.mxu0 0
  %4005 = vmatpush2.bf16.msra.mxu0 0
  %4006 = vmatprep.mubr.bf16.mxu0 0
  %4007 = vmatmul.mubr.bf16.gmra.mxu0 %v2718
  %v4008 = vpop.f32.mrf.mxu0
  %v4009 = vadd.f32 %v3948, %v4008
  %v4010 = vpop.f32.mrf.mxu0
  %v4011 = vpop.f32.mrf.mxu0
  %v4012 = vadd.f32 %v3948, %v4011
  %v4013 = vpop.f32.mrf.mxu0
  %4014 = vdwg.mxu0
  %s4015 = scalar_lea.vmem %s7, 224
  %v4016 = vld [vmem:[%s4015] sm:$0xf]
  %v4017 = vld [vmem:[%s4015 + $0x4] sm:$0xf]
  %v4018 = vld [vmem:[%s4015 + $0x8] sm:$0xf]
  %v4019 = vld [vmem:[%s4015 + $0xc] sm:$0xf]
  %v4020 = vld [vmem:[%s4015 + $0x10] sm:$0xf]
  %v4021 = vld [vmem:[%s4015 + $0x14] sm:$0xf]
  %v4022 = vld [vmem:[%s4015 + $0x18] sm:$0xf]
  %v4023 = vld [vmem:[%s4015 + $0x1c] sm:$0xf]
  %s4024 = scalar_lea.vmem %s10, 7
  %v4025 = vld [vmem:[%s4024] sm:$0x1]
  %v4027 = vlaneseq
  %v4028 = vshrl.u32 %v4027, 7
  %v4029 = vsub.s32 0, %v4028
  %v4030 = vrot.slane %v4025, %v4029
  %v4040 = vunpack.c.l.b16 %v4016
  %v4041 = vunpack.c.l.b16 %v4017
  %v4042 = vunpack.c.l.b16 %v4018
  %v4043 = vunpack.c.l.b16 %v4019
  %v4044 = vunpack.c.l.b16 %v4020
  %v4045 = vunpack.c.l.b16 %v4021
  %v4046 = vunpack.c.l.b16 %v4022
  %v4047 = vunpack.c.l.b16 %v4023
  %v4048 = vpack.c.b16 %v4041, %v4040
  %v4049 = vpack.c.b16 %v4043, %v4042
  %v4050 = vpack.c.b16 %v4045, %v4044
  %v4051 = vpack.c.b16 %v4047, %v4046
  %4056 = vmatprep.subr.bf16.mxu0 0
  %4057 = vmatpush1.bf16.msra.mxu0 0
  %4058 = vmatprep.subr.bf16.mxu0 0
  %4059 = vmatpush1.bf16.msra.mxu0 0
  %4060 = vmatprep.subr.bf16.mxu0 0
  %4061 = vmatpush1.bf16.msra.mxu0 0
  %4062 = vmatprep.subr.bf16.mxu0 0
  %4063 = vmatpush1.bf16.msra.mxu0 0
  %4064 = vmatprep.subr.bf16.mxu0 0
  %4065 = vmatpush1.bf16.msra.mxu0 %v4051
  %4066 = vmatprep.subr.bf16.mxu0 0
  %4067 = vmatpush1.bf16.msra.mxu0 %v4050
  %4068 = vmatprep.subr.bf16.mxu0 0
  %4069 = vmatpush1.bf16.msra.mxu0 %v4049
  %4070 = vmatprep.subr.bf16.mxu0 0
  %4071 = vmatpush1.bf16.msra.mxu0 %v4048
  %4072 = vmatprep.subr.bf16.mxu0 0
  %4073 = vmatpush2.bf16.msra.mxu0 0
  %4074 = vmatprep.subr.bf16.mxu0 0
  %4075 = vmatpush2.bf16.msra.mxu0 0
  %4076 = vmatprep.subr.bf16.mxu0 0
  %4077 = vmatpush2.bf16.msra.mxu0 0
  %4078 = vmatprep.subr.bf16.mxu0 0
  %4079 = vmatpush2.bf16.msra.mxu0 0
  %4080 = vmatprep.subr.bf16.mxu0 0
  %4081 = vmatpush2.bf16.msra.mxu0 0
  %4082 = vmatprep.subr.bf16.mxu0 0
  %4083 = vmatpush2.bf16.msra.mxu0 0
  %4084 = vmatprep.subr.bf16.mxu0 0
  %4085 = vmatpush2.bf16.msra.mxu0 0
  %4086 = vmatprep.subr.bf16.mxu0 0
  %4087 = vmatpush2.bf16.msra.mxu0 0
  %4088 = vmatprep.mubr.bf16.mxu0 0
  %4089 = vmatmul.mubr.bf16.gmra.mxu0 %v2718
  %v4090 = vpop.f32.mrf.mxu0
  %v4091 = vadd.f32 %v4030, %v4090
  %v4092 = vpop.f32.mrf.mxu0
  %v4093 = vpop.f32.mrf.mxu0
  %v4094 = vadd.f32 %v4030, %v4093
  %v4095 = vpop.f32.mrf.mxu0
  %4096 = vdwg.mxu0
  %v4097 = vpack.c.bf16 %v3930, %v3927
  %v4098 = vpack.c.bf16 %v4012, %v4009
  %v4100 = vsel %vm935, %v4097, 0
  %v4103 = vsel %vm935, %v4098, 0
  %4105 = vmatprep.subr.bf16.mxu0 0
  %4106 = vmatpush1.bf16.xpose.msra.mxu0 0
  %4107 = vmatprep.subr.bf16.mxu0 0
  %4108 = vmatpush1.bf16.xpose.msra.mxu0 0
  %4109 = vmatprep.subr.bf16.mxu0 0
  %4110 = vmatpush1.bf16.xpose.msra.mxu0 0
  %4111 = vmatprep.subr.bf16.mxu0 0
  %4112 = vmatpush1.bf16.xpose.msra.mxu0 0
  %4113 = vmatprep.subr.bf16.mxu0 0
  %4114 = vmatpush1.bf16.xpose.msra.mxu0 0
  %4115 = vmatprep.subr.bf16.mxu0 0
  %4116 = vmatpush1.bf16.xpose.msra.mxu0 0
  %4117 = vmatprep.subr.bf16.mxu0 0
  %4118 = vmatpush1.bf16.xpose.msra.mxu0 0
  %4119 = vmatprep.subr.bf16.mxu0 0
  %4120 = vmatpush1.bf16.xpose.msra.mxu0 %v4103
  %4121 = vmatprep.subr.bf16.mxu0 0
  %4122 = vmatpush2.bf16.xpose.msra.mxu0 0
  %4123 = vmatprep.subr.bf16.mxu0 0
  %4124 = vmatpush2.bf16.xpose.msra.mxu0 0
  %4125 = vmatprep.subr.bf16.mxu0 0
  %4126 = vmatpush2.bf16.xpose.msra.mxu0 0
  %4127 = vmatprep.subr.bf16.mxu0 0
  %4128 = vmatpush2.bf16.xpose.msra.mxu0 0
  %4129 = vmatprep.subr.bf16.mxu0 0
  %4130 = vmatpush2.bf16.xpose.msra.mxu0 0
  %4131 = vmatprep.subr.bf16.mxu0 0
  %4132 = vmatpush2.bf16.xpose.msra.mxu0 0
  %4133 = vmatprep.subr.bf16.mxu0 0
  %4134 = vmatpush2.bf16.xpose.msra.mxu0 0
  %4135 = vmatprep.subr.bf16.mxu0 0
  %4136 = vmatpush2.bf16.xpose.msra.mxu0 0
  %4137 = vmatprep.mubr.bf16.mxu0 0
  %4138 = vmatmul.mubr.bf16.gmra.mxu0 %v4100
  %v4139 = vpop.f32.mrf.mxu0
  %v4140 = vadd.f32 0.0, %v4139
  %v4141 = vpop.f32.mrf.mxu0
  %v4142 = vpop.f32.mrf.mxu0
  %v4143 = vadd.f32 0.0, %v4142
  %v4144 = vpop.f32.mrf.mxu0
  %4145 = vdwg.mxu0
  %v4146 = vmul.f32 %v4140, 0.25
  %v4147 = vmul.f32 %v4143, 0.25
  %v4148 = vadd.f32 %v4146, %v94
  %v4149 = vadd.f32 %v4147, %v95
  %v4150 = vsel %vm987, %v4148, -inf
  %4151 = vmax.xlane.f32.xlu0 %v4150
  %v4152 = vpop.xlane.xlu0 %4151
  %v4153 = vsel %vm991, %v4149, -inf
  %4154 = vmax.xlane.f32.xlu0 %v4153
  %v4155 = vpop.xlane.xlu0 %4154
  %v4156 = vsub.f32 %v4148, %v4152
  %v4157 = vsub.f32 %v4149, %v4155
  %v4158 = vmul.f32 %v4156, 1.442695
  %v4159 = vpow.pop %v4158
  %v4160 = vmul.f32 %v4157, 1.442695
  %v4161 = vpow.pop %v4160
  %v4162 = vsel %vm987, %v4159, 0.0
  %4163 = vadd.xlane.f32.xlu0 %v4162
  %v4164 = vpop.xlane.xlu0 %4163
  %v4165 = vsel %vm991, %v4161, 0.0
  %4166 = vadd.xlane.f32.xlu0 %v4165
  %v4167 = vpop.xlane.xlu0 %4166
  %v4168 = vrcp.pop %v4164
  %v4169 = vrcp.pop %v4167
  %v4170 = vmul.f32 %v4159, %v4168
  %v4171 = vmul.f32 %v4161, %v4169
  %v4172 = vpack.c.bf16 %v4171, %v4170
  %v4173 = vpack.c.bf16 %v4094, %v4091
  %v4175 = vsel %vm987, %v4172, 0
  %v4178 = vsel %vm1016, %v4173, 0
  %4180 = vmatprep.subr.bf16.mxu0 0
  %4181 = vmatpush1.bf16.msra.mxu0 0
  %4182 = vmatprep.subr.bf16.mxu0 0
  %4183 = vmatpush1.bf16.msra.mxu0 0
  %4184 = vmatprep.subr.bf16.mxu0 0
  %4185 = vmatpush1.bf16.msra.mxu0 0
  %4186 = vmatprep.subr.bf16.mxu0 0
  %4187 = vmatpush1.bf16.msra.mxu0 0
  %4188 = vmatprep.subr.bf16.mxu0 0
  %4189 = vmatpush1.bf16.msra.mxu0 0
  %4190 = vmatprep.subr.bf16.mxu0 0
  %4191 = vmatpush1.bf16.msra.mxu0 0
  %4192 = vmatprep.subr.bf16.mxu0 0
  %4193 = vmatpush1.bf16.msra.mxu0 0
  %4194 = vmatprep.subr.bf16.mxu0 0
  %4195 = vmatpush1.bf16.msra.mxu0 %v4178
  %4196 = vmatprep.subr.bf16.mxu0 0
  %4197 = vmatpush2.bf16.msra.mxu0 0
  %4198 = vmatprep.subr.bf16.mxu0 0
  %4199 = vmatpush2.bf16.msra.mxu0 0
  %4200 = vmatprep.subr.bf16.mxu0 0
  %4201 = vmatpush2.bf16.msra.mxu0 0
  %4202 = vmatprep.subr.bf16.mxu0 0
  %4203 = vmatpush2.bf16.msra.mxu0 0
  %4204 = vmatprep.subr.bf16.mxu0 0
  %4205 = vmatpush2.bf16.msra.mxu0 0
  %4206 = vmatprep.subr.bf16.mxu0 0
  %4207 = vmatpush2.bf16.msra.mxu0 0
  %4208 = vmatprep.subr.bf16.mxu0 0
  %4209 = vmatpush2.bf16.msra.mxu0 0
  %4210 = vmatprep.subr.bf16.mxu0 0
  %4211 = vmatpush2.bf16.msra.mxu0 0
  %4212 = vmatprep.mubr.bf16.mxu0 0
  %4213 = vmatmul.mubr.bf16.gmra.mxu0 %v4175
  %v4214 = vpop.f32.mrf.mxu0
  %v4215 = vadd.f32 0.0, %v4214
  %v4216 = vpop.f32.mrf.mxu0
  %v4217 = vpop.f32.mrf.mxu0
  %v4218 = vadd.f32 0.0, %v4217
  %v4219 = vpop.f32.mrf.mxu0
  %4220 = vdwg.mxu0
  %s4221 = scalar_lea.vmem %s11, 56
  %v4222 = vld [vmem:[%s4221] sm:$0xf]
  %v4223 = vld [vmem:[%s4221 + $0x4] sm:$0xf]
  %v4224 = vpack.c.bf16 %v4218, %v4215
  %v4227 = vunpack.c.l.b16 %v4222
  %v4228 = vunpack.c.l.b16 %v4223
  %v4229 = vpack.c.b16 %v4228, %v4227
  %v4232 = vsel %vm935, %v4224, 0
  %4234 = vmatprep.subr.bf16.mxu0 0
  %4235 = vmatpush1.bf16.msra.mxu0 0
  %4236 = vmatprep.subr.bf16.mxu0 0
  %4237 = vmatpush1.bf16.msra.mxu0 0
  %4238 = vmatprep.subr.bf16.mxu0 0
  %4239 = vmatpush1.bf16.msra.mxu0 0
  %4240 = vmatprep.subr.bf16.mxu0 0
  %4241 = vmatpush1.bf16.msra.mxu0 0
  %4242 = vmatprep.subr.bf16.mxu0 0
  %4243 = vmatpush1.bf16.msra.mxu0 0
  %4244 = vmatprep.subr.bf16.mxu0 0
  %4245 = vmatpush1.bf16.msra.mxu0 0
  %4246 = vmatprep.subr.bf16.mxu0 0
  %4247 = vmatpush1.bf16.msra.mxu0 0
  %4248 = vmatprep.subr.bf16.mxu0 0
  %4249 = vmatpush1.bf16.msra.mxu0 %v4229
  %4250 = vmatprep.subr.bf16.mxu0 0
  %4251 = vmatpush2.bf16.msra.mxu0 0
  %4252 = vmatprep.subr.bf16.mxu0 0
  %4253 = vmatpush2.bf16.msra.mxu0 0
  %4254 = vmatprep.subr.bf16.mxu0 0
  %4255 = vmatpush2.bf16.msra.mxu0 0
  %4256 = vmatprep.subr.bf16.mxu0 0
  %4257 = vmatpush2.bf16.msra.mxu0 0
  %4258 = vmatprep.subr.bf16.mxu0 0
  %4259 = vmatpush2.bf16.msra.mxu0 0
  %4260 = vmatprep.subr.bf16.mxu0 0
  %4261 = vmatpush2.bf16.msra.mxu0 0
  %4262 = vmatprep.subr.bf16.mxu0 0
  %4263 = vmatpush2.bf16.msra.mxu0 0
  %4264 = vmatprep.subr.bf16.mxu0 0
  %4265 = vmatpush2.bf16.msra.mxu0 0
  %4266 = vmatprep.mubr.bf16.mxu0 0
  %4267 = vmatmul.mubr.bf16.gmra.mxu0 %v4232
  %v4268 = vpop.f32.mrf.mxu0
  %v4269 = vadd.f32 0.0, %v4268
  %v4270 = vpop.f32.mrf.mxu0
  %v4271 = vpop.f32.mrf.mxu0
  %v4272 = vadd.f32 0.0, %v4271
  %v4273 = vpop.f32.mrf.mxu0
  %4274 = vdwg.mxu0
  %v4277 = vunpack.c.l.b16 %v3050
  %v4278 = vunpack.c.l.b16 %v3051
  %v4279 = vpack.c.b16 %v4278, %v4277
  %v4282 = vsel %vm935, %v3052, 0
  %4284 = vmatprep.subr.bf16.mxu0 0
  %4285 = vmatpush1.bf16.msra.mxu0 0
  %4286 = vmatprep.subr.bf16.mxu0 0
  %4287 = vmatpush1.bf16.msra.mxu0 0
  %4288 = vmatprep.subr.bf16.mxu0 0
  %4289 = vmatpush1.bf16.msra.mxu0 0
  %4290 = vmatprep.subr.bf16.mxu0 0
  %4291 = vmatpush1.bf16.msra.mxu0 0
  %4292 = vmatprep.subr.bf16.mxu0 0
  %4293 = vmatpush1.bf16.msra.mxu0 0
  %4294 = vmatprep.subr.bf16.mxu0 0
  %4295 = vmatpush1.bf16.msra.mxu0 0
  %4296 = vmatprep.subr.bf16.mxu0 0
  %4297 = vmatpush1.bf16.msra.mxu0 0
  %4298 = vmatprep.subr.bf16.mxu0 0
  %4299 = vmatpush1.bf16.msra.mxu0 %v4279
  %4300 = vmatprep.subr.bf16.mxu0 0
  %4301 = vmatpush2.bf16.msra.mxu0 0
  %4302 = vmatprep.subr.bf16.mxu0 0
  %4303 = vmatpush2.bf16.msra.mxu0 0
  %4304 = vmatprep.subr.bf16.mxu0 0
  %4305 = vmatpush2.bf16.msra.mxu0 0
  %4306 = vmatprep.subr.bf16.mxu0 0
  %4307 = vmatpush2.bf16.msra.mxu0 0
  %4308 = vmatprep.subr.bf16.mxu0 0
  %4309 = vmatpush2.bf16.msra.mxu0 0
  %4310 = vmatprep.subr.bf16.mxu0 0
  %4311 = vmatpush2.bf16.msra.mxu0 0
  %4312 = vmatprep.subr.bf16.mxu0 0
  %4313 = vmatpush2.bf16.msra.mxu0 0
  %4314 = vmatprep.subr.bf16.mxu0 0
  %4315 = vmatpush2.bf16.msra.mxu0 0
  %4316 = vmatprep.mubr.bf16.mxu0 0
  %4317 = vmatmul.mubr.bf16.gmra.mxu0 %v4282
  %v4318 = vpop.f32.mrf.mxu0
  %v4319 = vadd.f32 %v3471, %v4318
  %v4320 = vpop.f32.mrf.mxu0
  %v4321 = vpop.f32.mrf.mxu0
  %v4322 = vadd.f32 %v3474, %v4321
  %v4323 = vpop.f32.mrf.mxu0
  %4324 = vdwg.mxu0
  %v4327 = vunpack.c.l.b16 %v3848
  %v4328 = vunpack.c.l.b16 %v3849
  %v4329 = vpack.c.b16 %v4328, %v4327
  %v4332 = vsel %vm935, %v3850, 0
  %4334 = vmatprep.subr.bf16.mxu0 0
  %4335 = vmatpush1.bf16.msra.mxu0 0
  %4336 = vmatprep.subr.bf16.mxu0 0
  %4337 = vmatpush1.bf16.msra.mxu0 0
  %4338 = vmatprep.subr.bf16.mxu0 0
  %4339 = vmatpush1.bf16.msra.mxu0 0
  %4340 = vmatprep.subr.bf16.mxu0 0
  %4341 = vmatpush1.bf16.msra.mxu0 0
  %4342 = vmatprep.subr.bf16.mxu0 0
  %4343 = vmatpush1.bf16.msra.mxu0 0
  %4344 = vmatprep.subr.bf16.mxu0 0
  %4345 = vmatpush1.bf16.msra.mxu0 0
  %4346 = vmatprep.subr.bf16.mxu0 0
  %4347 = vmatpush1.bf16.msra.mxu0 0
  %4348 = vmatprep.subr.bf16.mxu0 0
  %4349 = vmatpush1.bf16.msra.mxu0 %v4329
  %4350 = vmatprep.subr.bf16.mxu0 0
  %4351 = vmatpush2.bf16.msra.mxu0 0
  %4352 = vmatprep.subr.bf16.mxu0 0
  %4353 = vmatpush2.bf16.msra.mxu0 0
  %4354 = vmatprep.subr.bf16.mxu0 0
  %4355 = vmatpush2.bf16.msra.mxu0 0
  %4356 = vmatprep.subr.bf16.mxu0 0
  %4357 = vmatpush2.bf16.msra.mxu0 0
  %4358 = vmatprep.subr.bf16.mxu0 0
  %4359 = vmatpush2.bf16.msra.mxu0 0
  %4360 = vmatprep.subr.bf16.mxu0 0
  %4361 = vmatpush2.bf16.msra.mxu0 0
  %4362 = vmatprep.subr.bf16.mxu0 0
  %4363 = vmatpush2.bf16.msra.mxu0 0
  %4364 = vmatprep.subr.bf16.mxu0 0
  %4365 = vmatpush2.bf16.msra.mxu0 0
  %4366 = vmatprep.mubr.bf16.mxu0 0
  %4367 = vmatmul.mubr.bf16.gmra.mxu0 %v4332
  %v4368 = vpop.f32.mrf.mxu0
  %v4369 = vadd.f32 %v4269, %v4368
  %v4370 = vpop.f32.mrf.mxu0
  %v4371 = vpop.f32.mrf.mxu0
  %v4372 = vadd.f32 %v4272, %v4371
  %v4373 = vpop.f32.mrf.mxu0
  %4374 = vdwg.mxu0
  %v4375 = vadd.f32 %v4319, %v4369
  %v4376 = vadd.f32 %v4322, %v4372
  %v4377 = vadd.f32 %v2635, %v4375
  %v4378 = vadd.f32 %v2636, %v4376
  %v4379 = vlaneseq
  %v4380 = vshrl.u32 %v4379, 7
  %v4381 = vsub.s32 1, %v4380
  %v4382 = vrot.slane %v643, %v4381
  %v4383 = vadd.f32 %v4377, %v4382
  %v4384 = vadd.f32 %v4378, %v4382
  %v4385 = vsel %vm648, %v4383, 0.0
  %4386 = vadd.xlane.f32.xlu0 %v4385
  %v4387 = vpop.xlane.xlu0 %4386
  %v4388 = vsel %vm652, %v4384, 0.0
  %4389 = vadd.xlane.f32.xlu0 %v4388
  %v4390 = vpop.xlane.xlu0 %4389
  %v4391 = vmul.f32 %v4387, %v656
  %v4392 = vmul.f32 %v4390, %v656
  %v4393 = vsub.f32 %v4383, %v4391
  %v4394 = vsub.f32 %v4384, %v4392
  %v4395 = vmul.f32 %v4393, %v4393
  %v4396 = vmul.f32 %v4394, %v4394
  %v4397 = vsel %vm648, %v4395, 0.0
  %4398 = vadd.xlane.f32.xlu0 %v4397
  %v4399 = vpop.xlane.xlu0 %4398
  %v4400 = vsel %vm652, %v4396, 0.0
  %4401 = vadd.xlane.f32.xlu0 %v4400
  %v4402 = vpop.xlane.xlu0 %4401
  %v4403 = vmul.f32 %v4399, %v656
  %v4404 = vmul.f32 %v4402, %v656
  %v4405 = vadd.f32 %v4403, 1e-06
  %v4406 = vadd.f32 %v4404, 1e-06
  %v4407 = vrsqrt.pop %v4405
  %v4408 = vrsqrt.pop %v4406
  %v4409 = vmul.f32 %v4393, %v4407
  %v4410 = vmul.f32 %v4394, %v4408
  %v4411 = vlaneseq
  %v4412 = vshrl.u32 %v4411, 7
  %v4413 = vsub.s32 1, %v4412
  %v4414 = vrot.slane %v644, %v4413
  %v4415 = vmul.f32 %v4409, %v4414
  %v4416 = vmul.f32 %v4410, %v4414
  %v4417 = vlaneseq
  %v4418 = vshrl.u32 %v4417, 7
  %v4419 = vsub.s32 1, %v4418
  %v4420 = vrot.slane %v645, %v4419
  %v4421 = vadd.f32 %v4415, %v4420
  %v4422 = vadd.f32 %v4416, %v4420
  %s4423 = scalar_lea.vmem %s15, 32
  %v4424 = vld [vmem:[%s4423] sm:$0xf]
  %v4425 = vld [vmem:[%s4423 + $0x4] sm:$0xf]
  %v4426 = vld [vmem:[%s4423 + $0x8] sm:$0xf]
  %v4427 = vld [vmem:[%s4423 + $0xc] sm:$0xf]
  %v4428 = vld [vmem:[%s4423 + $0x10] sm:$0xf]
  %v4429 = vld [vmem:[%s4423 + $0x14] sm:$0xf]
  %v4430 = vld [vmem:[%s4423 + $0x18] sm:$0xf]
  %v4431 = vld [vmem:[%s4423 + $0x1c] sm:$0xf]
  %v4432 = vpack.c.bf16 %v4422, %v4421
  %v4433 = vlaneseq
  %v4434 = vshrl.u32 %v4433, 7
  %v4435 = vsub.s32 1, %v4434
  %v4436 = vrot.slane %v646, %v4435
  %v4445 = vunpack.c.l.b16 %v4424
  %v4446 = vunpack.c.l.b16 %v4425
  %v4447 = vunpack.c.l.b16 %v4426
  %v4448 = vunpack.c.l.b16 %v4427
  %v4449 = vunpack.c.l.b16 %v4428
  %v4450 = vunpack.c.l.b16 %v4429
  %v4451 = vunpack.c.l.b16 %v4430
  %v4452 = vunpack.c.l.b16 %v4431
  %v4453 = vpack.c.b16 %v4446, %v4445
  %v4454 = vpack.c.b16 %v4448, %v4447
  %v4455 = vpack.c.b16 %v4450, %v4449
  %v4456 = vpack.c.b16 %v4452, %v4451
  %v4462 = vsel %vm648, %v4432, 0
  %4464 = vmatprep.subr.bf16.mxu0 0
  %4465 = vmatpush1.bf16.msra.mxu0 0
  %4466 = vmatprep.subr.bf16.mxu0 0
  %4467 = vmatpush1.bf16.msra.mxu0 0
  %4468 = vmatprep.subr.bf16.mxu0 0
  %4469 = vmatpush1.bf16.msra.mxu0 0
  %4470 = vmatprep.subr.bf16.mxu0 0
  %4471 = vmatpush1.bf16.msra.mxu0 0
  %4472 = vmatprep.subr.bf16.mxu0 0
  %4473 = vmatpush1.bf16.msra.mxu0 %v4456
  %4474 = vmatprep.subr.bf16.mxu0 0
  %4475 = vmatpush1.bf16.msra.mxu0 %v4455
  %4476 = vmatprep.subr.bf16.mxu0 0
  %4477 = vmatpush1.bf16.msra.mxu0 %v4454
  %4478 = vmatprep.subr.bf16.mxu0 0
  %4479 = vmatpush1.bf16.msra.mxu0 %v4453
  %4480 = vmatprep.subr.bf16.mxu0 0
  %4481 = vmatpush2.bf16.msra.mxu0 0
  %4482 = vmatprep.subr.bf16.mxu0 0
  %4483 = vmatpush2.bf16.msra.mxu0 0
  %4484 = vmatprep.subr.bf16.mxu0 0
  %4485 = vmatpush2.bf16.msra.mxu0 0
  %4486 = vmatprep.subr.bf16.mxu0 0
  %4487 = vmatpush2.bf16.msra.mxu0 0
  %4488 = vmatprep.subr.bf16.mxu0 0
  %4489 = vmatpush2.bf16.msra.mxu0 0
  %4490 = vmatprep.subr.bf16.mxu0 0
  %4491 = vmatpush2.bf16.msra.mxu0 0
  %4492 = vmatprep.subr.bf16.mxu0 0
  %4493 = vmatpush2.bf16.msra.mxu0 0
  %4494 = vmatprep.subr.bf16.mxu0 0
  %4495 = vmatpush2.bf16.msra.mxu0 0
  %4496 = vmatprep.mubr.bf16.mxu0 0
  %4497 = vmatmul.mubr.bf16.gmra.mxu0 %v4462
  %v4498 = vpop.f32.mrf.mxu0
  %v4499 = vadd.f32 %v4436, %v4498
  %v4500 = vpop.f32.mrf.mxu0
  %v4501 = vpop.f32.mrf.mxu0
  %v4502 = vadd.f32 %v4436, %v4501
  %v4503 = vpop.f32.mrf.mxu0
  %4504 = vdwg.mxu0
  %v4505 = vmul.f32 %v4499, 0.5
  %v4506 = vmul.f32 %v4502, 0.5
  %v4507 = vmul.f32 %v4499, 0.70710677
  %v4508 = vmul.f32 %v4502, 0.70710677
  %v4509 = verf.f32.pop %v4507
  %v4510 = verf.f32.pop %v4508
  %v4511 = vadd.f32 %v4509, 1.0
  %v4512 = vadd.f32 %v4510, 1.0
  %v4513 = vmul.f32 %v4505, %v4511
  %v4514 = vmul.f32 %v4506, %v4512
  %s4515 = scalar_lea.vmem %s17, 64
  %v4516 = vld [vmem:[%s4515] sm:$0xf]
  %v4517 = vld [vmem:[%s4515 + $0x4] sm:$0xf]
  %v4518 = vld [vmem:[%s4515 + $0x8] sm:$0xf]
  %v4519 = vld [vmem:[%s4515 + $0xc] sm:$0xf]
  %v4520 = vld [vmem:[%s4515 + $0x10] sm:$0xf]
  %v4521 = vld [vmem:[%s4515 + $0x14] sm:$0xf]
  %v4522 = vld [vmem:[%s4515 + $0x18] sm:$0xf]
  %v4523 = vld [vmem:[%s4515 + $0x1c] sm:$0xf]
  %v4524 = vld [vmem:[%s4515 + $0x20] sm:$0xf]
  %v4525 = vld [vmem:[%s4515 + $0x24] sm:$0xf]
  %v4526 = vld [vmem:[%s4515 + $0x28] sm:$0xf]
  %v4527 = vld [vmem:[%s4515 + $0x2c] sm:$0xf]
  %v4528 = vld [vmem:[%s4515 + $0x30] sm:$0xf]
  %v4529 = vld [vmem:[%s4515 + $0x34] sm:$0xf]
  %v4530 = vld [vmem:[%s4515 + $0x38] sm:$0xf]
  %v4531 = vld [vmem:[%s4515 + $0x3c] sm:$0xf]
  %v4532 = vpack.c.bf16 %v4514, %v4513
  %v4533 = vlaneseq
  %v4534 = vshrl.u32 %v4533, 7
  %v4535 = vsub.s32 1, %v4534
  %v4536 = vrot.slane %v647, %v4535
  %v4553 = vunpack.c.l.b16 %v4516
  %v4554 = vunpack.c.l.b16 %v4517
  %v4555 = vunpack.c.l.b16 %v4518
  %v4556 = vunpack.c.l.b16 %v4519
  %v4557 = vunpack.c.l.b16 %v4520
  %v4558 = vunpack.c.l.b16 %v4521
  %v4559 = vunpack.c.l.b16 %v4522
  %v4560 = vunpack.c.l.b16 %v4523
  %v4561 = vunpack.c.l.b16 %v4524
  %v4562 = vunpack.c.l.b16 %v4525
  %v4563 = vunpack.c.l.b16 %v4526
  %v4564 = vunpack.c.l.b16 %v4527
  %v4565 = vunpack.c.l.b16 %v4528
  %v4566 = vunpack.c.l.b16 %v4529
  %v4567 = vunpack.c.l.b16 %v4530
  %v4568 = vunpack.c.l.b16 %v4531
  %v4569 = vpack.c.b16 %v4554, %v4553
  %v4570 = vpack.c.b16 %v4556, %v4555
  %v4571 = vpack.c.b16 %v4558, %v4557
  %v4572 = vpack.c.b16 %v4560, %v4559
  %v4573 = vpack.c.b16 %v4562, %v4561
  %v4574 = vpack.c.b16 %v4564, %v4563
  %v4575 = vpack.c.b16 %v4566, %v4565
  %v4576 = vpack.c.b16 %v4568, %v4567
  %4585 = vmatprep.subr.bf16.mxu0 0
  %4586 = vmatpush1.bf16.msra.mxu0 %v4576
  %4587 = vmatprep.subr.bf16.mxu0 0
  %4588 = vmatpush1.bf16.msra.mxu0 %v4575
  %4589 = vmatprep.subr.bf16.mxu0 0
  %4590 = vmatpush1.bf16.msra.mxu0 %v4574
  %4591 = vmatprep.subr.bf16.mxu0 0
  %4592 = vmatpush1.bf16.msra.mxu0 %v4573
  %4593 = vmatprep.subr.bf16.mxu0 0
  %4594 = vmatpush1.bf16.msra.mxu0 %v4572
  %4595 = vmatprep.subr.bf16.mxu0 0
  %4596 = vmatpush1.bf16.msra.mxu0 %v4571
  %4597 = vmatprep.subr.bf16.mxu0 0
  %4598 = vmatpush1.bf16.msra.mxu0 %v4570
  %4599 = vmatprep.subr.bf16.mxu0 0
  %4600 = vmatpush1.bf16.msra.mxu0 %v4569
  %4601 = vmatprep.subr.bf16.mxu0 0
  %4602 = vmatpush2.bf16.msra.mxu0 0
  %4603 = vmatprep.subr.bf16.mxu0 0
  %4604 = vmatpush2.bf16.msra.mxu0 0
  %4605 = vmatprep.subr.bf16.mxu0 0
  %4606 = vmatpush2.bf16.msra.mxu0 0
  %4607 = vmatprep.subr.bf16.mxu0 0
  %4608 = vmatpush2.bf16.msra.mxu0 0
  %4609 = vmatprep.subr.bf16.mxu0 0
  %4610 = vmatpush2.bf16.msra.mxu0 0
  %4611 = vmatprep.subr.bf16.mxu0 0
  %4612 = vmatpush2.bf16.msra.mxu0 0
  %4613 = vmatprep.subr.bf16.mxu0 0
  %4614 = vmatpush2.bf16.msra.mxu0 0
  %4615 = vmatprep.subr.bf16.mxu0 0
  %4616 = vmatpush2.bf16.msra.mxu0 0
  %4617 = vmatprep.mubr.bf16.mxu0 0
  %4618 = vmatmul.mubr.bf16.gmra.mxu0 %v4532
  %v4619 = vpop.f32.mrf.mxu0
  %v4620 = vadd.f32 %v4536, %v4619
  %v4621 = vpop.f32.mrf.mxu0
  %v4622 = vpop.f32.mrf.mxu0
  %v4623 = vpop.f32.mrf.mxu0
  %4624 = vdwg.mxu0
  %v4625 = vadd.f32 %v4383, %v4620
  %v4626 = vld [vmem:[%s19] sm:$0x1]
  %v4627 = vld [vmem:[%s20] sm:$0x1]
  %v4628 = vsel %vm648, %v4625, 0.0
  %4629 = vadd.xlane.f32.xlu0 %v4628
  %v4630 = vpop.xlane.xlu0 %4629
  %v4631 = vmul.f32 %v4630, %v656
  %v4632 = vsub.f32 %v4625, %v4631
  %v4633 = vmul.f32 %v4632, %v4632
  %v4634 = vsel %vm648, %v4633, 0.0
  %4635 = vadd.xlane.f32.xlu0 %v4634
  %v4636 = vpop.xlane.xlu0 %4635
  %v4637 = vmul.f32 %v4636, %v656
  %v4638 = vadd.f32 %v4637, 1e-06
  %v4639 = vrsqrt.pop %v4638
  %v4640 = vmul.f32 %v4632, %v4639
  %v4642 = vlaneseq
  %v4643 = vshrl.u32 %v4642, 7
  %v4644 = vsub.s32 0, %v4643
  %v4645 = vrot.slane %v4626, %v4644
  %v4647 = vmul.f32 %v4640, %v4645
  %v4649 = vlaneseq
  %v4650 = vshrl.u32 %v4649, 7
  %v4651 = vsub.s32 0, %v4650
  %v4652 = vrot.slane %v4627, %v4651
  %v4654 = vadd.f32 %v4647, %v4652
  %v4655 = vld [vmem:[%s21] sm:$0xf]
  %v4656 = vld [vmem:[%s21 + $0x4] sm:$0xf]
  %v4657 = vld [vmem:[%s21 + $0x8] sm:$0xf]
  %v4658 = vld [vmem:[%s21 + $0xc] sm:$0xf]
  %v4659 = vld [vmem:[%s21 + $0x10] sm:$0xf]
  %v4660 = vld [vmem:[%s21 + $0x14] sm:$0xf]
  %v4661 = vld [vmem:[%s21 + $0x18] sm:$0xf]
  %v4662 = vld [vmem:[%s21 + $0x1c] sm:$0xf]
  %v4663 = vpack.c.bf16 %v4654, %v4654
  %v4664 = vld [vmem:[%s22] sm:$0x1]
  %v4666 = vlaneseq
  %v4667 = vshrl.u32 %v4666, 7
  %v4668 = vsub.s32 0, %v4667
  %v4669 = vrot.slane %v4664, %v4668
  %v4679 = vunpack.c.l.b16 %v4655
  %v4680 = vunpack.c.l.b16 %v4656
  %v4681 = vunpack.c.l.b16 %v4657
  %v4682 = vunpack.c.l.b16 %v4658
  %v4683 = vunpack.c.l.b16 %v4659
  %v4684 = vunpack.c.l.b16 %v4660
  %v4685 = vunpack.c.l.b16 %v4661
  %v4686 = vunpack.c.l.b16 %v4662
  %v4687 = vpack.c.b16 %v4680, %v4679
  %v4688 = vpack.c.b16 %v4682, %v4681
  %v4689 = vpack.c.b16 %v4684, %v4683
  %v4690 = vpack.c.b16 %v4686, %v4685
  %v4696 = vsel %vm648, %v4663, 0
  %4698 = vmatprep.subr.bf16.mxu0 0
  %4699 = vmatpush1.bf16.msra.mxu0 0
  %4700 = vmatprep.subr.bf16.mxu0 0
  %4701 = vmatpush1.bf16.msra.mxu0 0
  %4702 = vmatprep.subr.bf16.mxu0 0
  %4703 = vmatpush1.bf16.msra.mxu0 0
  %4704 = vmatprep.subr.bf16.mxu0 0
  %4705 = vmatpush1.bf16.msra.mxu0 0
  %4706 = vmatprep.subr.bf16.mxu0 0
  %4707 = vmatpush1.bf16.msra.mxu0 %v4690
  %4708 = vmatprep.subr.bf16.mxu0 0
  %4709 = vmatpush1.bf16.msra.mxu0 %v4689
  %4710 = vmatprep.subr.bf16.mxu0 0
  %4711 = vmatpush1.bf16.msra.mxu0 %v4688
  %4712 = vmatprep.subr.bf16.mxu0 0
  %4713 = vmatpush1.bf16.msra.mxu0 %v4687
  %4714 = vmatprep.subr.bf16.mxu0 0
  %4715 = vmatpush2.bf16.msra.mxu0 0
  %4716 = vmatprep.subr.bf16.mxu0 0
  %4717 = vmatpush2.bf16.msra.mxu0 0
  %4718 = vmatprep.subr.bf16.mxu0 0
  %4719 = vmatpush2.bf16.msra.mxu0 0
  %4720 = vmatprep.subr.bf16.mxu0 0
  %4721 = vmatpush2.bf16.msra.mxu0 0
  %4722 = vmatprep.subr.bf16.mxu0 0
  %4723 = vmatpush2.bf16.msra.mxu0 0
  %4724 = vmatprep.subr.bf16.mxu0 0
  %4725 = vmatpush2.bf16.msra.mxu0 0
  %4726 = vmatprep.subr.bf16.mxu0 0
  %4727 = vmatpush2.bf16.msra.mxu0 0
  %4728 = vmatprep.subr.bf16.mxu0 0
  %4729 = vmatpush2.bf16.msra.mxu0 0
  %4730 = vmatprep.mubr.bf16.mxu0 0
  %4731 = vmatmul.mubr.bf16.gmra.mxu0 %v4696
  %v4732 = vpop.f32.mrf.mxu0
  %v4733 = vadd.f32 %v4669, %v4732
  %v4734 = vpop.f32.mrf.mxu0
  %v4735 = vpop.f32.mrf.mxu0
  %v4736 = vpop.f32.mrf.mxu0
  %4737 = vdwg.mxu0
  %4738 = vst [vmem:[%s23] sm:$0xff] %v4733
  // Predicated region
  $region94: #{vit_forward.1} parent=0 // pred_check
    _
  $region95: #{vit_forward.1} parent=0 // pred_check_branch
    %4740 = sbr.rel (0) target = $region97
  $region96: #{vit_forward.1} parent=0 // pred_region
    _
  $region97: #{vit_forward.1} parent=0 // pred_fallthru
    _
  // Predicated region
  $region98: #{vit_forward.1} parent=0 // pred_check
    _
  $region99: #{vit_forward.1} parent=0 // pred_check_branch
    %4742 = sbr.rel (0) target = $region101
  $region100: #{vit_forward.1} parent=0 // pred_region
    _
  $region101: #{vit_forward.1} parent=0 // pred_fallthru
    _

</llo_original>
